<compile_context>
chip_gen: v7x
topology: tpu7x:2x2x1
jax: 0.10.0
libtpu: 0.0.40
codegen_flags: <defaults>
</compile_context>

<pallas_src>
import functools

import jax
import jax.numpy as jnp
import numpy as np
from jax.experimental import pallas as pl
from jax.experimental.pallas import tpu as pltpu


# -----------------------------------------------------------------------------
# Pallas kernel: one grid step == (one batch block) x (one chunk of t_chunk steps)
# -----------------------------------------------------------------------------
def mgru_kernel(x_ref, wx_ref, wh_ref, whc_ref, b_ref, wo_ref, bo_ref,
                y_ref, mem_out_ref, h_out_ref,
                h_state, mem_state, h_hist, gx_buf, *, seq_len, t_chunk):
    c = pl.program_id(1)                 # time-chunk index (sequential axis)
    batch = h_state.shape[0]             # batch-block rows
    hid = h_state.shape[1]               # lane-padded hidden size
    k_lag = mem_state.shape[0]

    @pl.when(c == 0)
    def _init():  # fresh zero state at the start of every batch block's sweep
        h_state[...] = jnp.zeros_like(h_state)
        mem_state[...] = jnp.zeros_like(mem_state)

    # --- Input projection hoisted out of the recurrent loop -------------------
    # One lane/sublane-dense GEMM per chunk (t_chunk*B rows) instead of t_chunk
    # serial 8-row MXU pushes on the critical path.
    gx_buf[...] = (jnp.dot(x_ref[...], wx_ref[...],
                           preferred_element_type=jnp.float32) + b_ref[...])

    inv = [np.float32(1.0 / (j + 1)) for j in range(k_lag)]

    # Bounded unroll over the chunk.  t_chunk % k_lag == 0, so the circular
    # buffer slot of h_t is (t % k_lag) == (tt % k_lag): all indices static.
    for tt in range(t_chunk):
        h_prev = h_state[...]                              # (B, H) f32
        gx = gx_buf[tt * batch:(tt + 1) * batch, :]        # (B, 4H) f32
        gh = jnp.dot(h_prev.astype(wh_ref.dtype), wh_ref[...],
                     preferred_element_type=jnp.float32)   # (B, 3H) f32

        # One fused EUP push for all three gates; slices are 128-aligned.
        srd = jax.nn.sigmoid(gx[:, :3 * hid] + gh)
        z = srd[:, :hid]
        r = srd[:, hid:2 * hid]
        d = 0.5 * srd[:, 2 * hid:]

        cand = jnp.tanh(
            gx[:, 3 * hid:]
            + jnp.dot((r * h_prev).astype(whc_ref.dtype), whc_ref[...],
                      preferred_element_type=jnp.float32))

        # Fractional long-memory filter over the circular lag buffer:
        #   pi_1(d) = d,  pi_{j+1}(d) = pi_j(d) * (j - d) / (j + 1)
        #   m_t = sum_j pi_j(d_t) * h_{t-j}
        pi = d
        m = pi * mem_state[(tt - 1) % k_lag]
        for j in range(1, k_lag):
            pi = pi * (jnp.float32(j) - d) * inv[j]
            m = m + pi * mem_state[(tt - 1 - j) % k_lag]

        h_new = (1.0 - z) * m + z * cand        # memory path replaces h_{t-1}

        mem_state[tt % k_lag] = h_new           # circular write, no shifting
        h_state[...] = h_new
        # Stored directly in bf16: only consumed as an MXU operand below.
        h_hist[tt * batch:(tt + 1) * batch, :] = h_new.astype(jnp.bfloat16)

    # --- One lane-dense output projection + store per chunk -------------------
    y = (jnp.dot(h_hist[...], wo_ref[...], preferred_element_type=jnp.float32)
         + bo_ref[...])                                    # (TC*B, Op)
    y_ref[...] = y.astype(y_ref.dtype)

    @pl.when(c == pl.num_programs(1) - 1)
    def _finalize():
        h_out_ref[...] = h_state[...]
        # Unwind circular buffer into canonical order: mem[j] = h_{T-1-j}.
        for j in range(k_lag):
            mem_out_ref[j] = mem_state[(seq_len - 1 - j) % k_lag]


# -----------------------------------------------------------------------------
# Wrapper
# -----------------------------------------------------------------------------
def _round_up(n, m):
    return ((n + m - 1) // m) * m


def mrnn_forward(x, params, lag_k, t_chunk=None, b_block=None):
    """x: (T, B, I) f32 -> (outputs (T,B,O), (memory (K,B,H), h (B,H)))."""
    wx, wh, whc, b, wo, bo = params
    T, B, I = x.shape
    H = whc.shape[0]
    O = wo.shape[1]
    K = lag_k
    LANE = 128

    Hp = _round_up(max(H, LANE), LANE)     # lane-pad hidden
    Op = _round_up(max(O, LANE), LANE)     # lane-pad output

    if t_chunk is None:   # bounded unroll: modest chunk, multiple of K, divides T
        cands = [c for c in range(K, T + 1, K) if T % c == 0]
        small = [c for c in cands if c <= 32]
        t_chunk = max(small) if small else (min(cands) if cands else T)
    assert T % t_chunk == 0, "seq_len must be a multiple of t_chunk"
    assert t_chunk % K == 0, "t_chunk must be a multiple of lag_k (static slots)"

    if b_block is None:
        b_block = B
    assert B % b_block == 0 and (b_block % 8 == 0 or b_block == B)

    n_chunks = T // t_chunk
    n_bblocks = B // b_block

    f32, bf16 = jnp.float32, jnp.bfloat16

    # Layout plumbing outside the kernel: fuse gate weights/biases and zero-pad
    # each gate segment to Hp so in-kernel slices land on lane-tile boundaries.
    # Padded rows/cols are zero, so padded hidden lanes stay exactly zero.
    wx_cat = jnp.zeros((I, 4 * Hp), f32)        # order: [z, r, d, cand]
    wh_cat = jnp.zeros((Hp, 3 * Hp), f32)       # order: [z, r, d]
    b_cat = jnp.zeros((1, 4 * Hp), f32)
    for g in range(4):
        wx_cat = wx_cat.at[:, g * Hp:g * Hp + H].set(wx[g])
        b_cat = b_cat.at[:, g * Hp:g * Hp + H].set(b[g])
    for g in range(3):
        wh_cat = wh_cat.at[:H, g * Hp:g * Hp + H].set(wh[g])
    whc_p = jnp.zeros((Hp, Hp), f32).at[:H, :H].set(whc)
    wo_p = jnp.zeros((Hp, Op), f32).at[:H, :O].set(wo)
    bo_p = jnp.zeros((1, Op), f32).at[:, :O].set(bo)

    wx_cat = wx_cat.astype(bf16)
    wh_cat = wh_cat.astype(bf16)
    whc_p = whc_p.astype(bf16)
    wo_p = wo_p.astype(bf16)

    # Reorder x so each (batch-block, chunk) tile is a contiguous 2-D
    # (t_chunk*b_block, I) slab -> no in-kernel reshapes.
    x_r = (x.astype(bf16)
           .reshape(n_chunks, t_chunk, n_bblocks, b_block, I)
           .transpose(0, 2, 1, 3, 4)
           .reshape(n_chunks, n_bblocks, t_chunk * b_block, I))

    kernel = functools.partial(mgru_kernel, seq_len=T, t_chunk=t_chunk)
    tcb = t_chunk * b_block

    y_pad, mem_pad, h_pad = pl.pallas_call(
        kernel,
        out_shape=(
            jax.ShapeDtypeStruct((n_chunks, n_bblocks, tcb, Op), jnp.float32),
            jax.ShapeDtypeStruct((K, B, Hp), jnp.float32),
            jax.ShapeDtypeStruct((B, Hp), jnp.float32),
        ),
        grid_spec=pltpu.PrefetchScalarGridSpec(
            num_scalar_prefetch=0,
            grid=(n_bblocks, n_chunks),          # (parallel batch, sequential time)
            in_specs=[
                pl.BlockSpec((None, None, tcb, I), lambda bb, c: (c, bb, 0, 0)),
                pl.BlockSpec((I, 4 * Hp), lambda bb, c: (0, 0)),       # Wx fused
                pl.BlockSpec((Hp, 3 * Hp), lambda bb, c: (0, 0)),      # Wh fused
                pl.BlockSpec((Hp, Hp), lambda bb, c: (0, 0)),          # W_hc
                pl.BlockSpec((1, 4 * Hp), lambda bb, c: (0, 0)),       # biases
                pl.BlockSpec((Hp, Op), lambda bb, c: (0, 0)),          # W_out
                pl.BlockSpec((1, Op), lambda bb, c: (0, 0)),           # b_out
            ],
            out_specs=[
                pl.BlockSpec((None, None, tcb, Op), lambda bb, c: (c, bb, 0, 0)),
                pl.BlockSpec((K, b_block, Hp), lambda bb, c: (0, bb, 0)),
                pl.BlockSpec((b_block, Hp), lambda bb, c: (bb, 0)),
            ],
            scratch_shapes=[
                pltpu.VMEM((b_block, Hp), jnp.float32),          # h_state
                pltpu.VMEM((K, b_block, Hp), jnp.float32),       # circular lag buf
                pltpu.VMEM((tcb, Hp), jnp.bfloat16),             # chunk hidden hist
                pltpu.VMEM((tcb, 4 * Hp), jnp.float32),          # hoisted x-proj
            ],
        ),
        compiler_params=pltpu.CompilerParams(
            dimension_semantics=("parallel", "arbitrary"),
            vmem_limit_bytes=64 * 1024 * 1024,
        ),
    )(x_r, wx_cat, wh_cat, whc_p, b_cat, wo_p, bo_p)

    outputs = (y_pad.reshape(n_chunks, n_bblocks, t_chunk, b_block, Op)
               .transpose(0, 2, 1, 3, 4)
               .reshape(T, B, Op)[:, :, :O])
    mem_final = mem_pad[:, :, :H]
    h_final = h_pad[:, :H]
    return outputs, (mem_final, h_final)


# -----------------------------------------------------------------------------
# Pure-JAX reference (same math, full f32 precision) for a correctness check.
# -----------------------------------------------------------------------------
def mrnn_reference(x, params, lag_k):
    wx, wh, whc, b, wo, bo = params
    T, B, I = x.shape
    H = whc.shape[0]
    K = lag_k
    hp = jax.lax.Precision.HIGHEST

    def step(carry, xt):
        mem, h = carry
        z = jax.nn.sigmoid(jnp.dot(xt, wx[0], precision=hp)
                           + jnp.dot(h, wh[0], precision=hp) + b[0])
        r = jax.nn.sigmoid(jnp.dot(xt, wx[1], precision=hp)
                           + jnp.dot(h, wh[1], precision=hp) + b[1])
        d = 0.5 * jax.nn.sigmoid(jnp.dot(xt, wx[2], precision=hp)
                                 + jnp.dot(h, wh[2], precision=hp) + b[2])
        cand = jnp.tanh(jnp.dot(xt, wx[3], precision=hp)
                        + jnp.dot(r * h, whc, precision=hp) + b[3])
        pi = d
        m = pi * mem[0]
        for j in range(1, K):
            pi = pi * (j - d) / (j + 1.0)
            m = m + pi * mem[j]
        h_new = (1.0 - z) * m + z * cand
        y = jnp.dot(h_new, wo, precision=hp) + bo
        mem_new = jnp.concatenate([h_new[None], mem[:-1]], axis=0)
        return (mem_new, h_new), y

    carry0 = (jnp.zeros((K, B, H), jnp.float32), jnp.zeros((B, H), jnp.float32))
    (mem_f, h_f), ys = jax.lax.scan(step, carry0, x)
    return ys, (mem_f, h_f)


def init_params(key, input_size, hidden_size, output_size):
    ks = jax.random.split(key, 6)
    s = 1.0 / np.sqrt(hidden_size)
    wx = jax.random.uniform(ks[0], (4, input_size, hidden_size), jnp.float32, -s, s)
    wh = jax.random.uniform(ks[1], (3, hidden_size, hidden_size), jnp.float32, -s, s)
    whc = jax.random.uniform(ks[2], (hidden_size, hidden_size), jnp.float32, -s, s)
    b = jax.random.uniform(ks[3], (4, 1, hidden_size), jnp.float32, -s, s)
    wo = jax.random.uniform(ks[4], (hidden_size, output_size), jnp.float32, -s, s)
    bo = jax.random.uniform(ks[5], (1, output_size), jnp.float32, -s, s)
    return wx, wh, whc, b, wo, bo


if __name__ == "__main__":
    SEQ, BATCH, IN, HID, OUT, LAG_K = 8, 16, 16, 32, 8, 4
    T_CHUNK = 4   # multiple of LAG_K; SEQ/T_CHUNK = 2 chunks -> state carried
    B_BLOCK = 8   # 2 batch blocks -> exercises the parallel batch grid axis

    key = jax.random.PRNGKey(0)
    k_x, k_p = jax.random.split(key)
    x = jax.random.normal(k_x, (SEQ, BATCH, IN), jnp.float32)
    params = init_params(k_p, IN, HID, OUT)

    fwd = jax.jit(functools.partial(mrnn_forward, lag_k=LAG_K,
                                    t_chunk=T_CHUNK, b_block=B_BLOCK))
    outputs, (mem_f, h_f) = fwd(x, params)
    jax.block_until_ready((outputs, mem_f, h_f))

    ref_y, (ref_mem, ref_h) = mrnn_reference(x, params, LAG_K)
    # Kernel uses bf16 MXU operands with f32 accumulation -> slightly loose tol.
    np.testing.assert_allclose(np.asarray(outputs), np.asarray(ref_y),
                               rtol=2e-2, atol=2e-2)
    np.testing.assert_allclose(np.asarray(h_f), np.asarray(ref_h),
                               rtol=2e-2, atol=2e-2)
    np.testing.assert_allclose(np.asarray(mem_f), np.asarray(ref_mem),
                               rtol=2e-2, atol=2e-2)

    print("KERNEL_OK")
</pallas_src>

<mosaic_0001>
module attributes {stable_mosaic.version = 11 : i64} {
  func.func @mgru_kernel(%arg0: i32, %arg1: i32, %arg2: memref<1x1x32x16xbf16, #tpu.memory_space<vmem>>, %arg3: memref<16x512xbf16, #tpu.memory_space<vmem>>, %arg4: memref<128x384xbf16, #tpu.memory_space<vmem>>, %arg5: memref<128x128xbf16, #tpu.memory_space<vmem>>, %arg6: memref<1x512xf32, #tpu.memory_space<vmem>>, %arg7: memref<128x128xbf16, #tpu.memory_space<vmem>>, %arg8: memref<1x128xf32, #tpu.memory_space<vmem>>, %arg9: memref<1x1x32x128xf32, #tpu.memory_space<vmem>>, %arg10: memref<4x8x128xf32, #tpu.memory_space<vmem>>, %arg11: memref<8x128xf32, #tpu.memory_space<vmem>>, %arg12: memref<8x128xf32, #tpu.memory_space<vmem>>, %arg13: memref<4x8x128xf32, #tpu.memory_space<vmem>>, %arg14: memref<32x128xbf16, #tpu.memory_space<vmem>>, %arg15: memref<32x512xf32, #tpu.memory_space<vmem>>) attributes {dimension_semantics = [#tpu.dimension_semantics<parallel>, #tpu.dimension_semantics<arbitrary>], iteration_bounds = array<i64: 2, 2>, scalar_prefetch = 0 : i64, scratch_operands = 4 : i64, tpu.core_type = #tpu.core_type<tc>, window_params = [{transform_indices = @transform_0, window_bounds = array<i64: 1, 1, 32, 16>}, {pipeline_mode = #tpu.pipeline_mode<synchronous>, transform_indices = @transform_1, window_bounds = array<i64: 16, 512>}, {pipeline_mode = #tpu.pipeline_mode<synchronous>, transform_indices = @transform_2, window_bounds = array<i64: 128, 384>}, {pipeline_mode = #tpu.pipeline_mode<synchronous>, transform_indices = @transform_3, window_bounds = array<i64: 128, 128>}, {pipeline_mode = #tpu.pipeline_mode<synchronous>, transform_indices = @transform_4, window_bounds = array<i64: 1, 512>}, {pipeline_mode = #tpu.pipeline_mode<synchronous>, transform_indices = @transform_5, window_bounds = array<i64: 128, 128>}, {pipeline_mode = #tpu.pipeline_mode<synchronous>, transform_indices = @transform_6, window_bounds = array<i64: 1, 128>}, {transform_indices = @transform_7, window_bounds = array<i64: 1, 1, 32, 128>}, {transform_indices = @transform_8, window_bounds = array<i64: 4, 8, 128>}, {transform_indices = @transform_9, window_bounds = array<i64: 8, 128>}]} {
    %c0_i32 = arith.constant 0 : i32
    %0 = arith.cmpi eq, %arg1, %c0_i32 : i32
    %1 = arith.extui %0 : i1 to i32
    %c0_i32_0 = arith.constant 0 : i32
    %2 = arith.cmpi ne, %1, %c0_i32_0 : i32
    scf.if %2 {
      %cst_168 = arith.constant 0.000000e+00 : f32
      %283 = vector.broadcast %cst_168 : f32 to vector<8x128xf32>
      %c0_169 = arith.constant 0 : index
      %c0_170 = arith.constant 0 : index
      %284 = vector.load %arg12[%c0_169, %c0_170] : memref<8x128xf32, #tpu.memory_space<vmem>>, vector<8x128xf32>
      tpu.vector_store %arg12[%c0_169, %c0_170], %283 {strides = array<i32>} : memref<8x128xf32, #tpu.memory_space<vmem>>, vector<8x128xf32>,
      %cst_171 = arith.constant 0.000000e+00 : f32
      %285 = vector.broadcast %cst_171 : f32 to vector<4x8x128xf32>
      %c0_172 = arith.constant 0 : index
      %c0_173 = arith.constant 0 : index
      %c0_174 = arith.constant 0 : index
      %286 = vector.load %arg13[%c0_172, %c0_173, %c0_174] : memref<4x8x128xf32, #tpu.memory_space<vmem>>, vector<4x8x128xf32>
      tpu.vector_store %arg13[%c0_172, %c0_173, %c0_174], %285 {strides = array<i32>} : memref<4x8x128xf32, #tpu.memory_space<vmem>>, vector<4x8x128xf32>,
    } else {
    }
    %c0 = arith.constant 0 : index
    %c0_1 = arith.constant 0 : index
    %c0_2 = arith.constant 0 : index
    %c0_3 = arith.constant 0 : index
    %3 = vector.load %arg2[%c0, %c0_1, %c0_2, %c0_3] : memref<1x1x32x16xbf16, #tpu.memory_space<vmem>>, vector<1x1x32x16xbf16>
    %4 = vector.shape_cast %3 : vector<1x1x32x16xbf16> to vector<32x16xbf16>
    %c0_4 = arith.constant 0 : index
    %c0_5 = arith.constant 0 : index
    %5 = vector.load %arg3[%c0_4, %c0_5] : memref<16x512xbf16, #tpu.memory_space<vmem>>, vector<16x512xbf16>
    %cst = arith.constant dense<0.000000e+00> : vector<32x512xf32>
    %6 = tpu.matmul %4, %5, %cst {dimension_numbers = #tpu.dot_dimension_numbers<[1], [0], [0], [1], [0, 0, 1, 1], [], []>} : vector<32x16xbf16>, vector<16x512xbf16>, vector<32x512xf32> -> vector<32x512xf32>
    %c0_6 = arith.constant 0 : index
    %c0_7 = arith.constant 0 : index
    %7 = vector.load %arg6[%c0_6, %c0_7] : memref<1x512xf32, #tpu.memory_space<vmem>>, vector<1x512xf32>
    %8 = vector.broadcast %7 : vector<1x512xf32> to vector<32x512xf32>
    %9 = arith.addf %6, %8 : vector<32x512xf32>
    %c0_8 = arith.constant 0 : index
    %c0_9 = arith.constant 0 : index
    %10 = vector.load %arg15[%c0_8, %c0_9] : memref<32x512xf32, #tpu.memory_space<vmem>>, vector<32x512xf32>
    tpu.vector_store %arg15[%c0_8, %c0_9], %9 {strides = array<i32>} : memref<32x512xf32, #tpu.memory_space<vmem>>, vector<32x512xf32>,
    %c0_10 = arith.constant 0 : index
    %c0_11 = arith.constant 0 : index
    %11 = vector.load %arg12[%c0_10, %c0_11] : memref<8x128xf32, #tpu.memory_space<vmem>>, vector<8x128xf32>
    %c0_12 = arith.constant 0 : index
    %c0_13 = arith.constant 0 : index
    %12 = vector.load %arg15[%c0_12, %c0_13] : memref<32x512xf32, #tpu.memory_space<vmem>>, vector<8x512xf32>
    %13 = arith.truncf %11 : vector<8x128xf32> to vector<8x128xbf16>
    %c0_14 = arith.constant 0 : index
    %c0_15 = arith.constant 0 : index
    %14 = vector.load %arg4[%c0_14, %c0_15] : memref<128x384xbf16, #tpu.memory_space<vmem>>, vector<128x384xbf16>
    %cst_16 = arith.constant dense<0.000000e+00> : vector<8x384xf32>
    %15 = tpu.matmul %13, %14, %cst_16 {dimension_numbers = #tpu.dot_dimension_numbers<[1], [0], [0], [1], [0, 0, 1, 1], [], []>} : vector<8x128xbf16>, vector<128x384xbf16>, vector<8x384xf32> -> vector<8x384xf32>
    %16 = vector.extract_strided_slice %12 {offsets = [0, 0], sizes = [8, 384], strides = [1, 1]} : vector<8x512xf32> to vector<8x384xf32>
    %17 = arith.addf %16, %15 : vector<8x384xf32>
    %18 = arith.negf %17 : vector<8x384xf32>
    %19 = math.exp %18 : vector<8x384xf32>
    %cst_17 = arith.constant 1.000000e+00 : f32
    %20 = vector.broadcast %cst_17 : f32 to vector<8x384xf32>
    %21 = arith.addf %20, %19 : vector<8x384xf32>
    %22 = arith.divf %20, %21 : vector<8x384xf32>
    %23 = vector.extract_strided_slice %22 {offsets = [0, 0], sizes = [8, 128], strides = [1, 1]} : vector<8x384xf32> to vector<8x128xf32>
    %24 = vector.extract_strided_slice %22 {offsets = [0, 128], sizes = [8, 128], strides = [1, 1]} : vector<8x384xf32> to vector<8x128xf32>
    %25 = vector.extract_strided_slice %22 {offsets = [0, 256], sizes = [8, 128], strides = [1, 1]} : vector<8x384xf32> to vector<8x128xf32>
    %cst_18 = arith.constant 5.000000e-01 : f32
    %26 = vector.broadcast %cst_18 : f32 to vector<8x128xf32>
    %27 = arith.mulf %26, %25 : vector<8x128xf32>
    %28 = vector.extract_strided_slice %12 {offsets = [0, 384], sizes = [8, 128], strides = [1, 1]} : vector<8x512xf32> to vector<8x128xf32>
    %29 = arith.mulf %24, %11 : vector<8x128xf32>
    %30 = arith.truncf %29 : vector<8x128xf32> to vector<8x128xbf16>
    %c0_19 = arith.constant 0 : index
    %c0_20 = arith.constant 0 : index
    %31 = vector.load %arg5[%c0_19, %c0_20] : memref<128x128xbf16, #tpu.memory_space<vmem>>, vector<128x128xbf16>
    %cst_21 = arith.constant dense<0.000000e+00> : vector<8x128xf32>
    %32 = tpu.matmul %30, %31, %cst_21 {dimension_numbers = #tpu.dot_dimension_numbers<[1], [0], [0], [1], [0, 0, 1, 1], [], []>} : vector<8x128xbf16>, vector<128x128xbf16>, vector<8x128xf32> -> vector<8x128xf32>
    %33 = arith.addf %28, %32 : vector<8x128xf32>
    %34 = math.tanh %33 : vector<8x128xf32>
    %c3 = arith.constant 3 : index
    %c0_22 = arith.constant 0 : index
    %c0_23 = arith.constant 0 : index
    %35 = vector.load %arg13[%c3, %c0_22, %c0_23] : memref<4x8x128xf32, #tpu.memory_space<vmem>>, vector<1x8x128xf32>
    %36 = vector.shape_cast %35 : vector<1x8x128xf32> to vector<8x128xf32>
    %37 = arith.mulf %27, %36 : vector<8x128xf32>
    %cst_24 = arith.constant 1.000000e+00 : f32
    %38 = vector.broadcast %cst_24 : f32 to vector<8x128xf32>
    %39 = arith.subf %38, %27 : vector<8x128xf32>
    %40 = arith.mulf %27, %39 : vector<8x128xf32>
    %cst_25 = arith.constant 5.000000e-01 : f32
    %41 = vector.broadcast %cst_25 : f32 to vector<8x128xf32>
    %42 = arith.mulf %40, %41 : vector<8x128xf32>
    %c2 = arith.constant 2 : index
    %c0_26 = arith.constant 0 : index
    %c0_27 = arith.constant 0 : index
    %43 = vector.load %arg13[%c2, %c0_26, %c0_27] : memref<4x8x128xf32, #tpu.memory_space<vmem>>, vector<1x8x128xf32>
    %44 = vector.shape_cast %43 : vector<1x8x128xf32> to vector<8x128xf32>
    %45 = arith.mulf %42, %44 : vector<8x128xf32>
    %46 = arith.addf %37, %45 : vector<8x128xf32>
    %cst_28 = arith.constant 2.000000e+00 : f32
    %47 = vector.broadcast %cst_28 : f32 to vector<8x128xf32>
    %48 = arith.subf %47, %27 : vector<8x128xf32>
    %49 = arith.mulf %42, %48 : vector<8x128xf32>
    %cst_29 = arith.constant 0.333333343 : f32
    %50 = vector.broadcast %cst_29 : f32 to vector<8x128xf32>
    %51 = arith.mulf %49, %50 : vector<8x128xf32>
    %c1 = arith.constant 1 : index
    %c0_30 = arith.constant 0 : index
    %c0_31 = arith.constant 0 : index
    %52 = vector.load %arg13[%c1, %c0_30, %c0_31] : memref<4x8x128xf32, #tpu.memory_space<vmem>>, vector<1x8x128xf32>
    %53 = vector.shape_cast %52 : vector<1x8x128xf32> to vector<8x128xf32>
    %54 = arith.mulf %51, %53 : vector<8x128xf32>
    %55 = arith.addf %46, %54 : vector<8x128xf32>
    %cst_32 = arith.constant 3.000000e+00 : f32
    %56 = vector.broadcast %cst_32 : f32 to vector<8x128xf32>
    %57 = arith.subf %56, %27 : vector<8x128xf32>
    %58 = arith.mulf %51, %57 : vector<8x128xf32>
    %cst_33 = arith.constant 2.500000e-01 : f32
    %59 = vector.broadcast %cst_33 : f32 to vector<8x128xf32>
    %60 = arith.mulf %58, %59 : vector<8x128xf32>
    %c0_34 = arith.constant 0 : index
    %c0_35 = arith.constant 0 : index
    %c0_36 = arith.constant 0 : index
    %61 = vector.load %arg13[%c0_34, %c0_35, %c0_36] : memref<4x8x128xf32, #tpu.memory_space<vmem>>, vector<1x8x128xf32>
    %62 = vector.shape_cast %61 : vector<1x8x128xf32> to vector<8x128xf32>
    %63 = arith.mulf %60, %62 : vector<8x128xf32>
    %64 = arith.addf %55, %63 : vector<8x128xf32>
    %cst_37 = arith.constant 1.000000e+00 : f32
    %65 = vector.broadcast %cst_37 : f32 to vector<8x128xf32>
    %66 = arith.subf %65, %23 : vector<8x128xf32>
    %67 = arith.mulf %66, %64 : vector<8x128xf32>
    %68 = arith.mulf %23, %34 : vector<8x128xf32>
    %69 = arith.addf %67, %68 : vector<8x128xf32>
    %c0_38 = arith.constant 0 : index
    %c0_39 = arith.constant 0 : index
    %c0_40 = arith.constant 0 : index
    %70 = vector.load %arg13[%c0_38, %c0_39, %c0_40] : memref<4x8x128xf32, #tpu.memory_space<vmem>>, vector<1x8x128xf32>
    %71 = vector.shape_cast %70 : vector<1x8x128xf32> to vector<8x128xf32>
    %72 = vector.shape_cast %69 : vector<8x128xf32> to vector<1x8x128xf32>
    tpu.vector_store %arg13[%c0_38, %c0_39, %c0_40], %72 {strides = array<i32>} : memref<4x8x128xf32, #tpu.memory_space<vmem>>, vector<1x8x128xf32>,
    %c0_41 = arith.constant 0 : index
    %c0_42 = arith.constant 0 : index
    %73 = vector.load %arg12[%c0_41, %c0_42] : memref<8x128xf32, #tpu.memory_space<vmem>>, vector<8x128xf32>
    tpu.vector_store %arg12[%c0_41, %c0_42], %69 {strides = array<i32>} : memref<8x128xf32, #tpu.memory_space<vmem>>, vector<8x128xf32>,
    %74 = arith.truncf %69 : vector<8x128xf32> to vector<8x128xbf16>
    %c0_43 = arith.constant 0 : index
    %c0_44 = arith.constant 0 : index
    %75 = vector.load %arg14[%c0_43, %c0_44] : memref<32x128xbf16, #tpu.memory_space<vmem>>, vector<8x128xbf16>
    tpu.vector_store %arg14[%c0_43, %c0_44], %74 {strides = array<i32>} : memref<32x128xbf16, #tpu.memory_space<vmem>>, vector<8x128xbf16>,
    %c0_45 = arith.constant 0 : index
    %c0_46 = arith.constant 0 : index
    %76 = vector.load %arg12[%c0_45, %c0_46] : memref<8x128xf32, #tpu.memory_space<vmem>>, vector<8x128xf32>
    %c8 = arith.constant 8 : index
    %c0_47 = arith.constant 0 : index
    %77 = vector.load %arg15[%c8, %c0_47] : memref<32x512xf32, #tpu.memory_space<vmem>>, vector<8x512xf32>
    %78 = arith.truncf %76 : vector<8x128xf32> to vector<8x128xbf16>
    %c0_48 = arith.constant 0 : index
    %c0_49 = arith.constant 0 : index
    %79 = vector.load %arg4[%c0_48, %c0_49] : memref<128x384xbf16, #tpu.memory_space<vmem>>, vector<128x384xbf16>
    %cst_50 = arith.constant dense<0.000000e+00> : vector<8x384xf32>
    %80 = tpu.matmul %78, %79, %cst_50 {dimension_numbers = #tpu.dot_dimension_numbers<[1], [0], [0], [1], [0, 0, 1, 1], [], []>} : vector<8x128xbf16>, vector<128x384xbf16>, vector<8x384xf32> -> vector<8x384xf32>
    %81 = vector.extract_strided_slice %77 {offsets = [0, 0], sizes = [8, 384], strides = [1, 1]} : vector<8x512xf32> to vector<8x384xf32>
    %82 = arith.addf %81, %80 : vector<8x384xf32>
    %83 = arith.negf %82 : vector<8x384xf32>
    %84 = math.exp %83 : vector<8x384xf32>
    %cst_51 = arith.constant 1.000000e+00 : f32
    %85 = vector.broadcast %cst_51 : f32 to vector<8x384xf32>
    %86 = arith.addf %85, %84 : vector<8x384xf32>
    %87 = arith.divf %85, %86 : vector<8x384xf32>
    %88 = vector.extract_strided_slice %87 {offsets = [0, 0], sizes = [8, 128], strides = [1, 1]} : vector<8x384xf32> to vector<8x128xf32>
    %89 = vector.extract_strided_slice %87 {offsets = [0, 128], sizes = [8, 128], strides = [1, 1]} : vector<8x384xf32> to vector<8x128xf32>
    %90 = vector.extract_strided_slice %87 {offsets = [0, 256], sizes = [8, 128], strides = [1, 1]} : vector<8x384xf32> to vector<8x128xf32>
    %cst_52 = arith.constant 5.000000e-01 : f32
    %91 = vector.broadcast %cst_52 : f32 to vector<8x128xf32>
    %92 = arith.mulf %91, %90 : vector<8x128xf32>
    %93 = vector.extract_strided_slice %77 {offsets = [0, 384], sizes = [8, 128], strides = [1, 1]} : vector<8x512xf32> to vector<8x128xf32>
    %94 = arith.mulf %89, %76 : vector<8x128xf32>
    %95 = arith.truncf %94 : vector<8x128xf32> to vector<8x128xbf16>
    %c0_53 = arith.constant 0 : index
    %c0_54 = arith.constant 0 : index
    %96 = vector.load %arg5[%c0_53, %c0_54] : memref<128x128xbf16, #tpu.memory_space<vmem>>, vector<128x128xbf16>
    %cst_55 = arith.constant dense<0.000000e+00> : vector<8x128xf32>
    %97 = tpu.matmul %95, %96, %cst_55 {dimension_numbers = #tpu.dot_dimension_numbers<[1], [0], [0], [1], [0, 0, 1, 1], [], []>} : vector<8x128xbf16>, vector<128x128xbf16>, vector<8x128xf32> -> vector<8x128xf32>
    %98 = arith.addf %93, %97 : vector<8x128xf32>
    %99 = math.tanh %98 : vector<8x128xf32>
    %c0_56 = arith.constant 0 : index
    %c0_57 = arith.constant 0 : index
    %c0_58 = arith.constant 0 : index
    %100 = vector.load %arg13[%c0_56, %c0_57, %c0_58] : memref<4x8x128xf32, #tpu.memory_space<vmem>>, vector<1x8x128xf32>
    %101 = vector.shape_cast %100 : vector<1x8x128xf32> to vector<8x128xf32>
    %102 = arith.mulf %92, %101 : vector<8x128xf32>
    %cst_59 = arith.constant 1.000000e+00 : f32
    %103 = vector.broadcast %cst_59 : f32 to vector<8x128xf32>
    %104 = arith.subf %103, %92 : vector<8x128xf32>
    %105 = arith.mulf %92, %104 : vector<8x128xf32>
    %cst_60 = arith.constant 5.000000e-01 : f32
    %106 = vector.broadcast %cst_60 : f32 to vector<8x128xf32>
    %107 = arith.mulf %105, %106 : vector<8x128xf32>
    %c3_61 = arith.constant 3 : index
    %c0_62 = arith.constant 0 : index
    %c0_63 = arith.constant 0 : index
    %108 = vector.load %arg13[%c3_61, %c0_62, %c0_63] : memref<4x8x128xf32, #tpu.memory_space<vmem>>, vector<1x8x128xf32>
    %109 = vector.shape_cast %108 : vector<1x8x128xf32> to vector<8x128xf32>
    %110 = arith.mulf %107, %109 : vector<8x128xf32>
    %111 = arith.addf %102, %110 : vector<8x128xf32>
    %cst_64 = arith.constant 2.000000e+00 : f32
    %112 = vector.broadcast %cst_64 : f32 to vector<8x128xf32>
    %113 = arith.subf %112, %92 : vector<8x128xf32>
    %114 = arith.mulf %107, %113 : vector<8x128xf32>
    %cst_65 = arith.constant 0.333333343 : f32
    %115 = vector.broadcast %cst_65 : f32 to vector<8x128xf32>
    %116 = arith.mulf %114, %115 : vector<8x128xf32>
    %c2_66 = arith.constant 2 : index
    %c0_67 = arith.constant 0 : index
    %c0_68 = arith.constant 0 : index
    %117 = vector.load %arg13[%c2_66, %c0_67, %c0_68] : memref<4x8x128xf32, #tpu.memory_space<vmem>>, vector<1x8x128xf32>
    %118 = vector.shape_cast %117 : vector<1x8x128xf32> to vector<8x128xf32>
    %119 = arith.mulf %116, %118 : vector<8x128xf32>
    %120 = arith.addf %111, %119 : vector<8x128xf32>
    %cst_69 = arith.constant 3.000000e+00 : f32
    %121 = vector.broadcast %cst_69 : f32 to vector<8x128xf32>
    %122 = arith.subf %121, %92 : vector<8x128xf32>
    %123 = arith.mulf %116, %122 : vector<8x128xf32>
    %cst_70 = arith.constant 2.500000e-01 : f32
    %124 = vector.broadcast %cst_70 : f32 to vector<8x128xf32>
    %125 = arith.mulf %123, %124 : vector<8x128xf32>
    %c1_71 = arith.constant 1 : index
    %c0_72 = arith.constant 0 : index
    %c0_73 = arith.constant 0 : index
    %126 = vector.load %arg13[%c1_71, %c0_72, %c0_73] : memref<4x8x128xf32, #tpu.memory_space<vmem>>, vector<1x8x128xf32>
    %127 = vector.shape_cast %126 : vector<1x8x128xf32> to vector<8x128xf32>
    %128 = arith.mulf %125, %127 : vector<8x128xf32>
    %129 = arith.addf %120, %128 : vector<8x128xf32>
    %cst_74 = arith.constant 1.000000e+00 : f32
    %130 = vector.broadcast %cst_74 : f32 to vector<8x128xf32>
    %131 = arith.subf %130, %88 : vector<8x128xf32>
    %132 = arith.mulf %131, %129 : vector<8x128xf32>
    %133 = arith.mulf %88, %99 : vector<8x128xf32>
    %134 = arith.addf %132, %133 : vector<8x128xf32>
    %c1_75 = arith.constant 1 : index
    %c0_76 = arith.constant 0 : index
    %c0_77 = arith.constant 0 : index
    %135 = vector.load %arg13[%c1_75, %c0_76, %c0_77] : memref<4x8x128xf32, #tpu.memory_space<vmem>>, vector<1x8x128xf32>
    %136 = vector.shape_cast %135 : vector<1x8x128xf32> to vector<8x128xf32>
    %137 = vector.shape_cast %134 : vector<8x128xf32> to vector<1x8x128xf32>
    tpu.vector_store %arg13[%c1_75, %c0_76, %c0_77], %137 {strides = array<i32>} : memref<4x8x128xf32, #tpu.memory_space<vmem>>, vector<1x8x128xf32>,
    %c0_78 = arith.constant 0 : index
    %c0_79 = arith.constant 0 : index
    %138 = vector.load %arg12[%c0_78, %c0_79] : memref<8x128xf32, #tpu.memory_space<vmem>>, vector<8x128xf32>
    tpu.vector_store %arg12[%c0_78, %c0_79], %134 {strides = array<i32>} : memref<8x128xf32, #tpu.memory_space<vmem>>, vector<8x128xf32>,
    %139 = arith.truncf %134 : vector<8x128xf32> to vector<8x128xbf16>
    %c8_80 = arith.constant 8 : index
    %c0_81 = arith.constant 0 : index
    %140 = vector.load %arg14[%c8_80, %c0_81] : memref<32x128xbf16, #tpu.memory_space<vmem>>, vector<8x128xbf16>
    tpu.vector_store %arg14[%c8_80, %c0_81], %139 {strides = array<i32>} : memref<32x128xbf16, #tpu.memory_space<vmem>>, vector<8x128xbf16>,
    %c0_82 = arith.constant 0 : index
    %c0_83 = arith.constant 0 : index
    %141 = vector.load %arg12[%c0_82, %c0_83] : memref<8x128xf32, #tpu.memory_space<vmem>>, vector<8x128xf32>
    %c16 = arith.constant 16 : index
    %c0_84 = arith.constant 0 : index
    %142 = vector.load %arg15[%c16, %c0_84] : memref<32x512xf32, #tpu.memory_space<vmem>>, vector<8x512xf32>
    %143 = arith.truncf %141 : vector<8x128xf32> to vector<8x128xbf16>
    %c0_85 = arith.constant 0 : index
    %c0_86 = arith.constant 0 : index
    %144 = vector.load %arg4[%c0_85, %c0_86] : memref<128x384xbf16, #tpu.memory_space<vmem>>, vector<128x384xbf16>
    %cst_87 = arith.constant dense<0.000000e+00> : vector<8x384xf32>
    %145 = tpu.matmul %143, %144, %cst_87 {dimension_numbers = #tpu.dot_dimension_numbers<[1], [0], [0], [1], [0, 0, 1, 1], [], []>} : vector<8x128xbf16>, vector<128x384xbf16>, vector<8x384xf32> -> vector<8x384xf32>
    %146 = vector.extract_strided_slice %142 {offsets = [0, 0], sizes = [8, 384], strides = [1, 1]} : vector<8x512xf32> to vector<8x384xf32>
    %147 = arith.addf %146, %145 : vector<8x384xf32>
    %148 = arith.negf %147 : vector<8x384xf32>
    %149 = math.exp %148 : vector<8x384xf32>
    %cst_88 = arith.constant 1.000000e+00 : f32
    %150 = vector.broadcast %cst_88 : f32 to vector<8x384xf32>
    %151 = arith.addf %150, %149 : vector<8x384xf32>
    %152 = arith.divf %150, %151 : vector<8x384xf32>
    %153 = vector.extract_strided_slice %152 {offsets = [0, 0], sizes = [8, 128], strides = [1, 1]} : vector<8x384xf32> to vector<8x128xf32>
    %154 = vector.extract_strided_slice %152 {offsets = [0, 128], sizes = [8, 128], strides = [1, 1]} : vector<8x384xf32> to vector<8x128xf32>
    %155 = vector.extract_strided_slice %152 {offsets = [0, 256], sizes = [8, 128], strides = [1, 1]} : vector<8x384xf32> to vector<8x128xf32>
    %cst_89 = arith.constant 5.000000e-01 : f32
    %156 = vector.broadcast %cst_89 : f32 to vector<8x128xf32>
    %157 = arith.mulf %156, %155 : vector<8x128xf32>
    %158 = vector.extract_strided_slice %142 {offsets = [0, 384], sizes = [8, 128], strides = [1, 1]} : vector<8x512xf32> to vector<8x128xf32>
    %159 = arith.mulf %154, %141 : vector<8x128xf32>
    %160 = arith.truncf %159 : vector<8x128xf32> to vector<8x128xbf16>
    %c0_90 = arith.constant 0 : index
    %c0_91 = arith.constant 0 : index
    %161 = vector.load %arg5[%c0_90, %c0_91] : memref<128x128xbf16, #tpu.memory_space<vmem>>, vector<128x128xbf16>
    %cst_92 = arith.constant dense<0.000000e+00> : vector<8x128xf32>
    %162 = tpu.matmul %160, %161, %cst_92 {dimension_numbers = #tpu.dot_dimension_numbers<[1], [0], [0], [1], [0, 0, 1, 1], [], []>} : vector<8x128xbf16>, vector<128x128xbf16>, vector<8x128xf32> -> vector<8x128xf32>
    %163 = arith.addf %158, %162 : vector<8x128xf32>
    %164 = math.tanh %163 : vector<8x128xf32>
    %c1_93 = arith.constant 1 : index
    %c0_94 = arith.constant 0 : index
    %c0_95 = arith.constant 0 : index
    %165 = vector.load %arg13[%c1_93, %c0_94, %c0_95] : memref<4x8x128xf32, #tpu.memory_space<vmem>>, vector<1x8x128xf32>
    %166 = vector.shape_cast %165 : vector<1x8x128xf32> to vector<8x128xf32>
    %167 = arith.mulf %157, %166 : vector<8x128xf32>
    %cst_96 = arith.constant 1.000000e+00 : f32
    %168 = vector.broadcast %cst_96 : f32 to vector<8x128xf32>
    %169 = arith.subf %168, %157 : vector<8x128xf32>
    %170 = arith.mulf %157, %169 : vector<8x128xf32>
    %cst_97 = arith.constant 5.000000e-01 : f32
    %171 = vector.broadcast %cst_97 : f32 to vector<8x128xf32>
    %172 = arith.mulf %170, %171 : vector<8x128xf32>
    %c0_98 = arith.constant 0 : index
    %c0_99 = arith.constant 0 : index
    %c0_100 = arith.constant 0 : index
    %173 = vector.load %arg13[%c0_98, %c0_99, %c0_100] : memref<4x8x128xf32, #tpu.memory_space<vmem>>, vector<1x8x128xf32>
    %174 = vector.shape_cast %173 : vector<1x8x128xf32> to vector<8x128xf32>
    %175 = arith.mulf %172, %174 : vector<8x128xf32>
    %176 = arith.addf %167, %175 : vector<8x128xf32>
    %cst_101 = arith.constant 2.000000e+00 : f32
    %177 = vector.broadcast %cst_101 : f32 to vector<8x128xf32>
    %178 = arith.subf %177, %157 : vector<8x128xf32>
    %179 = arith.mulf %172, %178 : vector<8x128xf32>
    %cst_102 = arith.constant 0.333333343 : f32
    %180 = vector.broadcast %cst_102 : f32 to vector<8x128xf32>
    %181 = arith.mulf %179, %180 : vector<8x128xf32>
    %c3_103 = arith.constant 3 : index
    %c0_104 = arith.constant 0 : index
    %c0_105 = arith.constant 0 : index
    %182 = vector.load %arg13[%c3_103, %c0_104, %c0_105] : memref<4x8x128xf32, #tpu.memory_space<vmem>>, vector<1x8x128xf32>
    %183 = vector.shape_cast %182 : vector<1x8x128xf32> to vector<8x128xf32>
    %184 = arith.mulf %181, %183 : vector<8x128xf32>
    %185 = arith.addf %176, %184 : vector<8x128xf32>
    %cst_106 = arith.constant 3.000000e+00 : f32
    %186 = vector.broadcast %cst_106 : f32 to vector<8x128xf32>
    %187 = arith.subf %186, %157 : vector<8x128xf32>
    %188 = arith.mulf %181, %187 : vector<8x128xf32>
    %cst_107 = arith.constant 2.500000e-01 : f32
    %189 = vector.broadcast %cst_107 : f32 to vector<8x128xf32>
    %190 = arith.mulf %188, %189 : vector<8x128xf32>
    %c2_108 = arith.constant 2 : index
    %c0_109 = arith.constant 0 : index
    %c0_110 = arith.constant 0 : index
    %191 = vector.load %arg13[%c2_108, %c0_109, %c0_110] : memref<4x8x128xf32, #tpu.memory_space<vmem>>, vector<1x8x128xf32>
    %192 = vector.shape_cast %191 : vector<1x8x128xf32> to vector<8x128xf32>
    %193 = arith.mulf %190, %192 : vector<8x128xf32>
    %194 = arith.addf %185, %193 : vector<8x128xf32>
    %cst_111 = arith.constant 1.000000e+00 : f32
    %195 = vector.broadcast %cst_111 : f32 to vector<8x128xf32>
    %196 = arith.subf %195, %153 : vector<8x128xf32>
    %197 = arith.mulf %196, %194 : vector<8x128xf32>
    %198 = arith.mulf %153, %164 : vector<8x128xf32>
    %199 = arith.addf %197, %198 : vector<8x128xf32>
    %c2_112 = arith.constant 2 : index
    %c0_113 = arith.constant 0 : index
    %c0_114 = arith.constant 0 : index
    %200 = vector.load %arg13[%c2_112, %c0_113, %c0_114] : memref<4x8x128xf32, #tpu.memory_space<vmem>>, vector<1x8x128xf32>
    %201 = vector.shape_cast %200 : vector<1x8x128xf32> to vector<8x128xf32>
    %202 = vector.shape_cast %199 : vector<8x128xf32> to vector<1x8x128xf32>
    tpu.vector_store %arg13[%c2_112, %c0_113, %c0_114], %202 {strides = array<i32>} : memref<4x8x128xf32, #tpu.memory_space<vmem>>, vector<1x8x128xf32>,
    %c0_115 = arith.constant 0 : index
    %c0_116 = arith.constant 0 : index
    %203 = vector.load %arg12[%c0_115, %c0_116] : memref<8x128xf32, #tpu.memory_space<vmem>>, vector<8x128xf32>
    tpu.vector_store %arg12[%c0_115, %c0_116], %199 {strides = array<i32>} : memref<8x128xf32, #tpu.memory_space<vmem>>, vector<8x128xf32>,
    %204 = arith.truncf %199 : vector<8x128xf32> to vector<8x128xbf16>
    %c16_117 = arith.constant 16 : index
    %c0_118 = arith.constant 0 : index
    %205 = vector.load %arg14[%c16_117, %c0_118] : memref<32x128xbf16, #tpu.memory_space<vmem>>, vector<8x128xbf16>
    tpu.vector_store %arg14[%c16_117, %c0_118], %204 {strides = array<i32>} : memref<32x128xbf16, #tpu.memory_space<vmem>>, vector<8x128xbf16>,
    %c0_119 = arith.constant 0 : index
    %c0_120 = arith.constant 0 : index
    %206 = vector.load %arg12[%c0_119, %c0_120] : memref<8x128xf32, #tpu.memory_space<vmem>>, vector<8x128xf32>
    %c24 = arith.constant 24 : index
    %c0_121 = arith.constant 0 : index
    %207 = vector.load %arg15[%c24, %c0_121] : memref<32x512xf32, #tpu.memory_space<vmem>>, vector<8x512xf32>
    %208 = arith.truncf %206 : vector<8x128xf32> to vector<8x128xbf16>
    %c0_122 = arith.constant 0 : index
    %c0_123 = arith.constant 0 : index
    %209 = vector.load %arg4[%c0_122, %c0_123] : memref<128x384xbf16, #tpu.memory_space<vmem>>, vector<128x384xbf16>
    %cst_124 = arith.constant dense<0.000000e+00> : vector<8x384xf32>
    %210 = tpu.matmul %208, %209, %cst_124 {dimension_numbers = #tpu.dot_dimension_numbers<[1], [0], [0], [1], [0, 0, 1, 1], [], []>} : vector<8x128xbf16>, vector<128x384xbf16>, vector<8x384xf32> -> vector<8x384xf32>
    %211 = vector.extract_strided_slice %207 {offsets = [0, 0], sizes = [8, 384], strides = [1, 1]} : vector<8x512xf32> to vector<8x384xf32>
    %212 = arith.addf %211, %210 : vector<8x384xf32>
    %213 = arith.negf %212 : vector<8x384xf32>
    %214 = math.exp %213 : vector<8x384xf32>
    %cst_125 = arith.constant 1.000000e+00 : f32
    %215 = vector.broadcast %cst_125 : f32 to vector<8x384xf32>
    %216 = arith.addf %215, %214 : vector<8x384xf32>
    %217 = arith.divf %215, %216 : vector<8x384xf32>
    %218 = vector.extract_strided_slice %217 {offsets = [0, 0], sizes = [8, 128], strides = [1, 1]} : vector<8x384xf32> to vector<8x128xf32>
    %219 = vector.extract_strided_slice %217 {offsets = [0, 128], sizes = [8, 128], strides = [1, 1]} : vector<8x384xf32> to vector<8x128xf32>
    %220 = vector.extract_strided_slice %217 {offsets = [0, 256], sizes = [8, 128], strides = [1, 1]} : vector<8x384xf32> to vector<8x128xf32>
    %cst_126 = arith.constant 5.000000e-01 : f32
    %221 = vector.broadcast %cst_126 : f32 to vector<8x128xf32>
    %222 = arith.mulf %221, %220 : vector<8x128xf32>
    %223 = vector.extract_strided_slice %207 {offsets = [0, 384], sizes = [8, 128], strides = [1, 1]} : vector<8x512xf32> to vector<8x128xf32>
    %224 = arith.mulf %219, %206 : vector<8x128xf32>
    %225 = arith.truncf %224 : vector<8x128xf32> to vector<8x128xbf16>
    %c0_127 = arith.constant 0 : index
    %c0_128 = arith.constant 0 : index
    %226 = vector.load %arg5[%c0_127, %c0_128] : memref<128x128xbf16, #tpu.memory_space<vmem>>, vector<128x128xbf16>
    %cst_129 = arith.constant dense<0.000000e+00> : vector<8x128xf32>
    %227 = tpu.matmul %225, %226, %cst_129 {dimension_numbers = #tpu.dot_dimension_numbers<[1], [0], [0], [1], [0, 0, 1, 1], [], []>} : vector<8x128xbf16>, vector<128x128xbf16>, vector<8x128xf32> -> vector<8x128xf32>
    %228 = arith.addf %223, %227 : vector<8x128xf32>
    %229 = math.tanh %228 : vector<8x128xf32>
    %c2_130 = arith.constant 2 : index
    %c0_131 = arith.constant 0 : index
    %c0_132 = arith.constant 0 : index
    %230 = vector.load %arg13[%c2_130, %c0_131, %c0_132] : memref<4x8x128xf32, #tpu.memory_space<vmem>>, vector<1x8x128xf32>
    %231 = vector.shape_cast %230 : vector<1x8x128xf32> to vector<8x128xf32>
    %232 = arith.mulf %222, %231 : vector<8x128xf32>
    %cst_133 = arith.constant 1.000000e+00 : f32
    %233 = vector.broadcast %cst_133 : f32 to vector<8x128xf32>
    %234 = arith.subf %233, %222 : vector<8x128xf32>
    %235 = arith.mulf %222, %234 : vector<8x128xf32>
    %cst_134 = arith.constant 5.000000e-01 : f32
    %236 = vector.broadcast %cst_134 : f32 to vector<8x128xf32>
    %237 = arith.mulf %235, %236 : vector<8x128xf32>
    %c1_135 = arith.constant 1 : index
    %c0_136 = arith.constant 0 : index
    %c0_137 = arith.constant 0 : index
    %238 = vector.load %arg13[%c1_135, %c0_136, %c0_137] : memref<4x8x128xf32, #tpu.memory_space<vmem>>, vector<1x8x128xf32>
    %239 = vector.shape_cast %238 : vector<1x8x128xf32> to vector<8x128xf32>
    %240 = arith.mulf %237, %239 : vector<8x128xf32>
    %241 = arith.addf %232, %240 : vector<8x128xf32>
    %cst_138 = arith.constant 2.000000e+00 : f32
    %242 = vector.broadcast %cst_138 : f32 to vector<8x128xf32>
    %243 = arith.subf %242, %222 : vector<8x128xf32>
    %244 = arith.mulf %237, %243 : vector<8x128xf32>
    %cst_139 = arith.constant 0.333333343 : f32
    %245 = vector.broadcast %cst_139 : f32 to vector<8x128xf32>
    %246 = arith.mulf %244, %245 : vector<8x128xf32>
    %c0_140 = arith.constant 0 : index
    %c0_141 = arith.constant 0 : index
    %c0_142 = arith.constant 0 : index
    %247 = vector.load %arg13[%c0_140, %c0_141, %c0_142] : memref<4x8x128xf32, #tpu.memory_space<vmem>>, vector<1x8x128xf32>
    %248 = vector.shape_cast %247 : vector<1x8x128xf32> to vector<8x128xf32>
    %249 = arith.mulf %246, %248 : vector<8x128xf32>
    %250 = arith.addf %241, %249 : vector<8x128xf32>
    %cst_143 = arith.constant 3.000000e+00 : f32
    %251 = vector.broadcast %cst_143 : f32 to vector<8x128xf32>
    %252 = arith.subf %251, %222 : vector<8x128xf32>
    %253 = arith.mulf %246, %252 : vector<8x128xf32>
    %cst_144 = arith.constant 2.500000e-01 : f32
    %254 = vector.broadcast %cst_144 : f32 to vector<8x128xf32>
    %255 = arith.mulf %253, %254 : vector<8x128xf32>
    %c3_145 = arith.constant 3 : index
    %c0_146 = arith.constant 0 : index
    %c0_147 = arith.constant 0 : index
    %256 = vector.load %arg13[%c3_145, %c0_146, %c0_147] : memref<4x8x128xf32, #tpu.memory_space<vmem>>, vector<1x8x128xf32>
    %257 = vector.shape_cast %256 : vector<1x8x128xf32> to vector<8x128xf32>
    %258 = arith.mulf %255, %257 : vector<8x128xf32>
    %259 = arith.addf %250, %258 : vector<8x128xf32>
    %cst_148 = arith.constant 1.000000e+00 : f32
    %260 = vector.broadcast %cst_148 : f32 to vector<8x128xf32>
    %261 = arith.subf %260, %218 : vector<8x128xf32>
    %262 = arith.mulf %261, %259 : vector<8x128xf32>
    %263 = arith.mulf %218, %229 : vector<8x128xf32>
    %264 = arith.addf %262, %263 : vector<8x128xf32>
    %c3_149 = arith.constant 3 : index
    %c0_150 = arith.constant 0 : index
    %c0_151 = arith.constant 0 : index
    %265 = vector.load %arg13[%c3_149, %c0_150, %c0_151] : memref<4x8x128xf32, #tpu.memory_space<vmem>>, vector<1x8x128xf32>
    %266 = vector.shape_cast %265 : vector<1x8x128xf32> to vector<8x128xf32>
    %267 = vector.shape_cast %264 : vector<8x128xf32> to vector<1x8x128xf32>
    tpu.vector_store %arg13[%c3_149, %c0_150, %c0_151], %267 {strides = array<i32>} : memref<4x8x128xf32, #tpu.memory_space<vmem>>, vector<1x8x128xf32>,
    %c0_152 = arith.constant 0 : index
    %c0_153 = arith.constant 0 : index
    %268 = vector.load %arg12[%c0_152, %c0_153] : memref<8x128xf32, #tpu.memory_space<vmem>>, vector<8x128xf32>
    tpu.vector_store %arg12[%c0_152, %c0_153], %264 {strides = array<i32>} : memref<8x128xf32, #tpu.memory_space<vmem>>, vector<8x128xf32>,
    %269 = arith.truncf %264 : vector<8x128xf32> to vector<8x128xbf16>
    %c24_154 = arith.constant 24 : index
    %c0_155 = arith.constant 0 : index
    %270 = vector.load %arg14[%c24_154, %c0_155] : memref<32x128xbf16, #tpu.memory_space<vmem>>, vector<8x128xbf16>
    tpu.vector_store %arg14[%c24_154, %c0_155], %269 {strides = array<i32>} : memref<32x128xbf16, #tpu.memory_space<vmem>>, vector<8x128xbf16>,
    %c0_156 = arith.constant 0 : index
    %c0_157 = arith.constant 0 : index
    %271 = vector.load %arg14[%c0_156, %c0_157] : memref<32x128xbf16, #tpu.memory_space<vmem>>, vector<32x128xbf16>
    %c0_158 = arith.constant 0 : index
    %c0_159 = arith.constant 0 : index
    %272 = vector.load %arg7[%c0_158, %c0_159] : memref<128x128xbf16, #tpu.memory_space<vmem>>, vector<128x128xbf16>
    %cst_160 = arith.constant dense<0.000000e+00> : vector<32x128xf32>
    %273 = tpu.matmul %271, %272, %cst_160 {dimension_numbers = #tpu.dot_dimension_numbers<[1], [0], [0], [1], [0, 0, 1, 1], [], []>} : vector<32x128xbf16>, vector<128x128xbf16>, vector<32x128xf32> -> vector<32x128xf32>
    %c0_161 = arith.constant 0 : index
    %c0_162 = arith.constant 0 : index
    %274 = vector.load %arg8[%c0_161, %c0_162] : memref<1x128xf32, #tpu.memory_space<vmem>>, vector<1x128xf32>
    %275 = vector.broadcast %274 : vector<1x128xf32> to vector<32x128xf32>
    %276 = arith.addf %273, %275 : vector<32x128xf32>
    %c0_163 = arith.constant 0 : index
    %c0_164 = arith.constant 0 : index
    %c0_165 = arith.constant 0 : index
    %c0_166 = arith.constant 0 : index
    %277 = vector.load %arg9[%c0_163, %c0_164, %c0_165, %c0_166] : memref<1x1x32x128xf32, #tpu.memory_space<vmem>>, vector<1x1x32x128xf32>
    %278 = vector.shape_cast %277 : vector<1x1x32x128xf32> to vector<32x128xf32>
    %279 = vector.shape_cast %276 : vector<32x128xf32> to vector<1x1x32x128xf32>
    tpu.vector_store %arg9[%c0_163, %c0_164, %c0_165, %c0_166], %279 {strides = array<i32>} : memref<1x1x32x128xf32, #tpu.memory_space<vmem>>, vector<1x1x32x128xf32>,
    %c1_i32 = arith.constant 1 : i32
    %280 = arith.cmpi eq, %arg1, %c1_i32 : i32
    %281 = arith.extui %280 : i1 to i32
    %c0_i32_167 = arith.constant 0 : i32
    %282 = arith.cmpi ne, %281, %c0_i32_167 : i32
    scf.if %282 {
      %c0_168 = arith.constant 0 : index
      %c0_169 = arith.constant 0 : index
      %283 = vector.load %arg12[%c0_168, %c0_169] : memref<8x128xf32, #tpu.memory_space<vmem>>, vector<8x128xf32>
      %c0_170 = arith.constant 0 : index
      %c0_171 = arith.constant 0 : index
      %284 = vector.load %arg11[%c0_170, %c0_171] : memref<8x128xf32, #tpu.memory_space<vmem>>, vector<8x128xf32>
      tpu.vector_store %arg11[%c0_170, %c0_171], %283 {strides = array<i32>} : memref<8x128xf32, #tpu.memory_space<vmem>>, vector<8x128xf32>,
      %c3_172 = arith.constant 3 : index
      %c0_173 = arith.constant 0 : index
      %c0_174 = arith.constant 0 : index
      %285 = vector.load %arg13[%c3_172, %c0_173, %c0_174] : memref<4x8x128xf32, #tpu.memory_space<vmem>>, vector<1x8x128xf32>
      %286 = vector.shape_cast %285 : vector<1x8x128xf32> to vector<8x128xf32>
      %c0_175 = arith.constant 0 : index
      %c0_176 = arith.constant 0 : index
      %c0_177 = arith.constant 0 : index
      %287 = vector.load %arg10[%c0_175, %c0_176, %c0_177] : memref<4x8x128xf32, #tpu.memory_space<vmem>>, vector<1x8x128xf32>
      %288 = vector.shape_cast %287 : vector<1x8x128xf32> to vector<8x128xf32>
      %289 = vector.shape_cast %286 : vector<8x128xf32> to vector<1x8x128xf32>
      tpu.vector_store %arg10[%c0_175, %c0_176, %c0_177], %289 {strides = array<i32>} : memref<4x8x128xf32, #tpu.memory_space<vmem>>, vector<1x8x128xf32>,
      %c2_178 = arith.constant 2 : index
      %c0_179 = arith.constant 0 : index
      %c0_180 = arith.constant 0 : index
      %290 = vector.load %arg13[%c2_178, %c0_179, %c0_180] : memref<4x8x128xf32, #tpu.memory_space<vmem>>, vector<1x8x128xf32>
      %291 = vector.shape_cast %290 : vector<1x8x128xf32> to vector<8x128xf32>
      %c1_181 = arith.constant 1 : index
      %c0_182 = arith.constant 0 : index
      %c0_183 = arith.constant 0 : index
      %292 = vector.load %arg10[%c1_181, %c0_182, %c0_183] : memref<4x8x128xf32, #tpu.memory_space<vmem>>, vector<1x8x128xf32>
      %293 = vector.shape_cast %292 : vector<1x8x128xf32> to vector<8x128xf32>
      %294 = vector.shape_cast %291 : vector<8x128xf32> to vector<1x8x128xf32>
      tpu.vector_store %arg10[%c1_181, %c0_182, %c0_183], %294 {strides = array<i32>} : memref<4x8x128xf32, #tpu.memory_space<vmem>>, vector<1x8x128xf32>,
      %c1_184 = arith.constant 1 : index
      %c0_185 = arith.constant 0 : index
      %c0_186 = arith.constant 0 : index
      %295 = vector.load %arg13[%c1_184, %c0_185, %c0_186] : memref<4x8x128xf32, #tpu.memory_space<vmem>>, vector<1x8x128xf32>
      %296 = vector.shape_cast %295 : vector<1x8x128xf32> to vector<8x128xf32>
      %c2_187 = arith.constant 2 : index
      %c0_188 = arith.constant 0 : index
      %c0_189 = arith.constant 0 : index
      %297 = vector.load %arg10[%c2_187, %c0_188, %c0_189] : memref<4x8x128xf32, #tpu.memory_space<vmem>>, vector<1x8x128xf32>
      %298 = vector.shape_cast %297 : vector<1x8x128xf32> to vector<8x128xf32>
      %299 = vector.shape_cast %296 : vector<8x128xf32> to vector<1x8x128xf32>
      tpu.vector_store %arg10[%c2_187, %c0_188, %c0_189], %299 {strides = array<i32>} : memref<4x8x128xf32, #tpu.memory_space<vmem>>, vector<1x8x128xf32>,
      %c0_190 = arith.constant 0 : index
      %c0_191 = arith.constant 0 : index
      %c0_192 = arith.constant 0 : index
      %300 = vector.load %arg13[%c0_190, %c0_191, %c0_192] : memref<4x8x128xf32, #tpu.memory_space<vmem>>, vector<1x8x128xf32>
      %301 = vector.shape_cast %300 : vector<1x8x128xf32> to vector<8x128xf32>
      %c3_193 = arith.constant 3 : index
      %c0_194 = arith.constant 0 : index
      %c0_195 = arith.constant 0 : index
      %302 = vector.load %arg10[%c3_193, %c0_194, %c0_195] : memref<4x8x128xf32, #tpu.memory_space<vmem>>, vector<1x8x128xf32>
      %303 = vector.shape_cast %302 : vector<1x8x128xf32> to vector<8x128xf32>
      %304 = vector.shape_cast %301 : vector<8x128xf32> to vector<1x8x128xf32>
      tpu.vector_store %arg10[%c3_193, %c0_194, %c0_195], %304 {strides = array<i32>} : memref<4x8x128xf32, #tpu.memory_space<vmem>>, vector<1x8x128xf32>,
    } else {
    }
    return
  }
  func.func @transform_0(%arg0: i32, %arg1: i32) -> (i32, i32, i32, i32) {
    %c0_i32 = arith.constant 0 : i32
    %c0_i32_0 = arith.constant 0 : i32
    %c0_i32_1 = arith.constant 0 : i32
    return %arg1, %arg0, %c0_i32, %c0_i32_0 : i32, i32, i32, i32
  }
  func.func @transform_1(%arg0: i32, %arg1: i32) -> (i32, i32) {
    %c0_i32 = arith.constant 0 : i32
    %c0_i32_0 = arith.constant 0 : i32
    %c0_i32_1 = arith.constant 0 : i32
    return %c0_i32, %c0_i32_0 : i32, i32
  }
  func.func @transform_2(%arg0: i32, %arg1: i32) -> (i32, i32) {
    %c0_i32 = arith.constant 0 : i32
    %c0_i32_0 = arith.constant 0 : i32
    %c0_i32_1 = arith.constant 0 : i32
    return %c0_i32, %c0_i32_0 : i32, i32
  }
  func.func @transform_3(%arg0: i32, %arg1: i32) -> (i32, i32) {
    %c0_i32 = arith.constant 0 : i32
    %c0_i32_0 = arith.constant 0 : i32
    %c0_i32_1 = arith.constant 0 : i32
    return %c0_i32, %c0_i32_0 : i32, i32
  }
  func.func @transform_4(%arg0: i32, %arg1: i32) -> (i32, i32) {
    %c0_i32 = arith.constant 0 : i32
    %c0_i32_0 = arith.constant 0 : i32
    %c0_i32_1 = arith.constant 0 : i32
    return %c0_i32, %c0_i32_0 : i32, i32
  }
  func.func @transform_5(%arg0: i32, %arg1: i32) -> (i32, i32) {
    %c0_i32 = arith.constant 0 : i32
    %c0_i32_0 = arith.constant 0 : i32
    %c0_i32_1 = arith.constant 0 : i32
    return %c0_i32, %c0_i32_0 : i32, i32
  }
  func.func @transform_6(%arg0: i32, %arg1: i32) -> (i32, i32) {
    %c0_i32 = arith.constant 0 : i32
    %c0_i32_0 = arith.constant 0 : i32
    %c0_i32_1 = arith.constant 0 : i32
    return %c0_i32, %c0_i32_0 : i32, i32
  }
  func.func @transform_7(%arg0: i32, %arg1: i32) -> (i32, i32, i32, i32) {
    %c0_i32 = arith.constant 0 : i32
    %c0_i32_0 = arith.constant 0 : i32
    %c0_i32_1 = arith.constant 0 : i32
    return %arg1, %arg0, %c0_i32, %c0_i32_0 : i32, i32, i32, i32
  }
  func.func @transform_8(%arg0: i32, %arg1: i32) -> (i32, i32, i32) {
    %c0_i32 = arith.constant 0 : i32
    %c0_i32_0 = arith.constant 0 : i32
    %c0_i32_1 = arith.constant 0 : i32
    return %c0_i32, %arg0, %c0_i32_0 : i32, i32, i32
  }
  func.func @transform_9(%arg0: i32, %arg1: i32) -> (i32, i32) {
    %c0_i32 = arith.constant 0 : i32
    %c0_i32_0 = arith.constant 0 : i32
    return %arg0, %c0_i32 : i32, i32
  }
}

</mosaic_0001>

<llo_original>
// kernel: mrnn_forward.1
$region0: #{mrnn_forward.1}
  #allocation0 [shape = 'u32[]', space=smem, size = 0x4, offset = 0x4, fixed_abs, tag = 'smem constant byte address 0x4 - core index']
  #allocation1 [shape = 'u32[144,128]{1,0:T(1,128)}', space=vmem, size = 0x12000, scoped, tag = 'internal scratch']
  #allocation2 [shape = 'f32[8,128]{1,0:T(8,128)}', space=vmem, size = 0x1000, scoped, tag = 'scratch operand']
  #allocation3 [shape = 'f32[4,8,128]{2,1,0:T(8,128)}', space=vmem, size = 0x4000, scoped, tag = 'scratch operand']
  #allocation4 [shape = 'bf16[32,128]{1,0:T(16,128)(2,1)}', space=vmem, size = 0x2000, scoped, tag = 'scratch operand']
  #allocation5 [shape = 'f32[32,512]{1,0:T(8,128)}', space=vmem, size = 0x10000, scoped, tag = 'scratch operand']
  %s0 = inlined_call_operand.hbm [shape: bf16[2,2,32,16], index: 0, kind: input, shape index: {}]
  %s1 = inlined_call_operand.hbm [shape: bf16[16,512], index: 1, kind: input, shape index: {}]
  %s2 = inlined_call_operand.hbm [shape: bf16[128,384], index: 2, kind: input, shape index: {}]
  %s3 = inlined_call_operand.hbm [shape: bf16[128,128], index: 3, kind: input, shape index: {}]
  %s4 = inlined_call_operand.hbm [shape: f32[1,512], index: 4, kind: input, shape index: {}]
  %s5 = inlined_call_operand.hbm [shape: bf16[128,128], index: 5, kind: input, shape index: {}]
  %s6 = inlined_call_operand.hbm [shape: f32[1,128], index: 6, kind: input, shape index: {}]
  %s7 = inlined_call_operand.hbm [shape: f32[2,2,32,128], index: 7, kind: output, shape index: {0}]
  %s8 = inlined_call_operand.hbm [shape: f32[4,16,128], index: 8, kind: output, shape index: {1}]
  %s9 = inlined_call_operand.hbm [shape: f32[16,128], index: 9, kind: output, shape index: {2}]
  %10 = xla_tuple %s7, %s8, %s9
  %s11 = sld [smem:[#allocation0]]
  $region113: #{mrnn_forward.1} parent=0
    _
  %s13 = ssub.s32 1, %s11
  %s14 = scalar_select 0, %s13, %s11
  $region1: #{mrnn_forward.1} parent=0
    #allocation6 [shape = 'u8[16384]{0}', space=vmem, size = 0x4000, scoped, tag = 'input window, operand 0']
    #allocation7 [shape = 's32[2]{0}', space=sflag, size = 0x8, scoped, tag = 'scoped memory for mrnn_forward.1']
    #allocation8 [shape = 's32[2]{0}', space=sflag, size = 0x8, scoped, tag = 'scoped memory for mrnn_forward.1']
    #allocation9 [shape = 'u8[16384]{0}', space=vmem, size = 0x4000, scoped, tag = 'input window, operand 1, single buffered']
    #allocation10 [shape = 's32[1]{0}', space=sflag, size = 0x4, scoped, tag = 'scoped memory for mrnn_forward.1']
    #allocation11 [shape = 'u8[98304]{0}', space=vmem, size = 0x18000, scoped, tag = 'input window, operand 2, single buffered']
    #allocation12 [shape = 'u8[32768]{0}', space=vmem, size = 0x8000, scoped, tag = 'input window, operand 3, single buffered']
    #allocation13 [shape = 's32[1]{0}', space=sflag, size = 0x4, scoped, tag = 'scoped memory for mrnn_forward.1']
    #allocation14 [shape = 'u8[2048]{0}', space=vmem, size = 0x800, scoped, tag = 'input window, operand 4, single buffered']
    #allocation15 [shape = 'u8[32768]{0}', space=vmem, size = 0x8000, scoped, tag = 'input window, operand 5, single buffered']
    #allocation16 [shape = 's32[1]{0}', space=sflag, size = 0x4, scoped, tag = 'scoped memory for mrnn_forward.1']
    #allocation17 [shape = 'u8[512]{0}', space=vmem, size = 0x400, scoped, tag = 'input window, operand 6, single buffered']
    #allocation18 [shape = 'u8[32768]{0}', space=vmem, size = 0x8000, scoped, tag = 'output window, operand 0']
    #allocation19 [shape = 'u8[32768]{0}', space=vmem, size = 0x8000, scoped, tag = 'output window, operand 1']
    #allocation20 [shape = 's32[2]{0}', space=sflag, size = 0x8, scoped, tag = 'scoped memory for mrnn_forward.1']
    #allocation21 [shape = 'u8[8192]{0}', space=vmem, size = 0x2000, scoped, tag = 'output window, operand 2']
    %15 = vsyncpa [#allocation7], 0
    %s16 = scalar_lea.sflag [#allocation7], 1
    %17 = vsyncpa %s16, 0
    %18 = vsyncpa [#allocation10], 0
    %19 = vsyncpa [#allocation13], 0
    %20 = vsyncpa [#allocation16], 0
    %21 = vsyncpa [#allocation8], 0
    %s22 = scalar_lea.sflag [#allocation8], 1
    %23 = vsyncpa %s22, 0
    %24 = vsyncpa [#allocation20], 0
    %s25 = scalar_lea.sflag [#allocation20], 1
    %26 = vsyncpa %s25, 0
    loop: start=0, step=1, limit=6
    $region2: #{mrnn_forward.1} parent=1 // loop_pre_header
      _
    $region3: #{mrnn_forward.1} parent=1 // loop_header
      %s28 = sphi 0, %s32
      %p29 = scmp.ge.s32.totalorder %s28, 6
      %s35 = sphi 0, %s47
      %s36 = sphi 0, %s43
      %s37 = sphi 0, %s35
      %s38 = sphi 0, %s36
      %s39 = sphi 0, %s37
      %s40 = sphi 0, %s38
      %s52 = sphi 0, %s54
      %s55 = sphi 0, %s52
      %s56 = sphi 0, %s55
      %s72 = sphi 0, %s56
      %s76 = sphi 0, %s76
      %s78 = sphi 0, %s76
      %s79 = sphi 0, %s78
      %s93 = sphi 0, %s79
      %s97 = sphi 0, %s97
      %s99 = sphi 0, %s97
      %s100 = sphi 0, %s99
      %s114 = sphi 0, %s100
      %s118 = sphi 0, %s118
      %s120 = sphi 0, %s118
      %s121 = sphi 0, %s120
      %s135 = sphi 0, %s121
      %s139 = sphi 0, %s139
      %s141 = sphi 0, %s139
      %s142 = sphi 0, %s141
      %s156 = sphi 0, %s142
      %s160 = sphi 0, %s160
      %s162 = sphi 0, %s160
      %s163 = sphi 0, %s162
      %s177 = sphi 0, %s163
      %s181 = sphi 0, %s181
      %s183 = sphi 0, %s181
      %s184 = sphi 0, %s183
      %s198 = sphi 0, %s184
      %s206 = sphi 0, %s208
      %s209 = sphi 0, %s206
      %s210 = sphi 0, %s209
      %s226 = sphi 0, %s210
      %s232 = sphi 0, %s234
      %s235 = sphi 0, %s232
      %s236 = sphi 0, %s235
      %s252 = sphi 0, %s236
      %s258 = sphi 0, %s260
      %s261 = sphi 0, %s258
      %s262 = sphi 0, %s261
      %s278 = sphi 0, %s262
    $region4: #{mrnn_forward.1} parent=1 // loop_header_branch
      %31 = sbr.rel (%p29) target = $region8
    $region5: #{mrnn_forward.1} parent=1 // loop_body
      %s33 = ssub.s32 %s28, 1
      %s34 = ssub.s32 %s28, 2
      %s41 = sadd.s32 1, %s36
      %p42 = scmp.ge.s32.totalorder %s41, 2
      %s43 = scalar_select %p42, 0, %s41
      %s44 = sadd.s32 1, %s35
      %s45 = scalar_select %p42, %s44, %s35
      %p46 = scmp.ge.s32.totalorder %s45, 2
      %s47 = scalar_select %p46, 0, %s45
      %s48 = ssub.s32 %s36, %s43
      %s49 = ssub.s32 %s35, %s47
      %s50 = sor.u32 %s48, %s49
      %p51 = scmp.eq.s32.totalorder %s50, 0
      %s53 = sadd.s32 %s52, 1
      %s54 = scalar_select %p51, %s52, %s53
      %p57 = pneg %p51
      %p58 = scmp.eq.s32.totalorder %s28, 3
      %p59 = por %p57, %p58
      %p60 = scmp.ne.s32.totalorder %s52, %s55
      %p61 = scmp.eq.s32.totalorder %s28, 0
      %p62 = por %p60, %p61
      %p63 = scmp.ne.s32.totalorder %s52, %s55
      %p64 = scmp.eq.s32.totalorder %s33, 3
      %p65 = por %p63, %p64
      %p66 = scmp.ne.s32.totalorder %s55, %s56
      %p67 = scmp.eq.s32.totalorder %s33, 0
      %p68 = por %p66, %p67
      %p69 = scmp.ne.s32.totalorder %s55, %s56
      %p70 = scmp.eq.s32.totalorder %s34, 3
      %p71 = por %p69, %p70
      %p73 = scmp.ne.s32.totalorder %s56, %s72
      %p74 = scmp.eq.s32.totalorder %s34, 0
      %p75 = por %p73, %p74
      %s77 = sadd.s32 %s76, 1
      %p80 = scmp.eq.s32.totalorder %s28, 3
      %p81 = scmp.ne.s32.totalorder %s76, %s78
      %p82 = scmp.eq.s32.totalorder %s28, 0
      %p83 = por %p81, %p82
      %p84 = scmp.ne.s32.totalorder %s76, %s78
      %p85 = scmp.eq.s32.totalorder %s33, 3
      %p86 = por %p84, %p85
      %p87 = scmp.ne.s32.totalorder %s78, %s79
      %p88 = scmp.eq.s32.totalorder %s33, 0
      %p89 = por %p87, %p88
      %p90 = scmp.ne.s32.totalorder %s78, %s79
      %p91 = scmp.eq.s32.totalorder %s34, 3
      %p92 = por %p90, %p91
      %p94 = scmp.ne.s32.totalorder %s79, %s93
      %p95 = scmp.eq.s32.totalorder %s34, 0
      %p96 = por %p94, %p95
      %s98 = sadd.s32 %s97, 1
      %p101 = scmp.eq.s32.totalorder %s28, 3
      %p102 = scmp.ne.s32.totalorder %s97, %s99
      %p103 = scmp.eq.s32.totalorder %s28, 0
      %p104 = por %p102, %p103
      %p105 = scmp.ne.s32.totalorder %s97, %s99
      %p106 = scmp.eq.s32.totalorder %s33, 3
      %p107 = por %p105, %p106
      %p108 = scmp.ne.s32.totalorder %s99, %s100
      %p109 = scmp.eq.s32.totalorder %s33, 0
      %p110 = por %p108, %p109
      %p111 = scmp.ne.s32.totalorder %s99, %s100
      %p112 = scmp.eq.s32.totalorder %s34, 3
      %p113 = por %p111, %p112
      %p115 = scmp.ne.s32.totalorder %s100, %s114
      %p116 = scmp.eq.s32.totalorder %s34, 0
      %p117 = por %p115, %p116
      %s119 = sadd.s32 %s118, 1
      %p122 = scmp.eq.s32.totalorder %s28, 3
      %p123 = scmp.ne.s32.totalorder %s118, %s120
      %p124 = scmp.eq.s32.totalorder %s28, 0
      %p125 = por %p123, %p124
      %p126 = scmp.ne.s32.totalorder %s118, %s120
      %p127 = scmp.eq.s32.totalorder %s33, 3
      %p128 = por %p126, %p127
      %p129 = scmp.ne.s32.totalorder %s120, %s121
      %p130 = scmp.eq.s32.totalorder %s33, 0
      %p131 = por %p129, %p130
      %p132 = scmp.ne.s32.totalorder %s120, %s121
      %p133 = scmp.eq.s32.totalorder %s34, 3
      %p134 = por %p132, %p133
      %p136 = scmp.ne.s32.totalorder %s121, %s135
      %p137 = scmp.eq.s32.totalorder %s34, 0
      %p138 = por %p136, %p137
      %s140 = sadd.s32 %s139, 1
      %p143 = scmp.eq.s32.totalorder %s28, 3
      %p144 = scmp.ne.s32.totalorder %s139, %s141
      %p145 = scmp.eq.s32.totalorder %s28, 0
      %p146 = por %p144, %p145
      %p147 = scmp.ne.s32.totalorder %s139, %s141
      %p148 = scmp.eq.s32.totalorder %s33, 3
      %p149 = por %p147, %p148
      %p150 = scmp.ne.s32.totalorder %s141, %s142
      %p151 = scmp.eq.s32.totalorder %s33, 0
      %p152 = por %p150, %p151
      %p153 = scmp.ne.s32.totalorder %s141, %s142
      %p154 = scmp.eq.s32.totalorder %s34, 3
      %p155 = por %p153, %p154
      %p157 = scmp.ne.s32.totalorder %s142, %s156
      %p158 = scmp.eq.s32.totalorder %s34, 0
      %p159 = por %p157, %p158
      %s161 = sadd.s32 %s160, 1
      %p164 = scmp.eq.s32.totalorder %s28, 3
      %p165 = scmp.ne.s32.totalorder %s160, %s162
      %p166 = scmp.eq.s32.totalorder %s28, 0
      %p167 = por %p165, %p166
      %p168 = scmp.ne.s32.totalorder %s160, %s162
      %p169 = scmp.eq.s32.totalorder %s33, 3
      %p170 = por %p168, %p169
      %p171 = scmp.ne.s32.totalorder %s162, %s163
      %p172 = scmp.eq.s32.totalorder %s33, 0
      %p173 = por %p171, %p172
      %p174 = scmp.ne.s32.totalorder %s162, %s163
      %p175 = scmp.eq.s32.totalorder %s34, 3
      %p176 = por %p174, %p175
      %p178 = scmp.ne.s32.totalorder %s163, %s177
      %p179 = scmp.eq.s32.totalorder %s34, 0
      %p180 = por %p178, %p179
      %s182 = sadd.s32 %s181, 1
      %p185 = scmp.eq.s32.totalorder %s28, 3
      %p186 = scmp.ne.s32.totalorder %s181, %s183
      %p187 = scmp.eq.s32.totalorder %s28, 0
      %p188 = por %p186, %p187
      %p189 = scmp.ne.s32.totalorder %s181, %s183
      %p190 = scmp.eq.s32.totalorder %s33, 3
      %p191 = por %p189, %p190
      %p192 = scmp.ne.s32.totalorder %s183, %s184
      %p193 = scmp.eq.s32.totalorder %s33, 0
      %p194 = por %p192, %p193
      %p195 = scmp.ne.s32.totalorder %s183, %s184
      %p196 = scmp.eq.s32.totalorder %s34, 3
      %p197 = por %p195, %p196
      %p199 = scmp.ne.s32.totalorder %s184, %s198
      %p200 = scmp.eq.s32.totalorder %s34, 0
      %p201 = por %p199, %p200
      %s202 = ssub.s32 %s36, %s43
      %s203 = ssub.s32 %s35, %s47
      %s204 = sor.u32 %s202, %s203
      %p205 = scmp.eq.s32.totalorder %s204, 0
      %s207 = sadd.s32 %s206, 1
      %s208 = scalar_select %p205, %s206, %s207
      %p211 = pneg %p205
      %p212 = scmp.eq.s32.totalorder %s28, 3
      %p213 = por %p211, %p212
      %p214 = scmp.ne.s32.totalorder %s206, %s209
      %p215 = scmp.eq.s32.totalorder %s28, 0
      %p216 = por %p214, %p215
      %p217 = scmp.ne.s32.totalorder %s206, %s209
      %p218 = scmp.eq.s32.totalorder %s33, 3
      %p219 = por %p217, %p218
      %p220 = scmp.ne.s32.totalorder %s209, %s210
      %p221 = scmp.eq.s32.totalorder %s33, 0
      %p222 = por %p220, %p221
      %p223 = scmp.ne.s32.totalorder %s209, %s210
      %p224 = scmp.eq.s32.totalorder %s34, 3
      %p225 = por %p223, %p224
      %p227 = scmp.ne.s32.totalorder %s210, %s226
      %p228 = scmp.eq.s32.totalorder %s34, 0
      %p229 = por %p227, %p228
      %s230 = ssub.s32 %s35, %s47
      %p231 = scmp.eq.s32.totalorder %s230, 0
      %s233 = sadd.s32 %s232, 1
      %s234 = scalar_select %p231, %s232, %s233
      %p237 = pneg %p231
      %p238 = scmp.eq.s32.totalorder %s28, 3
      %p239 = por %p237, %p238
      %p240 = scmp.ne.s32.totalorder %s232, %s235
      %p241 = scmp.eq.s32.totalorder %s28, 0
      %p242 = por %p240, %p241
      %p243 = scmp.ne.s32.totalorder %s232, %s235
      %p244 = scmp.eq.s32.totalorder %s33, 3
      %p245 = por %p243, %p244
      %p246 = scmp.ne.s32.totalorder %s235, %s236
      %p247 = scmp.eq.s32.totalorder %s33, 0
      %p248 = por %p246, %p247
      %p249 = scmp.ne.s32.totalorder %s235, %s236
      %p250 = scmp.eq.s32.totalorder %s34, 3
      %p251 = por %p249, %p250
      %p253 = scmp.ne.s32.totalorder %s236, %s252
      %p254 = scmp.eq.s32.totalorder %s34, 0
      %p255 = por %p253, %p254
      %s256 = ssub.s32 %s35, %s47
      %p257 = scmp.eq.s32.totalorder %s256, 0
      %s259 = sadd.s32 %s258, 1
      %s260 = scalar_select %p257, %s258, %s259
      %p263 = pneg %p257
      %p264 = scmp.eq.s32.totalorder %s28, 3
      %p265 = por %p263, %p264
      %p266 = scmp.ne.s32.totalorder %s258, %s261
      %p267 = scmp.eq.s32.totalorder %s28, 0
      %p268 = por %p266, %p267
      %p269 = scmp.ne.s32.totalorder %s258, %s261
      %p270 = scmp.eq.s32.totalorder %s33, 3
      %p271 = por %p269, %p270
      %p272 = scmp.ne.s32.totalorder %s261, %s262
      %p273 = scmp.eq.s32.totalorder %s33, 0
      %p274 = por %p272, %p273
      %p275 = scmp.ne.s32.totalorder %s261, %s262
      %p276 = scmp.eq.s32.totalorder %s34, 3
      %p277 = por %p275, %p276
      %p279 = scmp.ne.s32.totalorder %s262, %s278
      %p280 = scmp.eq.s32.totalorder %s34, 0
      %p281 = por %p279, %p280
      %p282 = scmp.le.s32.totalorder 1, %s28
      %p283 = scmp.lt.s32.totalorder %s28, 5
      %p284 = pnand %p282, %p283
      %p285 = pneg %p284
      // Predicated region
      $region9: #{mrnn_forward.1} parent=5 // pred_check
        _
      $region10: #{mrnn_forward.1} parent=5 // pred_check_branch
        %287 = sbr.rel (%p284) target = $region12
      $region11: #{mrnn_forward.1} parent=5 // pred_region
        %s288 = ssub.s32 %s28, 1
        // Predicated region
        $region13: #{mrnn_forward.1} parent=11 // pred_check
          %p289 = pneg %p89
        $region14: #{mrnn_forward.1} parent=11 // pred_check_branch
          %291 = sbr.rel (%p289) target = $region16
        $region15: #{mrnn_forward.1} parent=11 // pred_region
          %s293 = ssub.s32 512, 512
          %294 = vsyncadd [#allocation10], %s293
          %s295 = sshll.u32 [#allocation9], 4
          %s296 = int_to_ptr.vmem [resolvable:$true] %s295
          %301 = dma.hbm_to_vmem [thread:$0]  %s1, 512, %s296, [#allocation10], 256, 256, 16
        $region16: #{mrnn_forward.1} parent=11 // pred_fallthru
          _
        // Predicated region
        $region17: #{mrnn_forward.1} parent=11 // pred_check
          %p302 = pneg %p110
        $region18: #{mrnn_forward.1} parent=11 // pred_check_branch
          %304 = sbr.rel (%p302) target = $region20
        $region19: #{mrnn_forward.1} parent=11 // pred_region
          %s306 = ssub.s32 3072, 3072
          %307 = vsyncadd [#allocation10], %s306
          %s308 = sshll.u32 [#allocation11], 4
          %s309 = int_to_ptr.vmem [resolvable:$true] %s308
          %314 = dma.hbm_to_vmem [thread:$0]  %s2, 3072, %s309, [#allocation10], 192, 192, 12
        $region20: #{mrnn_forward.1} parent=11 // pred_fallthru
          _
        // Predicated region
        $region21: #{mrnn_forward.1} parent=11 // pred_check
          %p315 = pneg %p131
        $region22: #{mrnn_forward.1} parent=11 // pred_check_branch
          %317 = sbr.rel (%p315) target = $region24
        $region23: #{mrnn_forward.1} parent=11 // pred_region
          %s319 = ssub.s32 1024, 1024
          %320 = vsyncadd [#allocation13], %s319
          %s321 = sshll.u32 [#allocation12], 4
          %s322 = int_to_ptr.vmem [resolvable:$true] %s321
          %327 = dma.hbm_to_vmem [thread:$0]  %s3, 1024, %s322, [#allocation13], 64, 64, 4
        $region24: #{mrnn_forward.1} parent=11 // pred_fallthru
          _
        // Predicated region
        $region25: #{mrnn_forward.1} parent=11 // pred_check
          %p328 = pneg %p152
        $region26: #{mrnn_forward.1} parent=11 // pred_check_branch
          %330 = sbr.rel (%p328) target = $region28
        $region27: #{mrnn_forward.1} parent=11 // pred_region
          %s332 = ssub.s32 64, 64
          %333 = vsyncadd [#allocation13], %s332
          %s335 = sshll.u32 [#allocation14], 4
          %s336 = int_to_ptr.vmem [resolvable:$true] %s335
          %338 = dma.hbm_to_vmem [thread:$0]  %s4, 64, %s336, [#allocation13]
        $region28: #{mrnn_forward.1} parent=11 // pred_fallthru
          _
        // Predicated region
        $region29: #{mrnn_forward.1} parent=11 // pred_check
          %p339 = pneg %p173
        $region30: #{mrnn_forward.1} parent=11 // pred_check_branch
          %341 = sbr.rel (%p339) target = $region32
        $region31: #{mrnn_forward.1} parent=11 // pred_region
          %s343 = ssub.s32 1024, 1024
          %344 = vsyncadd [#allocation16], %s343
          %s345 = sshll.u32 [#allocation15], 4
          %s346 = int_to_ptr.vmem [resolvable:$true] %s345
          %351 = dma.hbm_to_vmem [thread:$0]  %s5, 1024, %s346, [#allocation16], 64, 64, 4
        $region32: #{mrnn_forward.1} parent=11 // pred_fallthru
          _
        // Predicated region
        $region33: #{mrnn_forward.1} parent=11 // pred_check
          %p352 = pneg %p194
        $region34: #{mrnn_forward.1} parent=11 // pred_check_branch
          %354 = sbr.rel (%p352) target = $region36
        $region35: #{mrnn_forward.1} parent=11 // pred_region
          %s356 = ssub.s32 16, 16
          %357 = vsyncadd [#allocation16], %s356
          %s359 = sshll.u32 [#allocation17], 4
          %s360 = int_to_ptr.vmem [resolvable:$true] %s359
          %362 = dma.hbm_to_vmem [thread:$0]  %s6, 16, %s360, [#allocation16]
        $region36: #{mrnn_forward.1} parent=11 // pred_fallthru
          _
      $region12: #{mrnn_forward.1} parent=5 // pred_fallthru
        _
      %p363 = scmp.lt.s32.totalorder %s28, 4
      // Predicated region
      $region37: #{mrnn_forward.1} parent=5 // pred_check
        %p364 = pneg %p363
      $region38: #{mrnn_forward.1} parent=5 // pred_check_branch
        %366 = sbr.rel (%p364) target = $region40
      $region39: #{mrnn_forward.1} parent=5 // pred_region
        // Predicated region
        $region41: #{mrnn_forward.1} parent=39 // pred_check
          %p367 = pneg %p62
        $region42: #{mrnn_forward.1} parent=39 // pred_check_branch
          %369 = sbr.rel (%p367) target = $region44
        $region43: #{mrnn_forward.1} parent=39 // pred_region
          %s370 = sand.u32 %s52, 1
          %s371 = scalar_lea.sflag [#allocation7], %s370
          %s372 = sand.u32 %s52, 1
          %s373 = smul.addr %s372, 16
          %s374 = scalar_lea.vmem [#allocation6], %s373
          %s376 = ssub.s32 256, 256
          %377 = vsyncadd %s371, %s376
          %s378 = smul.addr %s35, 4
          %s379 = smul.addr %s36, 8
          %s380 = sadd.s32 %s378, %s379
          %s381 = smul.addr %s380, 64
          %s382 = scalar_lea.hbm %s0, %s381
          %s383 = sshll.u32 %s374, 4
          %s384 = int_to_ptr.vmem [resolvable:$true] %s383
          %389 = dma.hbm_to_vmem [thread:$0]  %s382, 256, %s384, %s371, 64, 64, 4
        $region44: #{mrnn_forward.1} parent=39 // pred_fallthru
          _
      $region40: #{mrnn_forward.1} parent=5 // pred_fallthru
        _
      %p390 = scmp.le.s32.totalorder 1, %s28
      %p391 = scmp.lt.s32.totalorder %s28, 5
      %p392 = pnand %p390, %p391
      %p393 = pneg %p392
      // Predicated region
      $region45: #{mrnn_forward.1} parent=5 // pred_check
        _
      $region46: #{mrnn_forward.1} parent=5 // pred_check_branch
        %395 = sbr.rel (%p392) target = $region48
      $region47: #{mrnn_forward.1} parent=5 // pred_region
        %s396 = ssub.s32 %s28, 1
        %s397 = sand.u32 %s55, 1
        %s398 = scalar_lea.sflag [#allocation7], %s397
        %s399 = sand.u32 %s55, 1
        %s400 = smul.addr %s399, 16
        %s401 = scalar_lea.vmem [#allocation6], %s400
        // Predicated region
        $region49: #{mrnn_forward.1} parent=47 // pred_check
          %p402 = pneg %p68
        $region50: #{mrnn_forward.1} parent=47 // pred_check_branch
          %404 = sbr.rel (%p402) target = $region52
        $region51: #{mrnn_forward.1} parent=47 // pred_region
          %405 = dma.done %s398, 256
        $region52: #{mrnn_forward.1} parent=47 // pred_fallthru
          _
        // Predicated region
        $region53: #{mrnn_forward.1} parent=47 // pred_check
          %p406 = pneg %p89
        $region54: #{mrnn_forward.1} parent=47 // pred_check_branch
          %408 = sbr.rel (%p406) target = $region56
        $region55: #{mrnn_forward.1} parent=47 // pred_region
          %409 = dma.done [#allocation10], 512
        $region56: #{mrnn_forward.1} parent=47 // pred_fallthru
          _
        // Predicated region
        $region57: #{mrnn_forward.1} parent=47 // pred_check
          %p410 = pneg %p110
        $region58: #{mrnn_forward.1} parent=47 // pred_check_branch
          %412 = sbr.rel (%p410) target = $region60
        $region59: #{mrnn_forward.1} parent=47 // pred_region
          %413 = dma.done [#allocation10], 3072
        $region60: #{mrnn_forward.1} parent=47 // pred_fallthru
          _
        // Predicated region
        $region61: #{mrnn_forward.1} parent=47 // pred_check
          %p414 = pneg %p131
        $region62: #{mrnn_forward.1} parent=47 // pred_check_branch
          %416 = sbr.rel (%p414) target = $region64
        $region63: #{mrnn_forward.1} parent=47 // pred_region
          %417 = dma.done [#allocation13], 1024
        $region64: #{mrnn_forward.1} parent=47 // pred_fallthru
          _
        // Predicated region
        $region65: #{mrnn_forward.1} parent=47 // pred_check
          %p418 = pneg %p152
        $region66: #{mrnn_forward.1} parent=47 // pred_check_branch
          %420 = sbr.rel (%p418) target = $region68
        $region67: #{mrnn_forward.1} parent=47 // pred_region
          %421 = dma.done [#allocation13], 64
        $region68: #{mrnn_forward.1} parent=47 // pred_fallthru
          _
        // Predicated region
        $region69: #{mrnn_forward.1} parent=47 // pred_check
          %p422 = pneg %p173
        $region70: #{mrnn_forward.1} parent=47 // pred_check_branch
          %424 = sbr.rel (%p422) target = $region72
        $region71: #{mrnn_forward.1} parent=47 // pred_region
          %425 = dma.done [#allocation16], 1024
        $region72: #{mrnn_forward.1} parent=47 // pred_fallthru
          _
        // Predicated region
        $region73: #{mrnn_forward.1} parent=47 // pred_check
          %p426 = pneg %p194
        $region74: #{mrnn_forward.1} parent=47 // pred_check_branch
          %428 = sbr.rel (%p426) target = $region76
        $region75: #{mrnn_forward.1} parent=47 // pred_region
          %429 = dma.done [#allocation16], 16
        $region76: #{mrnn_forward.1} parent=47 // pred_fallthru
          _
        %s430 = sand.u32 %s55, 1
        %s431 = scalar_lea.sflag [#allocation7], %s430
        %s432 = sand.u32 %s55, 1
        %s433 = smul.addr %s432, 16
        %s434 = scalar_lea.vmem [#allocation6], %s433
        %p435 = pneg %p68
        %p436 = pneg %p65
        %p437 = pneg %p89
        %p438 = pneg %p86
        %p439 = pneg %p110
        %p440 = pneg %p107
        %p441 = pneg %p131
        %p442 = pneg %p128
        %p443 = pneg %p152
        %p444 = pneg %p149
        %p445 = pneg %p173
        %p446 = pneg %p170
        %p447 = pneg %p194
        %p448 = pneg %p191
        %p449 = pneg %p222
        %p450 = pneg %p219
        %s451 = sand.u32 %s209, 1
        %s452 = scalar_lea.sflag [#allocation8], %s451
        %s453 = sand.u32 %s209, 1
        %s454 = smul.addr %s453, 32
        %s455 = scalar_lea.vmem [#allocation18], %s454
        %p456 = pneg %p248
        %p457 = pneg %p245
        %s458 = sand.u32 %s33, 1
        %s459 = scalar_lea.sflag [#allocation20], %s458
        %s460 = sand.u32 %s235, 1
        %s461 = smul.addr %s460, 32
        %s462 = scalar_lea.vmem [#allocation19], %s461
        %p463 = pneg %p274
        %p464 = pneg %p271
        %s465 = sand.u32 %s33, 1
        %s466 = scalar_lea.sflag [#allocation20], %s465
        %s467 = sand.u32 %s261, 1
        %s468 = smul.addr %s467, 8
        %s469 = scalar_lea.vmem [#allocation21], %s468
        %p471 = scmp.eq.s32.totalorder %s38, 0
        // Predicated region
        $region77: #{mrnn_forward.1} parent=47 // pred_check
          %p472 = pneg %p471
        $region78: #{mrnn_forward.1} parent=47 // pred_check_branch
          %474 = sbr.rel (%p472) target = $region80
        $region79: #{mrnn_forward.1} parent=47 // pred_region
          %475 = vst [vmem:[#allocation2] sm:$0xff] 0.0
          %476 = vst [vmem:[#allocation3] sm:$0xff] 0.0
          %477 = vst [vmem:[#allocation3 + $0x8] sm:$0xff] 0.0
          %478 = vst [vmem:[#allocation3 + $0x10] sm:$0xff] 0.0
          %479 = vst [vmem:[#allocation3 + $0x18] sm:$0xff] 0.0
        $region80: #{mrnn_forward.1} parent=47 // pred_fallthru
          _
        %v480 = vld [vmem:[%s401] sm:$0xf]
        %v481 = vld [vmem:[%s401 + $0x4] sm:$0xf]
        %v482 = vld [vmem:[%s401 + $0x8] sm:$0xf]
        %v483 = vld [vmem:[%s401 + $0xc] sm:$0xf]
        %v484 = vld [vmem:[#allocation9] sm:$0xff]
        %v485 = vld [vmem:[#allocation9 + $0x8] sm:$0xff]
        %v486 = vld [vmem:[#allocation9 + $0x10] sm:$0xff]
        %v487 = vld [vmem:[#allocation9 + $0x18] sm:$0xff]
        %v488 = vld [vmem:[#allocation14] sm:$0xf]
        %v490 = vlaneseq
        %v491 = vshrl.u32 %v490, 7
        %v492 = vsub.s32 0, %v491
        %v493 = vrot.slane %v488, %v492
        %v494 = vlaneseq
        %v495 = vshrl.u32 %v494, 7
        %v496 = vsub.s32 1, %v495
        %v497 = vrot.slane %v488, %v496
        %v498 = vlaneseq
        %v499 = vshrl.u32 %v498, 7
        %v500 = vsub.s32 2, %v499
        %v501 = vrot.slane %v488, %v500
        %v502 = vlaneseq
        %v503 = vshrl.u32 %v502, 7
        %v504 = vsub.s32 3, %v503
        %v505 = vrot.slane %v488, %v504
        %v514 = vunpack.c.l.b16 %v480
        %v515 = vunpack.c.l.b16 %v481
        %v516 = vunpack.c.l.b16 %v482
        %v517 = vunpack.c.l.b16 %v483
        %v518 = vpack.c.b16 %v515, %v514
        %v519 = vpack.c.b16 %v517, %v516
        %v524 = vunpack.c.l.b16 %v484
        %v525 = vunpack.c.h.b16 %v484
        %v526 = vunpack.c.l.b16 %v485
        %v527 = vunpack.c.h.b16 %v485
        %v528 = vunpack.c.l.b16 %v486
        %v529 = vunpack.c.h.b16 %v486
        %v530 = vunpack.c.l.b16 %v487
        %v531 = vunpack.c.h.b16 %v487
        %v532 = vpack.c.b16 %v528, %v524
        %v533 = vpack.c.b16 %v529, %v525
        %v534 = vpack.c.b16 %v530, %v526
        %v535 = vpack.c.b16 %v531, %v527
        %vm540 = vcmask 130048
        %v542 = vsel %vm540, %v518, 0
        %v545 = vsel %vm540, %v519, 0
        %547 = vmatprep.subr.bf16.mxu0 %v533
        %548 = vmatpush1.bf16.msra.mxu0 %v532
        %549 = vmatprep.subr.bf16.mxu0 0
        %550 = vmatpush1.bf16.msra.mxu0 0
        %551 = vmatprep.subr.bf16.mxu0 0
        %552 = vmatpush1.bf16.msra.mxu0 0
        %553 = vmatprep.subr.bf16.mxu0 0
        %554 = vmatpush1.bf16.msra.mxu0 0
        %555 = vmatprep.subr.bf16.mxu0 0
        %556 = vmatpush1.bf16.msra.mxu0 0
        %557 = vmatprep.subr.bf16.mxu0 0
        %558 = vmatpush1.bf16.msra.mxu0 0
        %559 = vmatprep.subr.bf16.mxu0 0
        %560 = vmatpush1.bf16.msra.mxu0 0
        %561 = vmatprep.subr.bf16.mxu0 0
        %562 = vmatpush1.bf16.msra.mxu0 0
        %563 = vmatprep.subr.bf16.mxu0 0
        %564 = vmatpush1.bf16.msra.mxu0 0
        %565 = vmatprep.subr.bf16.mxu0 0
        %566 = vmatpush1.bf16.msra.mxu0 0
        %567 = vmatprep.subr.bf16.mxu0 0
        %568 = vmatpush1.bf16.msra.mxu0 0
        %569 = vmatprep.subr.bf16.mxu0 0
        %570 = vmatpush1.bf16.msra.mxu0 0
        %571 = vmatprep.subr.bf16.mxu0 0
        %572 = vmatpush1.bf16.msra.mxu0 0
        %573 = vmatprep.subr.bf16.mxu0 0
        %574 = vmatpush1.bf16.msra.mxu0 0
        %575 = vmatprep.subr.bf16.mxu0 0
        %576 = vmatpush1.bf16.msra.mxu0 0
        %577 = vmatprep.subr.bf16.mxu0 0
        %578 = vmatpush1.bf16.msra.mxu0 0
        %579 = vmatprep.mubr.bf16.mxu0 0
        %580 = vmatmul.mubr.bf16.gmra.mrb[0].mxu0 %v542
        %v581 = vpop.f32.mrb[0].mxu0
        %v582 = vadd.f32 %v493, %v581
        %v583 = vpop.f32.mrb[0].mxu0
        %v584 = vadd.f32 %v497, %v583
        %v585 = vpop.f32.mrb[0].mxu0
        %v586 = vadd.f32 %v493, %v585
        %v587 = vpop.f32.mrb[0].mxu0
        %v588 = vadd.f32 %v497, %v587
        %589 = vmatprep.mubr.bf16.mxu0 0
        %590 = vmatmul.mubr.bf16.gmra.mrb[0].mxu0 %v545
        %v591 = vpop.f32.mrb[0].mxu0
        %v592 = vadd.f32 %v493, %v591
        %v593 = vpop.f32.mrb[0].mxu0
        %v594 = vadd.f32 %v497, %v593
        %v595 = vpop.f32.mrb[0].mxu0
        %v596 = vadd.f32 %v493, %v595
        %v597 = vpop.f32.mrb[0].mxu0
        %v598 = vadd.f32 %v497, %v597
        %599 = vdwg.mxu0
        %600 = vmatprep.subr.bf16.mxu0 %v535
        %601 = vmatpush1.bf16.msra.mxu0 %v534
        %602 = vmatprep.subr.bf16.mxu0 0
        %603 = vmatpush1.bf16.msra.mxu0 0
        %604 = vmatprep.subr.bf16.mxu0 0
        %605 = vmatpush1.bf16.msra.mxu0 0
        %606 = vmatprep.subr.bf16.mxu0 0
        %607 = vmatpush1.bf16.msra.mxu0 0
        %608 = vmatprep.subr.bf16.mxu0 0
        %609 = vmatpush1.bf16.msra.mxu0 0
        %610 = vmatprep.subr.bf16.mxu0 0
        %611 = vmatpush1.bf16.msra.mxu0 0
        %612 = vmatprep.subr.bf16.mxu0 0
        %613 = vmatpush1.bf16.msra.mxu0 0
        %614 = vmatprep.subr.bf16.mxu0 0
        %615 = vmatpush1.bf16.msra.mxu0 0
        %616 = vmatprep.subr.bf16.mxu0 0
        %617 = vmatpush1.bf16.msra.mxu0 0
        %618 = vmatprep.subr.bf16.mxu0 0
        %619 = vmatpush1.bf16.msra.mxu0 0
        %620 = vmatprep.subr.bf16.mxu0 0
        %621 = vmatpush1.bf16.msra.mxu0 0
        %622 = vmatprep.subr.bf16.mxu0 0
        %623 = vmatpush1.bf16.msra.mxu0 0
        %624 = vmatprep.subr.bf16.mxu0 0
        %625 = vmatpush1.bf16.msra.mxu0 0
        %626 = vmatprep.subr.bf16.mxu0 0
        %627 = vmatpush1.bf16.msra.mxu0 0
        %628 = vmatprep.subr.bf16.mxu0 0
        %629 = vmatpush1.bf16.msra.mxu0 0
        %630 = vmatprep.subr.bf16.mxu0 0
        %631 = vmatpush1.bf16.msra.mxu0 0
        %632 = vmatprep.mubr.bf16.mxu0 0
        %633 = vmatmul.mubr.bf16.gmra.mrb[0].mxu0 %v542
        %v634 = vpop.f32.mrb[0].mxu0
        %v635 = vadd.f32 %v501, %v634
        %v636 = vpop.f32.mrb[0].mxu0
        %v637 = vadd.f32 %v505, %v636
        %v638 = vpop.f32.mrb[0].mxu0
        %v639 = vadd.f32 %v501, %v638
        %v640 = vpop.f32.mrb[0].mxu0
        %v641 = vadd.f32 %v505, %v640
        %642 = vmatprep.mubr.bf16.mxu0 0
        %643 = vmatmul.mubr.bf16.gmra.mrb[0].mxu0 %v545
        %v644 = vpop.f32.mrb[0].mxu0
        %v645 = vadd.f32 %v501, %v644
        %v646 = vpop.f32.mrb[0].mxu0
        %v647 = vadd.f32 %v505, %v646
        %v648 = vpop.f32.mrb[0].mxu0
        %v649 = vadd.f32 %v501, %v648
        %v650 = vpop.f32.mrb[0].mxu0
        %v651 = vadd.f32 %v505, %v650
        %652 = vdwg.mxu0
        %653 = vst [vmem:[#allocation5] sm:$0xff] %v582
        %654 = vst [vmem:[#allocation5 + $0x8] sm:$0xff] %v584
        %655 = vst [vmem:[#allocation5 + $0x10] sm:$0xff] %v635
        %656 = vst [vmem:[#allocation5 + $0x18] sm:$0xff] %v637
        %657 = vst [vmem:[#allocation5 + $0x20] sm:$0xff] %v586
        %658 = vst [vmem:[#allocation5 + $0x28] sm:$0xff] %v588
        %659 = vst [vmem:[#allocation5 + $0x30] sm:$0xff] %v639
        %660 = vst [vmem:[#allocation5 + $0x38] sm:$0xff] %v641
        %661 = vst [vmem:[#allocation5 + $0x40] sm:$0xff] %v592
        %662 = vst [vmem:[#allocation5 + $0x48] sm:$0xff] %v594
        %663 = vst [vmem:[#allocation5 + $0x50] sm:$0xff] %v645
        %664 = vst [vmem:[#allocation5 + $0x58] sm:$0xff] %v647
        %665 = vst [vmem:[#allocation5 + $0x60] sm:$0xff] %v596
        %666 = vst [vmem:[#allocation5 + $0x68] sm:$0xff] %v598
        %667 = vst [vmem:[#allocation5 + $0x70] sm:$0xff] %v649
        %668 = vst [vmem:[#allocation5 + $0x78] sm:$0xff] %v651
        %v669 = vld [vmem:[#allocation2] sm:$0xff]
        %v670 = vld [vmem:[#allocation5] sm:$0xff]
        %v671 = vld [vmem:[#allocation5 + $0x8] sm:$0xff]
        %v672 = vld [vmem:[#allocation5 + $0x10] sm:$0xff]
        %v673 = vld [vmem:[#allocation5 + $0x18] sm:$0xff]
        %v674 = vpack.c.bf16 %v669, %v669
        %v675 = vld [vmem:[#allocation11] sm:$0xff]
        %v676 = vld [vmem:[#allocation11 + $0x8] sm:$0xf]
        %v677 = vld [vmem:[#allocation11 + $0xc] sm:$0xff]
        %v678 = vld [vmem:[#allocation11 + $0x14] sm:$0xf]
        %v679 = vld [vmem:[#allocation11 + $0x18] sm:$0xff]
        %v680 = vld [vmem:[#allocation11 + $0x20] sm:$0xf]
        %v681 = vld [vmem:[#allocation11 + $0x24] sm:$0xff]
        %v682 = vld [vmem:[#allocation11 + $0x2c] sm:$0xf]
        %v683 = vld [vmem:[#allocation11 + $0x30] sm:$0xff]
        %v684 = vld [vmem:[#allocation11 + $0x38] sm:$0xf]
        %v685 = vld [vmem:[#allocation11 + $0x3c] sm:$0xff]
        %v686 = vld [vmem:[#allocation11 + $0x44] sm:$0xf]
        %v687 = vld [vmem:[#allocation11 + $0x48] sm:$0xff]
        %v688 = vld [vmem:[#allocation11 + $0x50] sm:$0xf]
        %v689 = vld [vmem:[#allocation11 + $0x54] sm:$0xff]
        %v690 = vld [vmem:[#allocation11 + $0x5c] sm:$0xf]
        %v691 = vld [vmem:[#allocation11 + $0x60] sm:$0xff]
        %v692 = vld [vmem:[#allocation11 + $0x68] sm:$0xf]
        %v693 = vld [vmem:[#allocation11 + $0x6c] sm:$0xff]
        %v694 = vld [vmem:[#allocation11 + $0x74] sm:$0xf]
        %v695 = vld [vmem:[#allocation11 + $0x78] sm:$0xff]
        %v696 = vld [vmem:[#allocation11 + $0x80] sm:$0xf]
        %v697 = vld [vmem:[#allocation11 + $0x84] sm:$0xff]
        %v698 = vld [vmem:[#allocation11 + $0x8c] sm:$0xf]
        %v699 = vld [vmem:[#allocation11 + $0x90] sm:$0xff]
        %v700 = vld [vmem:[#allocation11 + $0x98] sm:$0xf]
        %v701 = vld [vmem:[#allocation11 + $0x9c] sm:$0xff]
        %v702 = vld [vmem:[#allocation11 + $0xa4] sm:$0xf]
        %v703 = vld [vmem:[#allocation11 + $0xa8] sm:$0xff]
        %v704 = vld [vmem:[#allocation11 + $0xb0] sm:$0xf]
        %v705 = vld [vmem:[#allocation11 + $0xb4] sm:$0xff]
        %v706 = vld [vmem:[#allocation11 + $0xbc] sm:$0xf]
        %v739 = vunpack.c.l.b16 %v675
        %v740 = vunpack.c.h.b16 %v675
        %v741 = vunpack.c.l.b16 %v676
        %v742 = vunpack.c.l.b16 %v677
        %v743 = vunpack.c.h.b16 %v677
        %v744 = vunpack.c.l.b16 %v678
        %v745 = vunpack.c.l.b16 %v679
        %v746 = vunpack.c.h.b16 %v679
        %v747 = vunpack.c.l.b16 %v680
        %v748 = vunpack.c.l.b16 %v681
        %v749 = vunpack.c.h.b16 %v681
        %v750 = vunpack.c.l.b16 %v682
        %v751 = vunpack.c.l.b16 %v683
        %v752 = vunpack.c.h.b16 %v683
        %v753 = vunpack.c.l.b16 %v684
        %v754 = vunpack.c.l.b16 %v685
        %v755 = vunpack.c.h.b16 %v685
        %v756 = vunpack.c.l.b16 %v686
        %v757 = vunpack.c.l.b16 %v687
        %v758 = vunpack.c.h.b16 %v687
        %v759 = vunpack.c.l.b16 %v688
        %v760 = vunpack.c.l.b16 %v689
        %v761 = vunpack.c.h.b16 %v689
        %v762 = vunpack.c.l.b16 %v690
        %v763 = vunpack.c.l.b16 %v691
        %v764 = vunpack.c.h.b16 %v691
        %v765 = vunpack.c.l.b16 %v692
        %v766 = vunpack.c.l.b16 %v693
        %v767 = vunpack.c.h.b16 %v693
        %v768 = vunpack.c.l.b16 %v694
        %v769 = vunpack.c.l.b16 %v695
        %v770 = vunpack.c.h.b16 %v695
        %v771 = vunpack.c.l.b16 %v696
        %v772 = vunpack.c.l.b16 %v697
        %v773 = vunpack.c.h.b16 %v697
        %v774 = vunpack.c.l.b16 %v698
        %v775 = vunpack.c.l.b16 %v699
        %v776 = vunpack.c.h.b16 %v699
        %v777 = vunpack.c.l.b16 %v700
        %v778 = vunpack.c.l.b16 %v701
        %v779 = vunpack.c.h.b16 %v701
        %v780 = vunpack.c.l.b16 %v702
        %v781 = vunpack.c.l.b16 %v703
        %v782 = vunpack.c.h.b16 %v703
        %v783 = vunpack.c.l.b16 %v704
        %v784 = vunpack.c.l.b16 %v705
        %v785 = vunpack.c.h.b16 %v705
        %v786 = vunpack.c.l.b16 %v706
        %v787 = vpack.c.b16 %v742, %v739
        %v788 = vpack.c.b16 %v743, %v740
        %v789 = vpack.c.b16 %v744, %v741
        %v790 = vpack.c.b16 %v748, %v745
        %v791 = vpack.c.b16 %v749, %v746
        %v792 = vpack.c.b16 %v750, %v747
        %v793 = vpack.c.b16 %v754, %v751
        %v794 = vpack.c.b16 %v755, %v752
        %v795 = vpack.c.b16 %v756, %v753
        %v796 = vpack.c.b16 %v760, %v757
        %v797 = vpack.c.b16 %v761, %v758
        %v798 = vpack.c.b16 %v762, %v759
        %v799 = vpack.c.b16 %v766, %v763
        %v800 = vpack.c.b16 %v767, %v764
        %v801 = vpack.c.b16 %v768, %v765
        %v802 = vpack.c.b16 %v772, %v769
        %v803 = vpack.c.b16 %v773, %v770
        %v804 = vpack.c.b16 %v774, %v771
        %v805 = vpack.c.b16 %v778, %v775
        %v806 = vpack.c.b16 %v779, %v776
        %v807 = vpack.c.b16 %v780, %v777
        %v808 = vpack.c.b16 %v784, %v781
        %v809 = vpack.c.b16 %v785, %v782
        %v810 = vpack.c.b16 %v786, %v783
        %835 = vmatprep.subr.bf16.mxu0 %v788
        %836 = vmatpush1.bf16.msra.mxu0 %v787
        %837 = vmatprep.subr.bf16.mxu0 %v791
        %838 = vmatpush1.bf16.msra.mxu0 %v790
        %839 = vmatprep.subr.bf16.mxu0 %v794
        %840 = vmatpush1.bf16.msra.mxu0 %v793
        %841 = vmatprep.subr.bf16.mxu0 %v797
        %842 = vmatpush1.bf16.msra.mxu0 %v796
        %843 = vmatprep.subr.bf16.mxu0 %v800
        %844 = vmatpush1.bf16.msra.mxu0 %v799
        %845 = vmatprep.subr.bf16.mxu0 %v803
        %846 = vmatpush1.bf16.msra.mxu0 %v802
        %847 = vmatprep.subr.bf16.mxu0 %v806
        %848 = vmatpush1.bf16.msra.mxu0 %v805
        %849 = vmatprep.subr.bf16.mxu0 %v809
        %850 = vmatpush1.bf16.msra.mxu0 %v808
        %851 = vmatprep.subr.bf16.mxu0 0
        %852 = vmatpush1.bf16.msra.mxu0 0
        %853 = vmatprep.subr.bf16.mxu0 0
        %854 = vmatpush1.bf16.msra.mxu0 0
        %855 = vmatprep.subr.bf16.mxu0 0
        %856 = vmatpush1.bf16.msra.mxu0 0
        %857 = vmatprep.subr.bf16.mxu0 0
        %858 = vmatpush1.bf16.msra.mxu0 0
        %859 = vmatprep.subr.bf16.mxu0 0
        %860 = vmatpush1.bf16.msra.mxu0 0
        %861 = vmatprep.subr.bf16.mxu0 0
        %862 = vmatpush1.bf16.msra.mxu0 0
        %863 = vmatprep.subr.bf16.mxu0 0
        %864 = vmatpush1.bf16.msra.mxu0 0
        %865 = vmatprep.subr.bf16.mxu0 0
        %866 = vmatpush1.bf16.msra.mxu0 0
        %867 = vmatprep.mubr.bf16.mxu0 0
        %868 = vmatmul.mubr.bf16.gmra.mrb[0].mxu0 %v674
        %v869 = vpop.f32.mrb[0].mxu0
        %v870 = vadd.f32 0.0, %v869
        %v871 = vpop.f32.mrb[0].mxu0
        %v872 = vadd.f32 0.0, %v871
        %v873 = vpop.f32.mrb[0].mxu0
        %v874 = vpop.f32.mrb[0].mxu0
        %875 = vdwg.mxu0
        %876 = vmatprep.subr.bf16.mxu0 0
        %877 = vmatpush1.bf16.msra.mxu0 %v789
        %878 = vmatprep.subr.bf16.mxu0 0
        %879 = vmatpush1.bf16.msra.mxu0 %v792
        %880 = vmatprep.subr.bf16.mxu0 0
        %881 = vmatpush1.bf16.msra.mxu0 %v795
        %882 = vmatprep.subr.bf16.mxu0 0
        %883 = vmatpush1.bf16.msra.mxu0 %v798
        %884 = vmatprep.subr.bf16.mxu0 0
        %885 = vmatpush1.bf16.msra.mxu0 %v801
        %886 = vmatprep.subr.bf16.mxu0 0
        %887 = vmatpush1.bf16.msra.mxu0 %v804
        %888 = vmatprep.subr.bf16.mxu0 0
        %889 = vmatpush1.bf16.msra.mxu0 %v807
        %890 = vmatprep.subr.bf16.mxu0 0
        %891 = vmatpush1.bf16.msra.mxu0 %v810
        %892 = vmatprep.subr.bf16.mxu0 0
        %893 = vmatpush1.bf16.msra.mxu0 0
        %894 = vmatprep.subr.bf16.mxu0 0
        %895 = vmatpush1.bf16.msra.mxu0 0
        %896 = vmatprep.subr.bf16.mxu0 0
        %897 = vmatpush1.bf16.msra.mxu0 0
        %898 = vmatprep.subr.bf16.mxu0 0
        %899 = vmatpush1.bf16.msra.mxu0 0
        %900 = vmatprep.subr.bf16.mxu0 0
        %901 = vmatpush1.bf16.msra.mxu0 0
        %902 = vmatprep.subr.bf16.mxu0 0
        %903 = vmatpush1.bf16.msra.mxu0 0
        %904 = vmatprep.subr.bf16.mxu0 0
        %905 = vmatpush1.bf16.msra.mxu0 0
        %906 = vmatprep.subr.bf16.mxu0 0
        %907 = vmatpush1.bf16.msra.mxu0 0
        %908 = vmatprep.mubr.bf16.mxu0 0
        %909 = vmatmul.mubr.bf16.gmra.mrb[0].mxu0 %v674
        %v910 = vpop.f32.mrb[0].mxu0
        %v911 = vadd.f32 0.0, %v910
        %v912 = vpop.f32.mrb[0].mxu0
        %v913 = vpop.f32.mrb[0].mxu0
        %v914 = vpop.f32.mrb[0].mxu0
        %915 = vdwg.mxu0
        %v916 = vadd.f32 %v670, %v870
        %v917 = vadd.f32 %v671, %v872
        %v918 = vadd.f32 %v672, %v911
        %v919 = vxor.u32 %v916, 2147483648
        %v920 = vxor.u32 %v917, 2147483648
        %v921 = vxor.u32 %v918, 2147483648
        %v922 = vmul.f32 %v919, 1.442695
        %v923 = vpow.pop %v922
        %v924 = vmul.f32 %v920, 1.442695
        %v925 = vpow.pop %v924
        %v926 = vmul.f32 %v921, 1.442695
        %v927 = vpow.pop %v926
        %v928 = vadd.f32 %v923, 1.0
        %v929 = vadd.f32 %v925, 1.0
        %v930 = vadd.f32 %v927, 1.0
        %v931 = vrcp.pop %v928
        %v932 = vmul.f32 1.0, %v931
        %v933 = vrcp.pop %v929
        %v934 = vmul.f32 1.0, %v933
        %v935 = vrcp.pop %v930
        %v936 = vmul.f32 1.0, %v935
        %v937 = vmul.f32 %v936, 0.5
        %v938 = vmul.f32 %v934, %v669
        %v939 = vpack.c.bf16 %v938, %v938
        %v940 = vld [vmem:[#allocation12] sm:$0xf]
        %v941 = vld [vmem:[#allocation12 + $0x4] sm:$0xf]
        %v942 = vld [vmem:[#allocation12 + $0x8] sm:$0xf]
        %v943 = vld [vmem:[#allocation12 + $0xc] sm:$0xf]
        %v944 = vld [vmem:[#allocation12 + $0x10] sm:$0xf]
        %v945 = vld [vmem:[#allocation12 + $0x14] sm:$0xf]
        %v946 = vld [vmem:[#allocation12 + $0x18] sm:$0xf]
        %v947 = vld [vmem:[#allocation12 + $0x1c] sm:$0xf]
        %v948 = vld [vmem:[#allocation12 + $0x20] sm:$0xf]
        %v949 = vld [vmem:[#allocation12 + $0x24] sm:$0xf]
        %v950 = vld [vmem:[#allocation12 + $0x28] sm:$0xf]
        %v951 = vld [vmem:[#allocation12 + $0x2c] sm:$0xf]
        %v952 = vld [vmem:[#allocation12 + $0x30] sm:$0xf]
        %v953 = vld [vmem:[#allocation12 + $0x34] sm:$0xf]
        %v954 = vld [vmem:[#allocation12 + $0x38] sm:$0xf]
        %v955 = vld [vmem:[#allocation12 + $0x3c] sm:$0xf]
        %v972 = vunpack.c.l.b16 %v940
        %v973 = vunpack.c.l.b16 %v941
        %v974 = vunpack.c.l.b16 %v942
        %v975 = vunpack.c.l.b16 %v943
        %v976 = vunpack.c.l.b16 %v944
        %v977 = vunpack.c.l.b16 %v945
        %v978 = vunpack.c.l.b16 %v946
        %v979 = vunpack.c.l.b16 %v947
        %v980 = vunpack.c.l.b16 %v948
        %v981 = vunpack.c.l.b16 %v949
        %v982 = vunpack.c.l.b16 %v950
        %v983 = vunpack.c.l.b16 %v951
        %v984 = vunpack.c.l.b16 %v952
        %v985 = vunpack.c.l.b16 %v953
        %v986 = vunpack.c.l.b16 %v954
        %v987 = vunpack.c.l.b16 %v955
        %v988 = vpack.c.b16 %v973, %v972
        %v989 = vpack.c.b16 %v975, %v974
        %v990 = vpack.c.b16 %v977, %v976
        %v991 = vpack.c.b16 %v979, %v978
        %v992 = vpack.c.b16 %v981, %v980
        %v993 = vpack.c.b16 %v983, %v982
        %v994 = vpack.c.b16 %v985, %v984
        %v995 = vpack.c.b16 %v987, %v986
        %1004 = vmatprep.subr.bf16.mxu0 0
        %1005 = vmatpush1.bf16.msra.mxu0 %v988
        %1006 = vmatprep.subr.bf16.mxu0 0
        %1007 = vmatpush1.bf16.msra.mxu0 %v989
        %1008 = vmatprep.subr.bf16.mxu0 0
        %1009 = vmatpush1.bf16.msra.mxu0 %v990
        %1010 = vmatprep.subr.bf16.mxu0 0
        %1011 = vmatpush1.bf16.msra.mxu0 %v991
        %1012 = vmatprep.subr.bf16.mxu0 0
        %1013 = vmatpush1.bf16.msra.mxu0 %v992
        %1014 = vmatprep.subr.bf16.mxu0 0
        %1015 = vmatpush1.bf16.msra.mxu0 %v993
        %1016 = vmatprep.subr.bf16.mxu0 0
        %1017 = vmatpush1.bf16.msra.mxu0 %v994
        %1018 = vmatprep.subr.bf16.mxu0 0
        %1019 = vmatpush1.bf16.msra.mxu0 %v995
        %1020 = vmatprep.subr.bf16.mxu0 0
        %1021 = vmatpush1.bf16.msra.mxu0 0
        %1022 = vmatprep.subr.bf16.mxu0 0
        %1023 = vmatpush1.bf16.msra.mxu0 0
        %1024 = vmatprep.subr.bf16.mxu0 0
        %1025 = vmatpush1.bf16.msra.mxu0 0
        %1026 = vmatprep.subr.bf16.mxu0 0
        %1027 = vmatpush1.bf16.msra.mxu0 0
        %1028 = vmatprep.subr.bf16.mxu0 0
        %1029 = vmatpush1.bf16.msra.mxu0 0
        %1030 = vmatprep.subr.bf16.mxu0 0
        %1031 = vmatpush1.bf16.msra.mxu0 0
        %1032 = vmatprep.subr.bf16.mxu0 0
        %1033 = vmatpush1.bf16.msra.mxu0 0
        %1034 = vmatprep.subr.bf16.mxu0 0
        %1035 = vmatpush1.bf16.msra.mxu0 0
        %1036 = vmatprep.mubr.bf16.mxu0 0
        %1037 = vmatmul.mubr.bf16.gmra.mrb[0].mxu0 %v939
        %v1038 = vpop.f32.mrb[0].mxu0
        %v1039 = vadd.f32 0.0, %v1038
        %v1040 = vpop.f32.mrb[0].mxu0
        %v1041 = vpop.f32.mrb[0].mxu0
        %v1042 = vpop.f32.mrb[0].mxu0
        %1043 = vdwg.mxu0
        %v1044 = vadd.f32 %v673, %v1039
        %v1045 = vtanh.pop %v1044
        %s1046 = scalar_lea.vmem [#allocation3], 24
        %v1047 = vld [vmem:[%s1046] sm:$0xff]
        %v1048 = vmul.f32 %v937, %v1047
        %v1049 = vsub.f32 1.0, %v937
        %v1050 = vmul.f32 %v937, %v1049
        %v1051 = vmul.f32 %v1050, 0.5
        %s1052 = scalar_lea.vmem [#allocation3], 16
        %v1053 = vld [vmem:[%s1052] sm:$0xff]
        %v1054 = vmul.f32 %v1051, %v1053
        %v1055 = vadd.f32 %v1048, %v1054
        %v1056 = vsub.f32 2.0, %v937
        %v1057 = vmul.f32 %v1051, %v1056
        %v1058 = vmul.f32 %v1057, 0.33333334
        %s1059 = scalar_lea.vmem [#allocation3], 8
        %v1060 = vld [vmem:[%s1059] sm:$0xff]
        %v1061 = vmul.f32 %v1058, %v1060
        %v1062 = vadd.f32 %v1055, %v1061
        %v1063 = vsub.f32 3.0, %v937
        %v1064 = vmul.f32 %v1058, %v1063
        %v1065 = vmul.f32 %v1064, 0.25
        %v1066 = vld [vmem:[#allocation3] sm:$0xff]
        %v1067 = vmul.f32 %v1065, %v1066
        %v1068 = vadd.f32 %v1062, %v1067
        %v1069 = vsub.f32 1.0, %v932
        %v1070 = vmul.f32 %v1069, %v1068
        %v1071 = vmul.f32 %v932, %v1045
        %v1072 = vadd.f32 %v1070, %v1071
        %1073 = vst [vmem:[#allocation3] sm:$0xff] %v1072
        %1074 = vst [vmem:[#allocation2] sm:$0xff] %v1072
        %v1075 = vpack.c.bf16 %v1072, %v1072
        %1076 = vst [vmem:[#allocation4] sm:$0xf] %v1075
        %v1077 = vld [vmem:[#allocation2] sm:$0xff]
        %v1078 = vld [vmem:[#allocation5 + $0x20] sm:$0xff]
        %v1079 = vld [vmem:[#allocation5 + $0x28] sm:$0xff]
        %v1080 = vld [vmem:[#allocation5 + $0x30] sm:$0xff]
        %v1081 = vld [vmem:[#allocation5 + $0x38] sm:$0xff]
        %v1082 = vpack.c.bf16 %v1077, %v1077
        %v1083 = vld [vmem:[#allocation11] sm:$0xff]
        %v1084 = vld [vmem:[#allocation11 + $0x8] sm:$0xf]
        %v1085 = vld [vmem:[#allocation11 + $0xc] sm:$0xff]
        %v1086 = vld [vmem:[#allocation11 + $0x14] sm:$0xf]
        %v1087 = vld [vmem:[#allocation11 + $0x18] sm:$0xff]
        %v1088 = vld [vmem:[#allocation11 + $0x20] sm:$0xf]
        %v1089 = vld [vmem:[#allocation11 + $0x24] sm:$0xff]
        %v1090 = vld [vmem:[#allocation11 + $0x2c] sm:$0xf]
        %v1091 = vld [vmem:[#allocation11 + $0x30] sm:$0xff]
        %v1092 = vld [vmem:[#allocation11 + $0x38] sm:$0xf]
        %v1093 = vld [vmem:[#allocation11 + $0x3c] sm:$0xff]
        %v1094 = vld [vmem:[#allocation11 + $0x44] sm:$0xf]
        %v1095 = vld [vmem:[#allocation11 + $0x48] sm:$0xff]
        %v1096 = vld [vmem:[#allocation11 + $0x50] sm:$0xf]
        %v1097 = vld [vmem:[#allocation11 + $0x54] sm:$0xff]
        %v1098 = vld [vmem:[#allocation11 + $0x5c] sm:$0xf]
        %v1099 = vld [vmem:[#allocation11 + $0x60] sm:$0xff]
        %v1100 = vld [vmem:[#allocation11 + $0x68] sm:$0xf]
        %v1101 = vld [vmem:[#allocation11 + $0x6c] sm:$0xff]
        %v1102 = vld [vmem:[#allocation11 + $0x74] sm:$0xf]
        %v1103 = vld [vmem:[#allocation11 + $0x78] sm:$0xff]
        %v1104 = vld [vmem:[#allocation11 + $0x80] sm:$0xf]
        %v1105 = vld [vmem:[#allocation11 + $0x84] sm:$0xff]
        %v1106 = vld [vmem:[#allocation11 + $0x8c] sm:$0xf]
        %v1107 = vld [vmem:[#allocation11 + $0x90] sm:$0xff]
        %v1108 = vld [vmem:[#allocation11 + $0x98] sm:$0xf]
        %v1109 = vld [vmem:[#allocation11 + $0x9c] sm:$0xff]
        %v1110 = vld [vmem:[#allocation11 + $0xa4] sm:$0xf]
        %v1111 = vld [vmem:[#allocation11 + $0xa8] sm:$0xff]
        %v1112 = vld [vmem:[#allocation11 + $0xb0] sm:$0xf]
        %v1113 = vld [vmem:[#allocation11 + $0xb4] sm:$0xff]
        %v1114 = vld [vmem:[#allocation11 + $0xbc] sm:$0xf]
        %v1147 = vunpack.c.l.b16 %v1083
        %v1148 = vunpack.c.h.b16 %v1083
        %v1149 = vunpack.c.l.b16 %v1084
        %v1150 = vunpack.c.l.b16 %v1085
        %v1151 = vunpack.c.h.b16 %v1085
        %v1152 = vunpack.c.l.b16 %v1086
        %v1153 = vunpack.c.l.b16 %v1087
        %v1154 = vunpack.c.h.b16 %v1087
        %v1155 = vunpack.c.l.b16 %v1088
        %v1156 = vunpack.c.l.b16 %v1089
        %v1157 = vunpack.c.h.b16 %v1089
        %v1158 = vunpack.c.l.b16 %v1090
        %v1159 = vunpack.c.l.b16 %v1091
        %v1160 = vunpack.c.h.b16 %v1091
        %v1161 = vunpack.c.l.b16 %v1092
        %v1162 = vunpack.c.l.b16 %v1093
        %v1163 = vunpack.c.h.b16 %v1093
        %v1164 = vunpack.c.l.b16 %v1094
        %v1165 = vunpack.c.l.b16 %v1095
        %v1166 = vunpack.c.h.b16 %v1095
        %v1167 = vunpack.c.l.b16 %v1096
        %v1168 = vunpack.c.l.b16 %v1097
        %v1169 = vunpack.c.h.b16 %v1097
        %v1170 = vunpack.c.l.b16 %v1098
        %v1171 = vunpack.c.l.b16 %v1099
        %v1172 = vunpack.c.h.b16 %v1099
        %v1173 = vunpack.c.l.b16 %v1100
        %v1174 = vunpack.c.l.b16 %v1101
        %v1175 = vunpack.c.h.b16 %v1101
        %v1176 = vunpack.c.l.b16 %v1102
        %v1177 = vunpack.c.l.b16 %v1103
        %v1178 = vunpack.c.h.b16 %v1103
        %v1179 = vunpack.c.l.b16 %v1104
        %v1180 = vunpack.c.l.b16 %v1105
        %v1181 = vunpack.c.h.b16 %v1105
        %v1182 = vunpack.c.l.b16 %v1106
        %v1183 = vunpack.c.l.b16 %v1107
        %v1184 = vunpack.c.h.b16 %v1107
        %v1185 = vunpack.c.l.b16 %v1108
        %v1186 = vunpack.c.l.b16 %v1109
        %v1187 = vunpack.c.h.b16 %v1109
        %v1188 = vunpack.c.l.b16 %v1110
        %v1189 = vunpack.c.l.b16 %v1111
        %v1190 = vunpack.c.h.b16 %v1111
        %v1191 = vunpack.c.l.b16 %v1112
        %v1192 = vunpack.c.l.b16 %v1113
        %v1193 = vunpack.c.h.b16 %v1113
        %v1194 = vunpack.c.l.b16 %v1114
        %v1195 = vpack.c.b16 %v1150, %v1147
        %v1196 = vpack.c.b16 %v1151, %v1148
        %v1197 = vpack.c.b16 %v1152, %v1149
        %v1198 = vpack.c.b16 %v1156, %v1153
        %v1199 = vpack.c.b16 %v1157, %v1154
        %v1200 = vpack.c.b16 %v1158, %v1155
        %v1201 = vpack.c.b16 %v1162, %v1159
        %v1202 = vpack.c.b16 %v1163, %v1160
        %v1203 = vpack.c.b16 %v1164, %v1161
        %v1204 = vpack.c.b16 %v1168, %v1165
        %v1205 = vpack.c.b16 %v1169, %v1166
        %v1206 = vpack.c.b16 %v1170, %v1167
        %v1207 = vpack.c.b16 %v1174, %v1171
        %v1208 = vpack.c.b16 %v1175, %v1172
        %v1209 = vpack.c.b16 %v1176, %v1173
        %v1210 = vpack.c.b16 %v1180, %v1177
        %v1211 = vpack.c.b16 %v1181, %v1178
        %v1212 = vpack.c.b16 %v1182, %v1179
        %v1213 = vpack.c.b16 %v1186, %v1183
        %v1214 = vpack.c.b16 %v1187, %v1184
        %v1215 = vpack.c.b16 %v1188, %v1185
        %v1216 = vpack.c.b16 %v1192, %v1189
        %v1217 = vpack.c.b16 %v1193, %v1190
        %v1218 = vpack.c.b16 %v1194, %v1191
        %1243 = vmatprep.subr.bf16.mxu0 %v1196
        %1244 = vmatpush1.bf16.msra.mxu0 %v1195
        %1245 = vmatprep.subr.bf16.mxu0 %v1199
        %1246 = vmatpush1.bf16.msra.mxu0 %v1198
        %1247 = vmatprep.subr.bf16.mxu0 %v1202
        %1248 = vmatpush1.bf16.msra.mxu0 %v1201
        %1249 = vmatprep.subr.bf16.mxu0 %v1205
        %1250 = vmatpush1.bf16.msra.mxu0 %v1204
        %1251 = vmatprep.subr.bf16.mxu0 %v1208
        %1252 = vmatpush1.bf16.msra.mxu0 %v1207
        %1253 = vmatprep.subr.bf16.mxu0 %v1211
        %1254 = vmatpush1.bf16.msra.mxu0 %v1210
        %1255 = vmatprep.subr.bf16.mxu0 %v1214
        %1256 = vmatpush1.bf16.msra.mxu0 %v1213
        %1257 = vmatprep.subr.bf16.mxu0 %v1217
        %1258 = vmatpush1.bf16.msra.mxu0 %v1216
        %1259 = vmatprep.subr.bf16.mxu0 0
        %1260 = vmatpush1.bf16.msra.mxu0 0
        %1261 = vmatprep.subr.bf16.mxu0 0
        %1262 = vmatpush1.bf16.msra.mxu0 0
        %1263 = vmatprep.subr.bf16.mxu0 0
        %1264 = vmatpush1.bf16.msra.mxu0 0
        %1265 = vmatprep.subr.bf16.mxu0 0
        %1266 = vmatpush1.bf16.msra.mxu0 0
        %1267 = vmatprep.subr.bf16.mxu0 0
        %1268 = vmatpush1.bf16.msra.mxu0 0
        %1269 = vmatprep.subr.bf16.mxu0 0
        %1270 = vmatpush1.bf16.msra.mxu0 0
        %1271 = vmatprep.subr.bf16.mxu0 0
        %1272 = vmatpush1.bf16.msra.mxu0 0
        %1273 = vmatprep.subr.bf16.mxu0 0
        %1274 = vmatpush1.bf16.msra.mxu0 0
        %1275 = vmatprep.mubr.bf16.mxu0 0
        %1276 = vmatmul.mubr.bf16.gmra.mrb[0].mxu0 %v1082
        %v1277 = vpop.f32.mrb[0].mxu0
        %v1278 = vadd.f32 0.0, %v1277
        %v1279 = vpop.f32.mrb[0].mxu0
        %v1280 = vadd.f32 0.0, %v1279
        %v1281 = vpop.f32.mrb[0].mxu0
        %v1282 = vpop.f32.mrb[0].mxu0
        %1283 = vdwg.mxu0
        %1284 = vmatprep.subr.bf16.mxu0 0
        %1285 = vmatpush1.bf16.msra.mxu0 %v1197
        %1286 = vmatprep.subr.bf16.mxu0 0
        %1287 = vmatpush1.bf16.msra.mxu0 %v1200
        %1288 = vmatprep.subr.bf16.mxu0 0
        %1289 = vmatpush1.bf16.msra.mxu0 %v1203
        %1290 = vmatprep.subr.bf16.mxu0 0
        %1291 = vmatpush1.bf16.msra.mxu0 %v1206
        %1292 = vmatprep.subr.bf16.mxu0 0
        %1293 = vmatpush1.bf16.msra.mxu0 %v1209
        %1294 = vmatprep.subr.bf16.mxu0 0
        %1295 = vmatpush1.bf16.msra.mxu0 %v1212
        %1296 = vmatprep.subr.bf16.mxu0 0
        %1297 = vmatpush1.bf16.msra.mxu0 %v1215
        %1298 = vmatprep.subr.bf16.mxu0 0
        %1299 = vmatpush1.bf16.msra.mxu0 %v1218
        %1300 = vmatprep.subr.bf16.mxu0 0
        %1301 = vmatpush1.bf16.msra.mxu0 0
        %1302 = vmatprep.subr.bf16.mxu0 0
        %1303 = vmatpush1.bf16.msra.mxu0 0
        %1304 = vmatprep.subr.bf16.mxu0 0
        %1305 = vmatpush1.bf16.msra.mxu0 0
        %1306 = vmatprep.subr.bf16.mxu0 0
        %1307 = vmatpush1.bf16.msra.mxu0 0
        %1308 = vmatprep.subr.bf16.mxu0 0
        %1309 = vmatpush1.bf16.msra.mxu0 0
        %1310 = vmatprep.subr.bf16.mxu0 0
        %1311 = vmatpush1.bf16.msra.mxu0 0
        %1312 = vmatprep.subr.bf16.mxu0 0
        %1313 = vmatpush1.bf16.msra.mxu0 0
        %1314 = vmatprep.subr.bf16.mxu0 0
        %1315 = vmatpush1.bf16.msra.mxu0 0
        %1316 = vmatprep.mubr.bf16.mxu0 0
        %1317 = vmatmul.mubr.bf16.gmra.mrb[0].mxu0 %v1082
        %v1318 = vpop.f32.mrb[0].mxu0
        %v1319 = vadd.f32 0.0, %v1318
        %v1320 = vpop.f32.mrb[0].mxu0
        %v1321 = vpop.f32.mrb[0].mxu0
        %v1322 = vpop.f32.mrb[0].mxu0
        %1323 = vdwg.mxu0
        %v1324 = vadd.f32 %v1078, %v1278
        %v1325 = vadd.f32 %v1079, %v1280
        %v1326 = vadd.f32 %v1080, %v1319
        %v1327 = vxor.u32 %v1324, 2147483648
        %v1328 = vxor.u32 %v1325, 2147483648
        %v1329 = vxor.u32 %v1326, 2147483648
        %v1330 = vmul.f32 %v1327, 1.442695
        %v1331 = vpow.pop %v1330
        %v1332 = vmul.f32 %v1328, 1.442695
        %v1333 = vpow.pop %v1332
        %v1334 = vmul.f32 %v1329, 1.442695
        %v1335 = vpow.pop %v1334
        %v1336 = vadd.f32 %v1331, 1.0
        %v1337 = vadd.f32 %v1333, 1.0
        %v1338 = vadd.f32 %v1335, 1.0
        %v1339 = vrcp.pop %v1336
        %v1340 = vmul.f32 1.0, %v1339
        %v1341 = vrcp.pop %v1337
        %v1342 = vmul.f32 1.0, %v1341
        %v1343 = vrcp.pop %v1338
        %v1344 = vmul.f32 1.0, %v1343
        %v1345 = vmul.f32 %v1344, 0.5
        %v1346 = vmul.f32 %v1342, %v1077
        %v1347 = vpack.c.bf16 %v1346, %v1346
        %v1348 = vld [vmem:[#allocation12] sm:$0xf]
        %v1349 = vld [vmem:[#allocation12 + $0x4] sm:$0xf]
        %v1350 = vld [vmem:[#allocation12 + $0x8] sm:$0xf]
        %v1351 = vld [vmem:[#allocation12 + $0xc] sm:$0xf]
        %v1352 = vld [vmem:[#allocation12 + $0x10] sm:$0xf]
        %v1353 = vld [vmem:[#allocation12 + $0x14] sm:$0xf]
        %v1354 = vld [vmem:[#allocation12 + $0x18] sm:$0xf]
        %v1355 = vld [vmem:[#allocation12 + $0x1c] sm:$0xf]
        %v1356 = vld [vmem:[#allocation12 + $0x20] sm:$0xf]
        %v1357 = vld [vmem:[#allocation12 + $0x24] sm:$0xf]
        %v1358 = vld [vmem:[#allocation12 + $0x28] sm:$0xf]
        %v1359 = vld [vmem:[#allocation12 + $0x2c] sm:$0xf]
        %v1360 = vld [vmem:[#allocation12 + $0x30] sm:$0xf]
        %v1361 = vld [vmem:[#allocation12 + $0x34] sm:$0xf]
        %v1362 = vld [vmem:[#allocation12 + $0x38] sm:$0xf]
        %v1363 = vld [vmem:[#allocation12 + $0x3c] sm:$0xf]
        %v1380 = vunpack.c.l.b16 %v1348
        %v1381 = vunpack.c.l.b16 %v1349
        %v1382 = vunpack.c.l.b16 %v1350
        %v1383 = vunpack.c.l.b16 %v1351
        %v1384 = vunpack.c.l.b16 %v1352
        %v1385 = vunpack.c.l.b16 %v1353
        %v1386 = vunpack.c.l.b16 %v1354
        %v1387 = vunpack.c.l.b16 %v1355
        %v1388 = vunpack.c.l.b16 %v1356
        %v1389 = vunpack.c.l.b16 %v1357
        %v1390 = vunpack.c.l.b16 %v1358
        %v1391 = vunpack.c.l.b16 %v1359
        %v1392 = vunpack.c.l.b16 %v1360
        %v1393 = vunpack.c.l.b16 %v1361
        %v1394 = vunpack.c.l.b16 %v1362
        %v1395 = vunpack.c.l.b16 %v1363
        %v1396 = vpack.c.b16 %v1381, %v1380
        %v1397 = vpack.c.b16 %v1383, %v1382
        %v1398 = vpack.c.b16 %v1385, %v1384
        %v1399 = vpack.c.b16 %v1387, %v1386
        %v1400 = vpack.c.b16 %v1389, %v1388
        %v1401 = vpack.c.b16 %v1391, %v1390
        %v1402 = vpack.c.b16 %v1393, %v1392
        %v1403 = vpack.c.b16 %v1395, %v1394
        %1412 = vmatprep.subr.bf16.mxu0 0
        %1413 = vmatpush1.bf16.msra.mxu0 %v1396
        %1414 = vmatprep.subr.bf16.mxu0 0
        %1415 = vmatpush1.bf16.msra.mxu0 %v1397
        %1416 = vmatprep.subr.bf16.mxu0 0
        %1417 = vmatpush1.bf16.msra.mxu0 %v1398
        %1418 = vmatprep.subr.bf16.mxu0 0
        %1419 = vmatpush1.bf16.msra.mxu0 %v1399
        %1420 = vmatprep.subr.bf16.mxu0 0
        %1421 = vmatpush1.bf16.msra.mxu0 %v1400
        %1422 = vmatprep.subr.bf16.mxu0 0
        %1423 = vmatpush1.bf16.msra.mxu0 %v1401
        %1424 = vmatprep.subr.bf16.mxu0 0
        %1425 = vmatpush1.bf16.msra.mxu0 %v1402
        %1426 = vmatprep.subr.bf16.mxu0 0
        %1427 = vmatpush1.bf16.msra.mxu0 %v1403
        %1428 = vmatprep.subr.bf16.mxu0 0
        %1429 = vmatpush1.bf16.msra.mxu0 0
        %1430 = vmatprep.subr.bf16.mxu0 0
        %1431 = vmatpush1.bf16.msra.mxu0 0
        %1432 = vmatprep.subr.bf16.mxu0 0
        %1433 = vmatpush1.bf16.msra.mxu0 0
        %1434 = vmatprep.subr.bf16.mxu0 0
        %1435 = vmatpush1.bf16.msra.mxu0 0
        %1436 = vmatprep.subr.bf16.mxu0 0
        %1437 = vmatpush1.bf16.msra.mxu0 0
        %1438 = vmatprep.subr.bf16.mxu0 0
        %1439 = vmatpush1.bf16.msra.mxu0 0
        %1440 = vmatprep.subr.bf16.mxu0 0
        %1441 = vmatpush1.bf16.msra.mxu0 0
        %1442 = vmatprep.subr.bf16.mxu0 0
        %1443 = vmatpush1.bf16.msra.mxu0 0
        %1444 = vmatprep.mubr.bf16.mxu0 0
        %1445 = vmatmul.mubr.bf16.gmra.mrb[0].mxu0 %v1347
        %v1446 = vpop.f32.mrb[0].mxu0
        %v1447 = vadd.f32 0.0, %v1446
        %v1448 = vpop.f32.mrb[0].mxu0
        %v1449 = vpop.f32.mrb[0].mxu0
        %v1450 = vpop.f32.mrb[0].mxu0
        %1451 = vdwg.mxu0
        %v1452 = vadd.f32 %v1081, %v1447
        %v1453 = vtanh.pop %v1452
        %v1454 = vld [vmem:[#allocation3] sm:$0xff]
        %v1455 = vmul.f32 %v1345, %v1454
        %v1456 = vsub.f32 1.0, %v1345
        %v1457 = vmul.f32 %v1345, %v1456
        %v1458 = vmul.f32 %v1457, 0.5
        %v1459 = vld [vmem:[%s1046] sm:$0xff]
        %v1460 = vmul.f32 %v1458, %v1459
        %v1461 = vadd.f32 %v1455, %v1460
        %v1462 = vsub.f32 2.0, %v1345
        %v1463 = vmul.f32 %v1458, %v1462
        %v1464 = vmul.f32 %v1463, 0.33333334
        %v1465 = vld [vmem:[%s1052] sm:$0xff]
        %v1466 = vmul.f32 %v1464, %v1465
        %v1467 = vadd.f32 %v1461, %v1466
        %v1468 = vsub.f32 3.0, %v1345
        %v1469 = vmul.f32 %v1464, %v1468
        %v1470 = vmul.f32 %v1469, 0.25
        %v1471 = vld [vmem:[%s1059] sm:$0xff]
        %v1472 = vmul.f32 %v1470, %v1471
        %v1473 = vadd.f32 %v1467, %v1472
        %v1474 = vsub.f32 1.0, %v1340
        %v1475 = vmul.f32 %v1474, %v1473
        %v1476 = vmul.f32 %v1340, %v1453
        %v1477 = vadd.f32 %v1475, %v1476
        %1478 = vst [vmem:[%s1059] sm:$0xff] %v1477
        %1479 = vst [vmem:[#allocation2] sm:$0xff] %v1477
        %v1480 = vpack.c.bf16 %v1477, %v1477
        %v1482 = vrot.slane %v1480, 4
        %1484 = vst [vmem:[#allocation4] sm:$0xf0] %v1482
        %v1485 = vld [vmem:[#allocation2] sm:$0xff]
        %v1486 = vld [vmem:[#allocation5 + $0x40] sm:$0xff]
        %v1487 = vld [vmem:[#allocation5 + $0x48] sm:$0xff]
        %v1488 = vld [vmem:[#allocation5 + $0x50] sm:$0xff]
        %v1489 = vld [vmem:[#allocation5 + $0x58] sm:$0xff]
        %v1490 = vpack.c.bf16 %v1485, %v1485
        %v1491 = vld [vmem:[#allocation11] sm:$0xff]
        %v1492 = vld [vmem:[#allocation11 + $0x8] sm:$0xf]
        %v1493 = vld [vmem:[#allocation11 + $0xc] sm:$0xff]
        %v1494 = vld [vmem:[#allocation11 + $0x14] sm:$0xf]
        %v1495 = vld [vmem:[#allocation11 + $0x18] sm:$0xff]
        %v1496 = vld [vmem:[#allocation11 + $0x20] sm:$0xf]
        %v1497 = vld [vmem:[#allocation11 + $0x24] sm:$0xff]
        %v1498 = vld [vmem:[#allocation11 + $0x2c] sm:$0xf]
        %v1499 = vld [vmem:[#allocation11 + $0x30] sm:$0xff]
        %v1500 = vld [vmem:[#allocation11 + $0x38] sm:$0xf]
        %v1501 = vld [vmem:[#allocation11 + $0x3c] sm:$0xff]
        %v1502 = vld [vmem:[#allocation11 + $0x44] sm:$0xf]
        %v1503 = vld [vmem:[#allocation11 + $0x48] sm:$0xff]
        %v1504 = vld [vmem:[#allocation11 + $0x50] sm:$0xf]
        %v1505 = vld [vmem:[#allocation11 + $0x54] sm:$0xff]
        %v1506 = vld [vmem:[#allocation11 + $0x5c] sm:$0xf]
        %v1507 = vld [vmem:[#allocation11 + $0x60] sm:$0xff]
        %v1508 = vld [vmem:[#allocation11 + $0x68] sm:$0xf]
        %v1509 = vld [vmem:[#allocation11 + $0x6c] sm:$0xff]
        %v1510 = vld [vmem:[#allocation11 + $0x74] sm:$0xf]
        %v1511 = vld [vmem:[#allocation11 + $0x78] sm:$0xff]
        %v1512 = vld [vmem:[#allocation11 + $0x80] sm:$0xf]
        %v1513 = vld [vmem:[#allocation11 + $0x84] sm:$0xff]
        %v1514 = vld [vmem:[#allocation11 + $0x8c] sm:$0xf]
        %v1515 = vld [vmem:[#allocation11 + $0x90] sm:$0xff]
        %v1516 = vld [vmem:[#allocation11 + $0x98] sm:$0xf]
        %v1517 = vld [vmem:[#allocation11 + $0x9c] sm:$0xff]
        %v1518 = vld [vmem:[#allocation11 + $0xa4] sm:$0xf]
        %v1519 = vld [vmem:[#allocation11 + $0xa8] sm:$0xff]
        %v1520 = vld [vmem:[#allocation11 + $0xb0] sm:$0xf]
        %v1521 = vld [vmem:[#allocation11 + $0xb4] sm:$0xff]
        %v1522 = vld [vmem:[#allocation11 + $0xbc] sm:$0xf]
        %v1555 = vunpack.c.l.b16 %v1491
        %v1556 = vunpack.c.h.b16 %v1491
        %v1557 = vunpack.c.l.b16 %v1492
        %v1558 = vunpack.c.l.b16 %v1493
        %v1559 = vunpack.c.h.b16 %v1493
        %v1560 = vunpack.c.l.b16 %v1494
        %v1561 = vunpack.c.l.b16 %v1495
        %v1562 = vunpack.c.h.b16 %v1495
        %v1563 = vunpack.c.l.b16 %v1496
        %v1564 = vunpack.c.l.b16 %v1497
        %v1565 = vunpack.c.h.b16 %v1497
        %v1566 = vunpack.c.l.b16 %v1498
        %v1567 = vunpack.c.l.b16 %v1499
        %v1568 = vunpack.c.h.b16 %v1499
        %v1569 = vunpack.c.l.b16 %v1500
        %v1570 = vunpack.c.l.b16 %v1501
        %v1571 = vunpack.c.h.b16 %v1501
        %v1572 = vunpack.c.l.b16 %v1502
        %v1573 = vunpack.c.l.b16 %v1503
        %v1574 = vunpack.c.h.b16 %v1503
        %v1575 = vunpack.c.l.b16 %v1504
        %v1576 = vunpack.c.l.b16 %v1505
        %v1577 = vunpack.c.h.b16 %v1505
        %v1578 = vunpack.c.l.b16 %v1506
        %v1579 = vunpack.c.l.b16 %v1507
        %v1580 = vunpack.c.h.b16 %v1507
        %v1581 = vunpack.c.l.b16 %v1508
        %v1582 = vunpack.c.l.b16 %v1509
        %v1583 = vunpack.c.h.b16 %v1509
        %v1584 = vunpack.c.l.b16 %v1510
        %v1585 = vunpack.c.l.b16 %v1511
        %v1586 = vunpack.c.h.b16 %v1511
        %v1587 = vunpack.c.l.b16 %v1512
        %v1588 = vunpack.c.l.b16 %v1513
        %v1589 = vunpack.c.h.b16 %v1513
        %v1590 = vunpack.c.l.b16 %v1514
        %v1591 = vunpack.c.l.b16 %v1515
        %v1592 = vunpack.c.h.b16 %v1515
        %v1593 = vunpack.c.l.b16 %v1516
        %v1594 = vunpack.c.l.b16 %v1517
        %v1595 = vunpack.c.h.b16 %v1517
        %v1596 = vunpack.c.l.b16 %v1518
        %v1597 = vunpack.c.l.b16 %v1519
        %v1598 = vunpack.c.h.b16 %v1519
        %v1599 = vunpack.c.l.b16 %v1520
        %v1600 = vunpack.c.l.b16 %v1521
        %v1601 = vunpack.c.h.b16 %v1521
        %v1602 = vunpack.c.l.b16 %v1522
        %v1603 = vpack.c.b16 %v1558, %v1555
        %v1604 = vpack.c.b16 %v1559, %v1556
        %v1605 = vpack.c.b16 %v1560, %v1557
        %v1606 = vpack.c.b16 %v1564, %v1561
        %v1607 = vpack.c.b16 %v1565, %v1562
        %v1608 = vpack.c.b16 %v1566, %v1563
        %v1609 = vpack.c.b16 %v1570, %v1567
        %v1610 = vpack.c.b16 %v1571, %v1568
        %v1611 = vpack.c.b16 %v1572, %v1569
        %v1612 = vpack.c.b16 %v1576, %v1573
        %v1613 = vpack.c.b16 %v1577, %v1574
        %v1614 = vpack.c.b16 %v1578, %v1575
        %v1615 = vpack.c.b16 %v1582, %v1579
        %v1616 = vpack.c.b16 %v1583, %v1580
        %v1617 = vpack.c.b16 %v1584, %v1581
        %v1618 = vpack.c.b16 %v1588, %v1585
        %v1619 = vpack.c.b16 %v1589, %v1586
        %v1620 = vpack.c.b16 %v1590, %v1587
        %v1621 = vpack.c.b16 %v1594, %v1591
        %v1622 = vpack.c.b16 %v1595, %v1592
        %v1623 = vpack.c.b16 %v1596, %v1593
        %v1624 = vpack.c.b16 %v1600, %v1597
        %v1625 = vpack.c.b16 %v1601, %v1598
        %v1626 = vpack.c.b16 %v1602, %v1599
        %1651 = vmatprep.subr.bf16.mxu0 %v1604
        %1652 = vmatpush1.bf16.msra.mxu0 %v1603
        %1653 = vmatprep.subr.bf16.mxu0 %v1607
        %1654 = vmatpush1.bf16.msra.mxu0 %v1606
        %1655 = vmatprep.subr.bf16.mxu0 %v1610
        %1656 = vmatpush1.bf16.msra.mxu0 %v1609
        %1657 = vmatprep.subr.bf16.mxu0 %v1613
        %1658 = vmatpush1.bf16.msra.mxu0 %v1612
        %1659 = vmatprep.subr.bf16.mxu0 %v1616
        %1660 = vmatpush1.bf16.msra.mxu0 %v1615
        %1661 = vmatprep.subr.bf16.mxu0 %v1619
        %1662 = vmatpush1.bf16.msra.mxu0 %v1618
        %1663 = vmatprep.subr.bf16.mxu0 %v1622
        %1664 = vmatpush1.bf16.msra.mxu0 %v1621
        %1665 = vmatprep.subr.bf16.mxu0 %v1625
        %1666 = vmatpush1.bf16.msra.mxu0 %v1624
        %1667 = vmatprep.subr.bf16.mxu0 0
        %1668 = vmatpush1.bf16.msra.mxu0 0
        %1669 = vmatprep.subr.bf16.mxu0 0
        %1670 = vmatpush1.bf16.msra.mxu0 0
        %1671 = vmatprep.subr.bf16.mxu0 0
        %1672 = vmatpush1.bf16.msra.mxu0 0
        %1673 = vmatprep.subr.bf16.mxu0 0
        %1674 = vmatpush1.bf16.msra.mxu0 0
        %1675 = vmatprep.subr.bf16.mxu0 0
        %1676 = vmatpush1.bf16.msra.mxu0 0
        %1677 = vmatprep.subr.bf16.mxu0 0
        %1678 = vmatpush1.bf16.msra.mxu0 0
        %1679 = vmatprep.subr.bf16.mxu0 0
        %1680 = vmatpush1.bf16.msra.mxu0 0
        %1681 = vmatprep.subr.bf16.mxu0 0
        %1682 = vmatpush1.bf16.msra.mxu0 0
        %1683 = vmatprep.mubr.bf16.mxu0 0
        %1684 = vmatmul.mubr.bf16.gmra.mrb[0].mxu0 %v1490
        %v1685 = vpop.f32.mrb[0].mxu0
        %v1686 = vadd.f32 0.0, %v1685
        %v1687 = vpop.f32.mrb[0].mxu0
        %v1688 = vadd.f32 0.0, %v1687
        %v1689 = vpop.f32.mrb[0].mxu0
        %v1690 = vpop.f32.mrb[0].mxu0
        %1691 = vdwg.mxu0
        %1692 = vmatprep.subr.bf16.mxu0 0
        %1693 = vmatpush1.bf16.msra.mxu0 %v1605
        %1694 = vmatprep.subr.bf16.mxu0 0
        %1695 = vmatpush1.bf16.msra.mxu0 %v1608
        %1696 = vmatprep.subr.bf16.mxu0 0
        %1697 = vmatpush1.bf16.msra.mxu0 %v1611
        %1698 = vmatprep.subr.bf16.mxu0 0
        %1699 = vmatpush1.bf16.msra.mxu0 %v1614
        %1700 = vmatprep.subr.bf16.mxu0 0
        %1701 = vmatpush1.bf16.msra.mxu0 %v1617
        %1702 = vmatprep.subr.bf16.mxu0 0
        %1703 = vmatpush1.bf16.msra.mxu0 %v1620
        %1704 = vmatprep.subr.bf16.mxu0 0
        %1705 = vmatpush1.bf16.msra.mxu0 %v1623
        %1706 = vmatprep.subr.bf16.mxu0 0
        %1707 = vmatpush1.bf16.msra.mxu0 %v1626
        %1708 = vmatprep.subr.bf16.mxu0 0
        %1709 = vmatpush1.bf16.msra.mxu0 0
        %1710 = vmatprep.subr.bf16.mxu0 0
        %1711 = vmatpush1.bf16.msra.mxu0 0
        %1712 = vmatprep.subr.bf16.mxu0 0
        %1713 = vmatpush1.bf16.msra.mxu0 0
        %1714 = vmatprep.subr.bf16.mxu0 0
        %1715 = vmatpush1.bf16.msra.mxu0 0
        %1716 = vmatprep.subr.bf16.mxu0 0
        %1717 = vmatpush1.bf16.msra.mxu0 0
        %1718 = vmatprep.subr.bf16.mxu0 0
        %1719 = vmatpush1.bf16.msra.mxu0 0
        %1720 = vmatprep.subr.bf16.mxu0 0
        %1721 = vmatpush1.bf16.msra.mxu0 0
        %1722 = vmatprep.subr.bf16.mxu0 0
        %1723 = vmatpush1.bf16.msra.mxu0 0
        %1724 = vmatprep.mubr.bf16.mxu0 0
        %1725 = vmatmul.mubr.bf16.gmra.mrb[0].mxu0 %v1490
        %v1726 = vpop.f32.mrb[0].mxu0
        %v1727 = vadd.f32 0.0, %v1726
        %v1728 = vpop.f32.mrb[0].mxu0
        %v1729 = vpop.f32.mrb[0].mxu0
        %v1730 = vpop.f32.mrb[0].mxu0
        %1731 = vdwg.mxu0
        %v1732 = vadd.f32 %v1486, %v1686
        %v1733 = vadd.f32 %v1487, %v1688
        %v1734 = vadd.f32 %v1488, %v1727
        %v1735 = vxor.u32 %v1732, 2147483648
        %v1736 = vxor.u32 %v1733, 2147483648
        %v1737 = vxor.u32 %v1734, 2147483648
        %v1738 = vmul.f32 %v1735, 1.442695
        %v1739 = vpow.pop %v1738
        %v1740 = vmul.f32 %v1736, 1.442695
        %v1741 = vpow.pop %v1740
        %v1742 = vmul.f32 %v1737, 1.442695
        %v1743 = vpow.pop %v1742
        %v1744 = vadd.f32 %v1739, 1.0
        %v1745 = vadd.f32 %v1741, 1.0
        %v1746 = vadd.f32 %v1743, 1.0
        %v1747 = vrcp.pop %v1744
        %v1748 = vmul.f32 1.0, %v1747
        %v1749 = vrcp.pop %v1745
        %v1750 = vmul.f32 1.0, %v1749
        %v1751 = vrcp.pop %v1746
        %v1752 = vmul.f32 1.0, %v1751
        %v1753 = vmul.f32 %v1752, 0.5
        %v1754 = vmul.f32 %v1750, %v1485
        %v1755 = vpack.c.bf16 %v1754, %v1754
        %v1756 = vld [vmem:[#allocation12] sm:$0xf]
        %v1757 = vld [vmem:[#allocation12 + $0x4] sm:$0xf]
        %v1758 = vld [vmem:[#allocation12 + $0x8] sm:$0xf]
        %v1759 = vld [vmem:[#allocation12 + $0xc] sm:$0xf]
        %v1760 = vld [vmem:[#allocation12 + $0x10] sm:$0xf]
        %v1761 = vld [vmem:[#allocation12 + $0x14] sm:$0xf]
        %v1762 = vld [vmem:[#allocation12 + $0x18] sm:$0xf]
        %v1763 = vld [vmem:[#allocation12 + $0x1c] sm:$0xf]
        %v1764 = vld [vmem:[#allocation12 + $0x20] sm:$0xf]
        %v1765 = vld [vmem:[#allocation12 + $0x24] sm:$0xf]
        %v1766 = vld [vmem:[#allocation12 + $0x28] sm:$0xf]
        %v1767 = vld [vmem:[#allocation12 + $0x2c] sm:$0xf]
        %v1768 = vld [vmem:[#allocation12 + $0x30] sm:$0xf]
        %v1769 = vld [vmem:[#allocation12 + $0x34] sm:$0xf]
        %v1770 = vld [vmem:[#allocation12 + $0x38] sm:$0xf]
        %v1771 = vld [vmem:[#allocation12 + $0x3c] sm:$0xf]
        %v1788 = vunpack.c.l.b16 %v1756
        %v1789 = vunpack.c.l.b16 %v1757
        %v1790 = vunpack.c.l.b16 %v1758
        %v1791 = vunpack.c.l.b16 %v1759
        %v1792 = vunpack.c.l.b16 %v1760
        %v1793 = vunpack.c.l.b16 %v1761
        %v1794 = vunpack.c.l.b16 %v1762
        %v1795 = vunpack.c.l.b16 %v1763
        %v1796 = vunpack.c.l.b16 %v1764
        %v1797 = vunpack.c.l.b16 %v1765
        %v1798 = vunpack.c.l.b16 %v1766
        %v1799 = vunpack.c.l.b16 %v1767
        %v1800 = vunpack.c.l.b16 %v1768
        %v1801 = vunpack.c.l.b16 %v1769
        %v1802 = vunpack.c.l.b16 %v1770
        %v1803 = vunpack.c.l.b16 %v1771
        %v1804 = vpack.c.b16 %v1789, %v1788
        %v1805 = vpack.c.b16 %v1791, %v1790
        %v1806 = vpack.c.b16 %v1793, %v1792
        %v1807 = vpack.c.b16 %v1795, %v1794
        %v1808 = vpack.c.b16 %v1797, %v1796
        %v1809 = vpack.c.b16 %v1799, %v1798
        %v1810 = vpack.c.b16 %v1801, %v1800
        %v1811 = vpack.c.b16 %v1803, %v1802
        %1820 = vmatprep.subr.bf16.mxu0 0
        %1821 = vmatpush1.bf16.msra.mxu0 %v1804
        %1822 = vmatprep.subr.bf16.mxu0 0
        %1823 = vmatpush1.bf16.msra.mxu0 %v1805
        %1824 = vmatprep.subr.bf16.mxu0 0
        %1825 = vmatpush1.bf16.msra.mxu0 %v1806
        %1826 = vmatprep.subr.bf16.mxu0 0
        %1827 = vmatpush1.bf16.msra.mxu0 %v1807
        %1828 = vmatprep.subr.bf16.mxu0 0
        %1829 = vmatpush1.bf16.msra.mxu0 %v1808
        %1830 = vmatprep.subr.bf16.mxu0 0
        %1831 = vmatpush1.bf16.msra.mxu0 %v1809
        %1832 = vmatprep.subr.bf16.mxu0 0
        %1833 = vmatpush1.bf16.msra.mxu0 %v1810
        %1834 = vmatprep.subr.bf16.mxu0 0
        %1835 = vmatpush1.bf16.msra.mxu0 %v1811
        %1836 = vmatprep.subr.bf16.mxu0 0
        %1837 = vmatpush1.bf16.msra.mxu0 0
        %1838 = vmatprep.subr.bf16.mxu0 0
        %1839 = vmatpush1.bf16.msra.mxu0 0
        %1840 = vmatprep.subr.bf16.mxu0 0
        %1841 = vmatpush1.bf16.msra.mxu0 0
        %1842 = vmatprep.subr.bf16.mxu0 0
        %1843 = vmatpush1.bf16.msra.mxu0 0
        %1844 = vmatprep.subr.bf16.mxu0 0
        %1845 = vmatpush1.bf16.msra.mxu0 0
        %1846 = vmatprep.subr.bf16.mxu0 0
        %1847 = vmatpush1.bf16.msra.mxu0 0
        %1848 = vmatprep.subr.bf16.mxu0 0
        %1849 = vmatpush1.bf16.msra.mxu0 0
        %1850 = vmatprep.subr.bf16.mxu0 0
        %1851 = vmatpush1.bf16.msra.mxu0 0
        %1852 = vmatprep.mubr.bf16.mxu0 0
        %1853 = vmatmul.mubr.bf16.gmra.mrb[0].mxu0 %v1755
        %v1854 = vpop.f32.mrb[0].mxu0
        %v1855 = vadd.f32 0.0, %v1854
        %v1856 = vpop.f32.mrb[0].mxu0
        %v1857 = vpop.f32.mrb[0].mxu0
        %v1858 = vpop.f32.mrb[0].mxu0
        %1859 = vdwg.mxu0
        %v1860 = vadd.f32 %v1489, %v1855
        %v1861 = vtanh.pop %v1860
        %v1862 = vld [vmem:[%s1059] sm:$0xff]
        %v1863 = vmul.f32 %v1753, %v1862
        %v1864 = vsub.f32 1.0, %v1753
        %v1865 = vmul.f32 %v1753, %v1864
        %v1866 = vmul.f32 %v1865, 0.5
        %v1867 = vld [vmem:[#allocation3] sm:$0xff]
        %v1868 = vmul.f32 %v1866, %v1867
        %v1869 = vadd.f32 %v1863, %v1868
        %v1870 = vsub.f32 2.0, %v1753
        %v1871 = vmul.f32 %v1866, %v1870
        %v1872 = vmul.f32 %v1871, 0.33333334
        %v1873 = vld [vmem:[%s1046] sm:$0xff]
        %v1874 = vmul.f32 %v1872, %v1873
        %v1875 = vadd.f32 %v1869, %v1874
        %v1876 = vsub.f32 3.0, %v1753
        %v1877 = vmul.f32 %v1872, %v1876
        %v1878 = vmul.f32 %v1877, 0.25
        %v1879 = vld [vmem:[%s1052] sm:$0xff]
        %v1880 = vmul.f32 %v1878, %v1879
        %v1881 = vadd.f32 %v1875, %v1880
        %v1882 = vsub.f32 1.0, %v1748
        %v1883 = vmul.f32 %v1882, %v1881
        %v1884 = vmul.f32 %v1748, %v1861
        %v1885 = vadd.f32 %v1883, %v1884
        %1886 = vst [vmem:[%s1052] sm:$0xff] %v1885
        %1887 = vst [vmem:[#allocation2] sm:$0xff] %v1885
        %v1888 = vpack.c.bf16 %v1885, %v1885
        %1889 = vst [vmem:[#allocation4 + $0x8] sm:$0xf] %v1888
        %v1890 = vld [vmem:[#allocation2] sm:$0xff]
        %v1891 = vld [vmem:[#allocation5 + $0x60] sm:$0xff]
        %v1892 = vld [vmem:[#allocation5 + $0x68] sm:$0xff]
        %v1893 = vld [vmem:[#allocation5 + $0x70] sm:$0xff]
        %v1894 = vld [vmem:[#allocation5 + $0x78] sm:$0xff]
        %v1895 = vpack.c.bf16 %v1890, %v1890
        %v1896 = vld [vmem:[#allocation11] sm:$0xff]
        %v1897 = vld [vmem:[#allocation11 + $0x8] sm:$0xf]
        %v1898 = vld [vmem:[#allocation11 + $0xc] sm:$0xff]
        %v1899 = vld [vmem:[#allocation11 + $0x14] sm:$0xf]
        %v1900 = vld [vmem:[#allocation11 + $0x18] sm:$0xff]
        %v1901 = vld [vmem:[#allocation11 + $0x20] sm:$0xf]
        %v1902 = vld [vmem:[#allocation11 + $0x24] sm:$0xff]
        %v1903 = vld [vmem:[#allocation11 + $0x2c] sm:$0xf]
        %v1904 = vld [vmem:[#allocation11 + $0x30] sm:$0xff]
        %v1905 = vld [vmem:[#allocation11 + $0x38] sm:$0xf]
        %v1906 = vld [vmem:[#allocation11 + $0x3c] sm:$0xff]
        %v1907 = vld [vmem:[#allocation11 + $0x44] sm:$0xf]
        %v1908 = vld [vmem:[#allocation11 + $0x48] sm:$0xff]
        %v1909 = vld [vmem:[#allocation11 + $0x50] sm:$0xf]
        %v1910 = vld [vmem:[#allocation11 + $0x54] sm:$0xff]
        %v1911 = vld [vmem:[#allocation11 + $0x5c] sm:$0xf]
        %v1912 = vld [vmem:[#allocation11 + $0x60] sm:$0xff]
        %v1913 = vld [vmem:[#allocation11 + $0x68] sm:$0xf]
        %v1914 = vld [vmem:[#allocation11 + $0x6c] sm:$0xff]
        %v1915 = vld [vmem:[#allocation11 + $0x74] sm:$0xf]
        %v1916 = vld [vmem:[#allocation11 + $0x78] sm:$0xff]
        %v1917 = vld [vmem:[#allocation11 + $0x80] sm:$0xf]
        %v1918 = vld [vmem:[#allocation11 + $0x84] sm:$0xff]
        %v1919 = vld [vmem:[#allocation11 + $0x8c] sm:$0xf]
        %v1920 = vld [vmem:[#allocation11 + $0x90] sm:$0xff]
        %v1921 = vld [vmem:[#allocation11 + $0x98] sm:$0xf]
        %v1922 = vld [vmem:[#allocation11 + $0x9c] sm:$0xff]
        %v1923 = vld [vmem:[#allocation11 + $0xa4] sm:$0xf]
        %v1924 = vld [vmem:[#allocation11 + $0xa8] sm:$0xff]
        %v1925 = vld [vmem:[#allocation11 + $0xb0] sm:$0xf]
        %v1926 = vld [vmem:[#allocation11 + $0xb4] sm:$0xff]
        %v1927 = vld [vmem:[#allocation11 + $0xbc] sm:$0xf]
        %v1960 = vunpack.c.l.b16 %v1896
        %v1961 = vunpack.c.h.b16 %v1896
        %v1962 = vunpack.c.l.b16 %v1897
        %v1963 = vunpack.c.l.b16 %v1898
        %v1964 = vunpack.c.h.b16 %v1898
        %v1965 = vunpack.c.l.b16 %v1899
        %v1966 = vunpack.c.l.b16 %v1900
        %v1967 = vunpack.c.h.b16 %v1900
        %v1968 = vunpack.c.l.b16 %v1901
        %v1969 = vunpack.c.l.b16 %v1902
        %v1970 = vunpack.c.h.b16 %v1902
        %v1971 = vunpack.c.l.b16 %v1903
        %v1972 = vunpack.c.l.b16 %v1904
        %v1973 = vunpack.c.h.b16 %v1904
        %v1974 = vunpack.c.l.b16 %v1905
        %v1975 = vunpack.c.l.b16 %v1906
        %v1976 = vunpack.c.h.b16 %v1906
        %v1977 = vunpack.c.l.b16 %v1907
        %v1978 = vunpack.c.l.b16 %v1908
        %v1979 = vunpack.c.h.b16 %v1908
        %v1980 = vunpack.c.l.b16 %v1909
        %v1981 = vunpack.c.l.b16 %v1910
        %v1982 = vunpack.c.h.b16 %v1910
        %v1983 = vunpack.c.l.b16 %v1911
        %v1984 = vunpack.c.l.b16 %v1912
        %v1985 = vunpack.c.h.b16 %v1912
        %v1986 = vunpack.c.l.b16 %v1913
        %v1987 = vunpack.c.l.b16 %v1914
        %v1988 = vunpack.c.h.b16 %v1914
        %v1989 = vunpack.c.l.b16 %v1915
        %v1990 = vunpack.c.l.b16 %v1916
        %v1991 = vunpack.c.h.b16 %v1916
        %v1992 = vunpack.c.l.b16 %v1917
        %v1993 = vunpack.c.l.b16 %v1918
        %v1994 = vunpack.c.h.b16 %v1918
        %v1995 = vunpack.c.l.b16 %v1919
        %v1996 = vunpack.c.l.b16 %v1920
        %v1997 = vunpack.c.h.b16 %v1920
        %v1998 = vunpack.c.l.b16 %v1921
        %v1999 = vunpack.c.l.b16 %v1922
        %v2000 = vunpack.c.h.b16 %v1922
        %v2001 = vunpack.c.l.b16 %v1923
        %v2002 = vunpack.c.l.b16 %v1924
        %v2003 = vunpack.c.h.b16 %v1924
        %v2004 = vunpack.c.l.b16 %v1925
        %v2005 = vunpack.c.l.b16 %v1926
        %v2006 = vunpack.c.h.b16 %v1926
        %v2007 = vunpack.c.l.b16 %v1927
        %v2008 = vpack.c.b16 %v1963, %v1960
        %v2009 = vpack.c.b16 %v1964, %v1961
        %v2010 = vpack.c.b16 %v1965, %v1962
        %v2011 = vpack.c.b16 %v1969, %v1966
        %v2012 = vpack.c.b16 %v1970, %v1967
        %v2013 = vpack.c.b16 %v1971, %v1968
        %v2014 = vpack.c.b16 %v1975, %v1972
        %v2015 = vpack.c.b16 %v1976, %v1973
        %v2016 = vpack.c.b16 %v1977, %v1974
        %v2017 = vpack.c.b16 %v1981, %v1978
        %v2018 = vpack.c.b16 %v1982, %v1979
        %v2019 = vpack.c.b16 %v1983, %v1980
        %v2020 = vpack.c.b16 %v1987, %v1984
        %v2021 = vpack.c.b16 %v1988, %v1985
        %v2022 = vpack.c.b16 %v1989, %v1986
        %v2023 = vpack.c.b16 %v1993, %v1990
        %v2024 = vpack.c.b16 %v1994, %v1991
        %v2025 = vpack.c.b16 %v1995, %v1992
        %v2026 = vpack.c.b16 %v1999, %v1996
        %v2027 = vpack.c.b16 %v2000, %v1997
        %v2028 = vpack.c.b16 %v2001, %v1998
        %v2029 = vpack.c.b16 %v2005, %v2002
        %v2030 = vpack.c.b16 %v2006, %v2003
        %v2031 = vpack.c.b16 %v2007, %v2004
        %2056 = vmatprep.subr.bf16.mxu0 %v2009
        %2057 = vmatpush1.bf16.msra.mxu0 %v2008
        %2058 = vmatprep.subr.bf16.mxu0 %v2012
        %2059 = vmatpush1.bf16.msra.mxu0 %v2011
        %2060 = vmatprep.subr.bf16.mxu0 %v2015
        %2061 = vmatpush1.bf16.msra.mxu0 %v2014
        %2062 = vmatprep.subr.bf16.mxu0 %v2018
        %2063 = vmatpush1.bf16.msra.mxu0 %v2017
        %2064 = vmatprep.subr.bf16.mxu0 %v2021
        %2065 = vmatpush1.bf16.msra.mxu0 %v2020
        %2066 = vmatprep.subr.bf16.mxu0 %v2024
        %2067 = vmatpush1.bf16.msra.mxu0 %v2023
        %2068 = vmatprep.subr.bf16.mxu0 %v2027
        %2069 = vmatpush1.bf16.msra.mxu0 %v2026
        %2070 = vmatprep.subr.bf16.mxu0 %v2030
        %2071 = vmatpush1.bf16.msra.mxu0 %v2029
        %2072 = vmatprep.subr.bf16.mxu0 0
        %2073 = vmatpush1.bf16.msra.mxu0 0
        %2074 = vmatprep.subr.bf16.mxu0 0
        %2075 = vmatpush1.bf16.msra.mxu0 0
        %2076 = vmatprep.subr.bf16.mxu0 0
        %2077 = vmatpush1.bf16.msra.mxu0 0
        %2078 = vmatprep.subr.bf16.mxu0 0
        %2079 = vmatpush1.bf16.msra.mxu0 0
        %2080 = vmatprep.subr.bf16.mxu0 0
        %2081 = vmatpush1.bf16.msra.mxu0 0
        %2082 = vmatprep.subr.bf16.mxu0 0
        %2083 = vmatpush1.bf16.msra.mxu0 0
        %2084 = vmatprep.subr.bf16.mxu0 0
        %2085 = vmatpush1.bf16.msra.mxu0 0
        %2086 = vmatprep.subr.bf16.mxu0 0
        %2087 = vmatpush1.bf16.msra.mxu0 0
        %2088 = vmatprep.mubr.bf16.mxu0 0
        %2089 = vmatmul.mubr.bf16.gmra.mrb[0].mxu0 %v1895
        %v2090 = vpop.f32.mrb[0].mxu0
        %v2091 = vadd.f32 0.0, %v2090
        %v2092 = vpop.f32.mrb[0].mxu0
        %v2093 = vadd.f32 0.0, %v2092
        %v2094 = vpop.f32.mrb[0].mxu0
        %v2095 = vpop.f32.mrb[0].mxu0
        %2096 = vdwg.mxu0
        %2097 = vmatprep.subr.bf16.mxu0 0
        %2098 = vmatpush1.bf16.msra.mxu0 %v2010
        %2099 = vmatprep.subr.bf16.mxu0 0
        %2100 = vmatpush1.bf16.msra.mxu0 %v2013
        %2101 = vmatprep.subr.bf16.mxu0 0
        %2102 = vmatpush1.bf16.msra.mxu0 %v2016
        %2103 = vmatprep.subr.bf16.mxu0 0
        %2104 = vmatpush1.bf16.msra.mxu0 %v2019
        %2105 = vmatprep.subr.bf16.mxu0 0
        %2106 = vmatpush1.bf16.msra.mxu0 %v2022
        %2107 = vmatprep.subr.bf16.mxu0 0
        %2108 = vmatpush1.bf16.msra.mxu0 %v2025
        %2109 = vmatprep.subr.bf16.mxu0 0
        %2110 = vmatpush1.bf16.msra.mxu0 %v2028
        %2111 = vmatprep.subr.bf16.mxu0 0
        %2112 = vmatpush1.bf16.msra.mxu0 %v2031
        %2113 = vmatprep.subr.bf16.mxu0 0
        %2114 = vmatpush1.bf16.msra.mxu0 0
        %2115 = vmatprep.subr.bf16.mxu0 0
        %2116 = vmatpush1.bf16.msra.mxu0 0
        %2117 = vmatprep.subr.bf16.mxu0 0
        %2118 = vmatpush1.bf16.msra.mxu0 0
        %2119 = vmatprep.subr.bf16.mxu0 0
        %2120 = vmatpush1.bf16.msra.mxu0 0
        %2121 = vmatprep.subr.bf16.mxu0 0
        %2122 = vmatpush1.bf16.msra.mxu0 0
        %2123 = vmatprep.subr.bf16.mxu0 0
        %2124 = vmatpush1.bf16.msra.mxu0 0
        %2125 = vmatprep.subr.bf16.mxu0 0
        %2126 = vmatpush1.bf16.msra.mxu0 0
        %2127 = vmatprep.subr.bf16.mxu0 0
        %2128 = vmatpush1.bf16.msra.mxu0 0
        %2129 = vmatprep.mubr.bf16.mxu0 0
        %2130 = vmatmul.mubr.bf16.gmra.mrb[0].mxu0 %v1895
        %v2131 = vpop.f32.mrb[0].mxu0
        %v2132 = vadd.f32 0.0, %v2131
        %v2133 = vpop.f32.mrb[0].mxu0
        %v2134 = vpop.f32.mrb[0].mxu0
        %v2135 = vpop.f32.mrb[0].mxu0
        %2136 = vdwg.mxu0
        %v2137 = vadd.f32 %v1891, %v2091
        %v2138 = vadd.f32 %v1892, %v2093
        %v2139 = vadd.f32 %v1893, %v2132
        %v2140 = vxor.u32 %v2137, 2147483648
        %v2141 = vxor.u32 %v2138, 2147483648
        %v2142 = vxor.u32 %v2139, 2147483648
        %v2143 = vmul.f32 %v2140, 1.442695
        %v2144 = vpow.pop %v2143
        %v2145 = vmul.f32 %v2141, 1.442695
        %v2146 = vpow.pop %v2145
        %v2147 = vmul.f32 %v2142, 1.442695
        %v2148 = vpow.pop %v2147
        %v2149 = vadd.f32 %v2144, 1.0
        %v2150 = vadd.f32 %v2146, 1.0
        %v2151 = vadd.f32 %v2148, 1.0
        %v2152 = vrcp.pop %v2149
        %v2153 = vmul.f32 1.0, %v2152
        %v2154 = vrcp.pop %v2150
        %v2155 = vmul.f32 1.0, %v2154
        %v2156 = vrcp.pop %v2151
        %v2157 = vmul.f32 1.0, %v2156
        %v2158 = vmul.f32 %v2157, 0.5
        %v2159 = vmul.f32 %v2155, %v1890
        %v2160 = vpack.c.bf16 %v2159, %v2159
        %v2161 = vld [vmem:[#allocation12] sm:$0xf]
        %v2162 = vld [vmem:[#allocation12 + $0x4] sm:$0xf]
        %v2163 = vld [vmem:[#allocation12 + $0x8] sm:$0xf]
        %v2164 = vld [vmem:[#allocation12 + $0xc] sm:$0xf]
        %v2165 = vld [vmem:[#allocation12 + $0x10] sm:$0xf]
        %v2166 = vld [vmem:[#allocation12 + $0x14] sm:$0xf]
        %v2167 = vld [vmem:[#allocation12 + $0x18] sm:$0xf]
        %v2168 = vld [vmem:[#allocation12 + $0x1c] sm:$0xf]
        %v2169 = vld [vmem:[#allocation12 + $0x20] sm:$0xf]
        %v2170 = vld [vmem:[#allocation12 + $0x24] sm:$0xf]
        %v2171 = vld [vmem:[#allocation12 + $0x28] sm:$0xf]
        %v2172 = vld [vmem:[#allocation12 + $0x2c] sm:$0xf]
        %v2173 = vld [vmem:[#allocation12 + $0x30] sm:$0xf]
        %v2174 = vld [vmem:[#allocation12 + $0x34] sm:$0xf]
        %v2175 = vld [vmem:[#allocation12 + $0x38] sm:$0xf]
        %v2176 = vld [vmem:[#allocation12 + $0x3c] sm:$0xf]
        %v2193 = vunpack.c.l.b16 %v2161
        %v2194 = vunpack.c.l.b16 %v2162
        %v2195 = vunpack.c.l.b16 %v2163
        %v2196 = vunpack.c.l.b16 %v2164
        %v2197 = vunpack.c.l.b16 %v2165
        %v2198 = vunpack.c.l.b16 %v2166
        %v2199 = vunpack.c.l.b16 %v2167
        %v2200 = vunpack.c.l.b16 %v2168
        %v2201 = vunpack.c.l.b16 %v2169
        %v2202 = vunpack.c.l.b16 %v2170
        %v2203 = vunpack.c.l.b16 %v2171
        %v2204 = vunpack.c.l.b16 %v2172
        %v2205 = vunpack.c.l.b16 %v2173
        %v2206 = vunpack.c.l.b16 %v2174
        %v2207 = vunpack.c.l.b16 %v2175
        %v2208 = vunpack.c.l.b16 %v2176
        %v2209 = vpack.c.b16 %v2194, %v2193
        %v2210 = vpack.c.b16 %v2196, %v2195
        %v2211 = vpack.c.b16 %v2198, %v2197
        %v2212 = vpack.c.b16 %v2200, %v2199
        %v2213 = vpack.c.b16 %v2202, %v2201
        %v2214 = vpack.c.b16 %v2204, %v2203
        %v2215 = vpack.c.b16 %v2206, %v2205
        %v2216 = vpack.c.b16 %v2208, %v2207
        %2225 = vmatprep.subr.bf16.mxu0 0
        %2226 = vmatpush1.bf16.msra.mxu0 %v2209
        %2227 = vmatprep.subr.bf16.mxu0 0
        %2228 = vmatpush1.bf16.msra.mxu0 %v2210
        %2229 = vmatprep.subr.bf16.mxu0 0
        %2230 = vmatpush1.bf16.msra.mxu0 %v2211
        %2231 = vmatprep.subr.bf16.mxu0 0
        %2232 = vmatpush1.bf16.msra.mxu0 %v2212
        %2233 = vmatprep.subr.bf16.mxu0 0
        %2234 = vmatpush1.bf16.msra.mxu0 %v2213
        %2235 = vmatprep.subr.bf16.mxu0 0
        %2236 = vmatpush1.bf16.msra.mxu0 %v2214
        %2237 = vmatprep.subr.bf16.mxu0 0
        %2238 = vmatpush1.bf16.msra.mxu0 %v2215
        %2239 = vmatprep.subr.bf16.mxu0 0
        %2240 = vmatpush1.bf16.msra.mxu0 %v2216
        %2241 = vmatprep.subr.bf16.mxu0 0
        %2242 = vmatpush1.bf16.msra.mxu0 0
        %2243 = vmatprep.subr.bf16.mxu0 0
        %2244 = vmatpush1.bf16.msra.mxu0 0
        %2245 = vmatprep.subr.bf16.mxu0 0
        %2246 = vmatpush1.bf16.msra.mxu0 0
        %2247 = vmatprep.subr.bf16.mxu0 0
        %2248 = vmatpush1.bf16.msra.mxu0 0
        %2249 = vmatprep.subr.bf16.mxu0 0
        %2250 = vmatpush1.bf16.msra.mxu0 0
        %2251 = vmatprep.subr.bf16.mxu0 0
        %2252 = vmatpush1.bf16.msra.mxu0 0
        %2253 = vmatprep.subr.bf16.mxu0 0
        %2254 = vmatpush1.bf16.msra.mxu0 0
        %2255 = vmatprep.subr.bf16.mxu0 0
        %2256 = vmatpush1.bf16.msra.mxu0 0
        %2257 = vmatprep.mubr.bf16.mxu0 0
        %2258 = vmatmul.mubr.bf16.gmra.mrb[0].mxu0 %v2160
        %v2259 = vpop.f32.mrb[0].mxu0
        %v2260 = vadd.f32 0.0, %v2259
        %v2261 = vpop.f32.mrb[0].mxu0
        %v2262 = vpop.f32.mrb[0].mxu0
        %v2263 = vpop.f32.mrb[0].mxu0
        %2264 = vdwg.mxu0
        %v2265 = vadd.f32 %v1894, %v2260
        %v2266 = vtanh.pop %v2265
        %v2267 = vld [vmem:[%s1052] sm:$0xff]
        %v2268 = vmul.f32 %v2158, %v2267
        %v2269 = vsub.f32 1.0, %v2158
        %v2270 = vmul.f32 %v2158, %v2269
        %v2271 = vmul.f32 %v2270, 0.5
        %v2272 = vld [vmem:[%s1059] sm:$0xff]
        %v2273 = vmul.f32 %v2271, %v2272
        %v2274 = vadd.f32 %v2268, %v2273
        %v2275 = vsub.f32 2.0, %v2158
        %v2276 = vmul.f32 %v2271, %v2275
        %v2277 = vmul.f32 %v2276, 0.33333334
        %v2278 = vld [vmem:[#allocation3] sm:$0xff]
        %v2279 = vmul.f32 %v2277, %v2278
        %v2280 = vadd.f32 %v2274, %v2279
        %v2281 = vsub.f32 3.0, %v2158
        %v2282 = vmul.f32 %v2277, %v2281
        %v2283 = vmul.f32 %v2282, 0.25
        %v2284 = vld [vmem:[%s1046] sm:$0xff]
        %v2285 = vmul.f32 %v2283, %v2284
        %v2286 = vadd.f32 %v2280, %v2285
        %v2287 = vsub.f32 1.0, %v2153
        %v2288 = vmul.f32 %v2287, %v2286
        %v2289 = vmul.f32 %v2153, %v2266
        %v2290 = vadd.f32 %v2288, %v2289
        %2291 = vst [vmem:[%s1046] sm:$0xff] %v2290
        %2292 = vst [vmem:[#allocation2] sm:$0xff] %v2290
        %v2293 = vpack.c.bf16 %v2290, %v2290
        %v2295 = vrot.slane %v2293, 4
        %2297 = vst [vmem:[#allocation4 + $0x8] sm:$0xf0] %v2295
        %v2298 = vld [vmem:[#allocation4] sm:$0xff]
        %v2299 = vld [vmem:[#allocation4 + $0x8] sm:$0xff]
        %v2300 = vld [vmem:[#allocation15] sm:$0xf]
        %v2301 = vld [vmem:[#allocation15 + $0x4] sm:$0xf]
        %v2302 = vld [vmem:[#allocation15 + $0x8] sm:$0xf]
        %v2303 = vld [vmem:[#allocation15 + $0xc] sm:$0xf]
        %v2304 = vld [vmem:[#allocation15 + $0x10] sm:$0xf]
        %v2305 = vld [vmem:[#allocation15 + $0x14] sm:$0xf]
        %v2306 = vld [vmem:[#allocation15 + $0x18] sm:$0xf]
        %v2307 = vld [vmem:[#allocation15 + $0x1c] sm:$0xf]
        %v2308 = vld [vmem:[#allocation15 + $0x20] sm:$0xf]
        %v2309 = vld [vmem:[#allocation15 + $0x24] sm:$0xf]
        %v2310 = vld [vmem:[#allocation15 + $0x28] sm:$0xf]
        %v2311 = vld [vmem:[#allocation15 + $0x2c] sm:$0xf]
        %v2312 = vld [vmem:[#allocation15 + $0x30] sm:$0xf]
        %v2313 = vld [vmem:[#allocation15 + $0x34] sm:$0xf]
        %v2314 = vld [vmem:[#allocation15 + $0x38] sm:$0xf]
        %v2315 = vld [vmem:[#allocation15 + $0x3c] sm:$0xf]
        %v2316 = vld [vmem:[#allocation17] sm:$0x1]
        %v2318 = vlaneseq
        %v2319 = vshrl.u32 %v2318, 7
        %v2320 = vsub.s32 0, %v2319
        %v2321 = vrot.slane %v2316, %v2320
        %v2339 = vunpack.c.l.b16 %v2300
        %v2340 = vunpack.c.l.b16 %v2301
        %v2341 = vunpack.c.l.b16 %v2302
        %v2342 = vunpack.c.l.b16 %v2303
        %v2343 = vunpack.c.l.b16 %v2304
        %v2344 = vunpack.c.l.b16 %v2305
        %v2345 = vunpack.c.l.b16 %v2306
        %v2346 = vunpack.c.l.b16 %v2307
        %v2347 = vunpack.c.l.b16 %v2308
        %v2348 = vunpack.c.l.b16 %v2309
        %v2349 = vunpack.c.l.b16 %v2310
        %v2350 = vunpack.c.l.b16 %v2311
        %v2351 = vunpack.c.l.b16 %v2312
        %v2352 = vunpack.c.l.b16 %v2313
        %v2353 = vunpack.c.l.b16 %v2314
        %v2354 = vunpack.c.l.b16 %v2315
        %v2355 = vpack.c.b16 %v2340, %v2339
        %v2356 = vpack.c.b16 %v2342, %v2341
        %v2357 = vpack.c.b16 %v2344, %v2343
        %v2358 = vpack.c.b16 %v2346, %v2345
        %v2359 = vpack.c.b16 %v2348, %v2347
        %v2360 = vpack.c.b16 %v2350, %v2349
        %v2361 = vpack.c.b16 %v2352, %v2351
        %v2362 = vpack.c.b16 %v2354, %v2353
        %2371 = vmatprep.subr.bf16.mxu0 0
        %2372 = vmatpush1.bf16.msra.mxu0 %v2355
        %2373 = vmatprep.subr.bf16.mxu0 0
        %2374 = vmatpush1.bf16.msra.mxu0 %v2356
        %2375 = vmatprep.subr.bf16.mxu0 0
        %2376 = vmatpush1.bf16.msra.mxu0 %v2357
        %2377 = vmatprep.subr.bf16.mxu0 0
        %2378 = vmatpush1.bf16.msra.mxu0 %v2358
        %2379 = vmatprep.subr.bf16.mxu0 0
        %2380 = vmatpush1.bf16.msra.mxu0 %v2359
        %2381 = vmatprep.subr.bf16.mxu0 0
        %2382 = vmatpush1.bf16.msra.mxu0 %v2360
        %2383 = vmatprep.subr.bf16.mxu0 0
        %2384 = vmatpush1.bf16.msra.mxu0 %v2361
        %2385 = vmatprep.subr.bf16.mxu0 0
        %2386 = vmatpush1.bf16.msra.mxu0 %v2362
        %2387 = vmatprep.subr.bf16.mxu0 0
        %2388 = vmatpush1.bf16.msra.mxu0 0
        %2389 = vmatprep.subr.bf16.mxu0 0
        %2390 = vmatpush1.bf16.msra.mxu0 0
        %2391 = vmatprep.subr.bf16.mxu0 0
        %2392 = vmatpush1.bf16.msra.mxu0 0
        %2393 = vmatprep.subr.bf16.mxu0 0
        %2394 = vmatpush1.bf16.msra.mxu0 0
        %2395 = vmatprep.subr.bf16.mxu0 0
        %2396 = vmatpush1.bf16.msra.mxu0 0
        %2397 = vmatprep.subr.bf16.mxu0 0
        %2398 = vmatpush1.bf16.msra.mxu0 0
        %2399 = vmatprep.subr.bf16.mxu0 0
        %2400 = vmatpush1.bf16.msra.mxu0 0
        %2401 = vmatprep.subr.bf16.mxu0 0
        %2402 = vmatpush1.bf16.msra.mxu0 0
        %2403 = vmatprep.mubr.bf16.mxu0 0
        %2404 = vmatmul.mubr.bf16.gmra.mrb[0].mxu0 %v2298
        %v2405 = vpop.f32.mrb[0].mxu0
        %v2406 = vadd.f32 %v2321, %v2405
        %v2407 = vpop.f32.mrb[0].mxu0
        %v2408 = vpop.f32.mrb[0].mxu0
        %v2409 = vadd.f32 %v2321, %v2408
        %v2410 = vpop.f32.mrb[0].mxu0
        %2411 = vmatprep.mubr.bf16.mxu0 0
        %2412 = vmatmul.mubr.bf16.gmra.mrb[0].mxu0 %v2299
        %v2413 = vpop.f32.mrb[0].mxu0
        %v2414 = vadd.f32 %v2321, %v2413
        %v2415 = vpop.f32.mrb[0].mxu0
        %v2416 = vpop.f32.mrb[0].mxu0
        %v2417 = vadd.f32 %v2321, %v2416
        %v2418 = vpop.f32.mrb[0].mxu0
        %2419 = vdwg.mxu0
        %2420 = vst [vmem:[%s455] sm:$0xff] %v2406
        %2421 = vst [vmem:[%s455 + $0x8] sm:$0xff] %v2409
        %2422 = vst [vmem:[%s455 + $0x10] sm:$0xff] %v2414
        %2423 = vst [vmem:[%s455 + $0x18] sm:$0xff] %v2417
        %p2424 = scmp.eq.s32.totalorder %s38, 1
        // Predicated region
        $region81: #{mrnn_forward.1} parent=47 // pred_check
          %p2425 = pneg %p2424
        $region82: #{mrnn_forward.1} parent=47 // pred_check_branch
          %2427 = sbr.rel (%p2425) target = $region84
        $region83: #{mrnn_forward.1} parent=47 // pred_region
          %v2428 = vld [vmem:[#allocation2] sm:$0xff]
          %2429 = vst [vmem:[%s469] sm:$0xff] %v2428
          %v2430 = vld [vmem:[%s1046] sm:$0xff]
          %2431 = vst [vmem:[%s462] sm:$0xff] %v2430
          %v2432 = vld [vmem:[%s1052] sm:$0xff]
          %s2433 = scalar_lea.vmem %s462, 8 [#allocation19]
          %2434 = vst [vmem:[%s2433] sm:$0xff] %v2432
          %v2435 = vld [vmem:[%s1059] sm:$0xff]
          %s2436 = scalar_lea.vmem %s462, 16 [#allocation19]
          %2437 = vst [vmem:[%s2436] sm:$0xff] %v2435
          %v2438 = vld [vmem:[#allocation3] sm:$0xff]
          %s2439 = scalar_lea.vmem %s462, 24 [#allocation19]
          %2440 = vst [vmem:[%s2439] sm:$0xff] %v2438
        $region84: #{mrnn_forward.1} parent=47 // pred_fallthru
          _
        %s2441 = sand.u32 %s209, 1
        %s2442 = scalar_lea.sflag [#allocation8], %s2441
        %s2443 = sand.u32 %s209, 1
        %s2444 = smul.addr %s2443, 32
        %s2445 = scalar_lea.vmem [#allocation18], %s2444
        %s2446 = sand.u32 %s33, 1
        %s2447 = scalar_lea.sflag [#allocation20], %s2446
        %s2448 = sand.u32 %s235, 1
        %s2449 = smul.addr %s2448, 32
        %s2450 = scalar_lea.vmem [#allocation19], %s2449
        %s2451 = sand.u32 %s33, 1
        %s2452 = scalar_lea.sflag [#allocation20], %s2451
        %s2453 = sand.u32 %s261, 1
        %s2454 = smul.addr %s2453, 8
        %s2455 = scalar_lea.vmem [#allocation21], %s2454
        // Predicated region
        $region85: #{mrnn_forward.1} parent=47 // pred_check
          %p2456 = pneg %p219
        $region86: #{mrnn_forward.1} parent=47 // pred_check_branch
          %2458 = sbr.rel (%p2456) target = $region88
        $region87: #{mrnn_forward.1} parent=47 // pred_region
          %s2460 = ssub.s32 512, 512
          %2461 = vsyncadd %s2442, %s2460
          %s2462 = smul.addr %s37, 4
          %s2463 = smul.addr %s38, 8
          %s2464 = sadd.s32 %s2462, %s2463
          %s2465 = smul.addr %s2464, 128
          %s2466 = scalar_lea.hbm %s7, %s2465
          %s2467 = sshll.u32 %s2445, 4
          %s2468 = int_to_ptr.vmem [resolvable:$true] %s2467
          %2473 = dma.vmem_to_hbm [thread:$0]  %s2468, 512, %s2466, %s2442, 128, 128, 8
        $region88: #{mrnn_forward.1} parent=47 // pred_fallthru
          _
        // Predicated region
        $region89: #{mrnn_forward.1} parent=47 // pred_check
          %p2474 = pneg %p245
        $region90: #{mrnn_forward.1} parent=47 // pred_check_branch
          %2476 = sbr.rel (%p2474) target = $region92
        $region91: #{mrnn_forward.1} parent=47 // pred_region
          %s2478 = ssub.s32 512, 512
          %2479 = vsyncadd %s2447, %s2478
          %s2480 = smul.addr %s37, 128
          %s2481 = scalar_lea.hbm %s8, %s2480
          %s2482 = sshll.u32 %s2450, 4
          %s2483 = int_to_ptr.vmem [resolvable:$true] %s2482
          %2488 = dma.vmem_to_hbm [thread:$0]  %s2483, 512, %s2481, %s2447, 128, 256, 8
        $region92: #{mrnn_forward.1} parent=47 // pred_fallthru
          _
        // Predicated region
        $region93: #{mrnn_forward.1} parent=47 // pred_check
          %p2489 = pneg %p271
        $region94: #{mrnn_forward.1} parent=47 // pred_check_branch
          %2491 = sbr.rel (%p2489) target = $region96
        $region95: #{mrnn_forward.1} parent=47 // pred_region
          %s2493 = ssub.s32 128, 128
          %2494 = vsyncadd %s2452, %s2493
          %s2495 = smul.addr %s37, 128
          %s2496 = scalar_lea.hbm %s9, %s2495
          %s2498 = sshll.u32 %s2455, 4
          %s2499 = int_to_ptr.vmem [resolvable:$true] %s2498
          %2501 = dma.vmem_to_hbm [thread:$0]  %s2499, 128, %s2496, %s2452
        $region96: #{mrnn_forward.1} parent=47 // pred_fallthru
          _
      $region48: #{mrnn_forward.1} parent=5 // pred_fallthru
        _
      %p2502 = scmp.le.s32.totalorder 2, %s28
      // Predicated region
      $region97: #{mrnn_forward.1} parent=5 // pred_check
        %p2503 = pneg %p2502
      $region98: #{mrnn_forward.1} parent=5 // pred_check_branch
        %2505 = sbr.rel (%p2503) target = $region100
      $region99: #{mrnn_forward.1} parent=5 // pred_region
        %s2506 = ssub.s32 %s28, 2
        // Predicated region
        $region101: #{mrnn_forward.1} parent=99 // pred_check
          %p2507 = pneg %p225
        $region102: #{mrnn_forward.1} parent=99 // pred_check_branch
          %2509 = sbr.rel (%p2507) target = $region104
        $region103: #{mrnn_forward.1} parent=99 // pred_region
          %s2510 = sand.u32 %s210, 1
          %s2511 = scalar_lea.sflag [#allocation8], %s2510
          %s2512 = sand.u32 %s210, 1
          %s2513 = smul.addr %s2512, 32
          %s2514 = scalar_lea.vmem [#allocation18], %s2513
          %2515 = dma.done %s2511, 512
        $region104: #{mrnn_forward.1} parent=99 // pred_fallthru
          _
        // Predicated region
        $region105: #{mrnn_forward.1} parent=99 // pred_check
          %p2516 = pneg %p251
        $region106: #{mrnn_forward.1} parent=99 // pred_check_branch
          %2518 = sbr.rel (%p2516) target = $region108
        $region107: #{mrnn_forward.1} parent=99 // pred_region
          %s2519 = sand.u32 %s34, 1
          %s2520 = scalar_lea.sflag [#allocation20], %s2519
          %s2521 = sand.u32 %s236, 1
          %s2522 = smul.addr %s2521, 32
          %s2523 = scalar_lea.vmem [#allocation19], %s2522
          %2524 = dma.done %s2520, 512
        $region108: #{mrnn_forward.1} parent=99 // pred_fallthru
          _
        // Predicated region
        $region109: #{mrnn_forward.1} parent=99 // pred_check
          %p2525 = pneg %p277
        $region110: #{mrnn_forward.1} parent=99 // pred_check_branch
          %2527 = sbr.rel (%p2525) target = $region112
        $region111: #{mrnn_forward.1} parent=99 // pred_region
          %s2528 = sand.u32 %s34, 1
          %s2529 = scalar_lea.sflag [#allocation20], %s2528
          %s2530 = sand.u32 %s262, 1
          %s2531 = smul.addr %s2530, 8
          %s2532 = scalar_lea.vmem [#allocation21], %s2531
          %2533 = dma.done %s2529, 128
        $region112: #{mrnn_forward.1} parent=99 // pred_fallthru
          _
      $region100: #{mrnn_forward.1} parent=5 // pred_fallthru
        _
    $region6: #{mrnn_forward.1} parent=1 // loop_footer
      %s32 = sadd.s32 1, %s28
    $region7: #{mrnn_forward.1} parent=1 // loop_footer_branch
      %27 = sbr.rel target = $region3
    $region8: #{mrnn_forward.1} parent=1 // loop_exit
      _
    %2534 = vsyncpa [#allocation7], 1
    %s2535 = scalar_lea.sflag [#allocation7], 1
    %2536 = vsyncpa %s2535, 1
    %2537 = vsyncpa [#allocation10], 1
    %2538 = vsyncpa [#allocation13], 1
    %2539 = vsyncpa [#allocation16], 1
    %2540 = vsyncpa [#allocation8], 1
    %s2541 = scalar_lea.sflag [#allocation8], 1
    %2542 = vsyncpa %s2541, 1
    %2543 = vsyncpa [#allocation20], 1
    %s2544 = scalar_lea.sflag [#allocation20], 1
    %2545 = vsyncpa %s2544, 1

</llo_original>
